<compile_context>
chip_gen: v7x
topology: tpu7x:2x2x1
jax: 0.10.0
libtpu: 0.0.40
codegen_flags: <defaults>
</compile_context>

<pallas_src>
import jax
import jax.numpy as jnp
from jax import lax
from jax.experimental import pallas as pl
from jax.experimental.pallas import tpu as pltpu


# ----------------------------------------------------------------------------
# Kernel 1: fused (2x nearest upsample + 3x3 conv) + per-tile BN partial stats.
# ----------------------------------------------------------------------------
def _upconv_conv_kernel(x_ref, wm_ref, y_ref, psum_ref, pssq_ref):
    # x_ref:    (1, H+2, W+2, Cin)     zero-padded ORIGINAL-resolution input
    # wm_ref:   (2, 6*Cin, 2*Cout)     folded weights, one matrix per row parity
    # y_ref:    (1, TH, 2, W, 2*Cout)  conv output tile (conv_dtype, bf16 default)
    # psum_ref: (1, 1, 1, 2*Cout)      per-tile channel sums        (f32)
    # pssq_ref: (1, 1, 1, 2*Cout)      per-tile channel sum-of-squares (f32)
    TH = y_ref.shape[1]
    W = y_ref.shape[3]
    C2 = y_ref.shape[4]          # 2 * Cout
    Cin = x_ref.shape[3]

    row0 = pl.multiple_of(pl.program_id(1) * TH, TH)

    # Hoisted row slabs: 3 full-width, aligned loads reused by BOTH output-row
    # parities (parity 0 uses rows {0,1}, parity 1 uses rows {1,2}); the three
    # column offsets are register slices of the loaded slabs.  This replaces
    # the previous 12 partially sublane-unaligned ref loads.
    rows = [x_ref[0, pl.ds(row0 + r, TH), :, :] for r in range(3)]   # (TH, W+2, Cin)
    cols = [[rows[r][:, b:b + W, :] for b in range(3)] for r in range(3)]

    s_acc = jnp.zeros((1, C2), jnp.float32)
    q_acc = jnp.zeros((1, C2), jnp.float32)

    for py in range(2):                          # output row parity (static unroll)
        # im2col over the ORIGINAL image: 2 row taps x 3 col taps -> K = 6*Cin,
        # both column parities produced at once -> N = 2*Cout.
        parts = []
        for a in range(2):                       # folded row tap
            for b in range(3):                   # padded column offset
                parts.append(cols[py + a][b])
        patch = jnp.concatenate(parts, axis=-1)              # (TH, W, 6*Cin)
        # Free metadata flatten when W % 8 == 0 (true for typical decoder maps).
        patch = patch.reshape(TH * W, 6 * Cin)
        out = jnp.dot(patch, wm_ref[py],
                      preferred_element_type=jnp.float32)    # (TH*W, 2*Cout) f32
        # BN partial stats from the f32 MXU result BEFORE the storage cast, so
        # the bf16 intermediate costs no statistics precision.
        s_acc = s_acc + jnp.sum(out, axis=0, keepdims=True)
        q_acc = q_acc + jnp.sum(out * out, axis=0, keepdims=True)
        y_ref[0, :, py, :, :] = out.reshape(TH, W, C2).astype(y_ref.dtype)

    psum_ref[0, 0] = s_acc
    pssq_ref[0, 0] = q_acc


# ----------------------------------------------------------------------------
# Kernel 2: BatchNorm normalize (precomputed per-channel scale/shift) + ReLU.
# One body serves both output layouts; broadcasting is driven by the shapes of
# the scale/shift blocks the wrapper passes ((Cout,1,1) for NCHW, (1,2*Cout)
# for the channels-last phase layout).  Reads bf16, computes and writes f32.
# ----------------------------------------------------------------------------
def _bn_relu_kernel(y_ref, scale_ref, shift_ref, o_ref):
    y = y_ref[...].astype(jnp.float32)
    out = y * scale_ref[...] + shift_ref[...]
    o_ref[...] = jnp.maximum(out, 0.0).astype(o_ref.dtype)


# ----------------------------------------------------------------------------
# Weight folding: fold the 2x nearest upsample into the 3x3 conv weights.
# ----------------------------------------------------------------------------
def _fold_upsample_conv_weights(w_hwio):
    """Returns wm of shape (2, 6*Cin, 2*Cout) with

        wm[py, (a*3 + b)*Cin + ci, px*Cout + co]

    such that for output pixel (2r + py, 2s + px):
        out = sum_{a in {0,1}, b in {0,1,2}}  x_pad[r + py + a, s + b, :] @ block(a, b)
    where x_pad is the ORIGINAL image zero-padded by 1 on each spatial side.
    """
    kh, kw, Cin, Cout = w_hwio.shape
    assert (kh, kw) == (3, 3)
    # G[p][t] = 3x3 kernel taps that collapse onto folded tap t at parity p.
    G = (((0,), (1, 2)), ((0, 1), (2,)))
    zeros = jnp.zeros((Cin, Cout), w_hwio.dtype)
    phases = []
    for py in range(2):
        k_blocks = []
        for a in range(2):               # folded row tap
            for b in range(3):           # padded column offset of im2col part
                cols = []
                for px in range(2):
                    bb = b - px          # folded col tap for this column parity
                    if 0 <= bb <= 1:
                        wk = zeros
                        for ky in G[py][a]:
                            for kx in G[px][bb]:
                                wk = wk + w_hwio[ky, kx]
                    else:
                        wk = zeros       # this column tap is unused by parity px
                    cols.append(wk)
                k_blocks.append(jnp.concatenate(cols, axis=1))   # (Cin, 2*Cout)
        phases.append(jnp.concatenate(k_blocks, axis=0))         # (6*Cin, 2*Cout)
    return jnp.stack(phases, axis=0)                             # (2, 6*Cin, 2*Cout)


# ----------------------------------------------------------------------------
# VMEM budgeting / tile selection.
# ----------------------------------------------------------------------------
def _vmem_capacity_bytes():
    try:
        return int(pltpu.get_tpu_info().vmem_capacity_bytes)
    except Exception:
        return 64 * 1024 * 1024          # conservative fallback (v7x per-core VMEM)


def _estimate_vmem_bytes(TH, H, W, Cin, Cout, isize):
    """Real per-grid-step VMEM estimate for BOTH kernels (double-buffered specs)."""
    C2 = 2 * Cout
    # kernel 1
    resident_x = 2 * (H + 2) * (W + 2) * Cin * isize      # per-sample resident, x2 buffers
    weights = 2 * (2 * 6 * Cin * C2) * isize
    y_tile = 2 * (TH * 2 * W * C2) * isize
    stats = 2 * 2 * (C2 * 4)
    # in-kernel live values: row slabs + their column views + patch + f32 MXU result
    slabs = 3 * TH * (W + 2) * Cin * isize
    col_views = 9 * TH * W * Cin * isize
    patch = TH * W * 6 * Cin * isize
    dot_out = TH * W * C2 * 4
    k1 = resident_x + weights + y_tile + stats + slabs + col_views + patch + dot_out
    # kernel 2: conv_dtype input tile + f32 output tile, double-buffered.
    k2 = 2 * (TH * 2 * W * C2) * (isize + 4) + 8 * Cout * 4
    return max(k1, k2)


def _pick_row_tile(H, W, Cin, Cout, isize, budget):
    """Largest divisor of H (with (2*TH) % 8 == 0, or TH == H, so the NCHW
    kernel-2 blocks keep legal (8,128) tiling) whose per-step VMEM fits."""
    cands = [th for th in range(1, H + 1)
             if H % th == 0 and (th == H or (2 * th) % 8 == 0)]
    best = None
    for th in sorted(cands):
        if _estimate_vmem_bytes(th, H, W, Cin, Cout, isize) <= budget:
            best = th
    if best is None:
        # Even the smallest legal tile overshoots (the per-sample resident
        # input dominates); fall back and rely on the halo'd-DMA TODO below.
        best = min(cands)
    return best


# ----------------------------------------------------------------------------
# Wrapper
# ----------------------------------------------------------------------------
def up_conv_forward(x_nchw, weight_oihw, bias, gamma, beta, *,
                    eps=1e-5, conv_dtype=jnp.bfloat16, row_tile=None,
                    channels_last=False):
    """Forward pass of up_conv.  Returns NCHW (PyTorch parity) by default.

    x_nchw:      (N, Cin, H, W)
    weight_oihw: (Cout, Cin, 3, 3)
    bias:        (Cout,)  -- mathematically cancelled by training-mode BN mean
    gamma, beta: (Cout,)  -- BatchNorm affine parameters

    conv_dtype:     bf16 by default on ALL generations (v5e/v6e/v7x MXUs are
                    bf16-native); controls the MXU input dtype AND the stored
                    conv intermediate.  Stats, BN math and the final output
                    stay f32.  Pass jnp.float32 for bit-close PyTorch parity.
    channels_last:  if True, return (N, 2H, 2W, Cout) NHWC and skip the
                    channels-first relayout pass entirely.
    """
    del bias  # exactly cancelled by BN batch-mean subtraction (output identical)
    N, Cin, H, W = x_nchw.shape
    Cout = weight_oihw.shape[0]
    H2, W2 = 2 * H, 2 * W
    C2 = 2 * Cout
    isize = jnp.dtype(conv_dtype).itemsize

    cap = _vmem_capacity_bytes()
    if row_tile is None:
        TH = _pick_row_tile(H, W, Cin, Cout, isize, budget=int(cap * 0.70))
    else:
        TH = int(row_tile)
        if H % TH != 0 or not (TH == H or (2 * TH) % 8 == 0):
            raise ValueError(
                f"row_tile={TH} must divide H={H} and satisfy (2*row_tile)%8==0 "
                f"(or equal H) for legal (8,128) block tiling.")
    T = H // TH

    cparams = pltpu.CompilerParams(
        # Both axes are independent; batch stays outermost so the per-sample
        # resident input block is fetched once per sample.  For N == 1 the
        # megacore split lands on the row-tile axis.
        dimension_semantics=("parallel", "parallel"),
        # Derived from the real per-generation VMEM capacity (~108 MiB on the
        # 128 MiB parts, ~54 MiB on v7x) so larger row tiles can compile.
        vmem_limit_bytes=int(cap * 0.85),
    )

    # NCHW -> NHWC (channels on lanes), zero-pad by 1 at the ORIGINAL
    # resolution; the 4x-larger upsampled image is never materialized in HBM.
    x = jnp.transpose(x_nchw, (0, 2, 3, 1)).astype(conv_dtype)
    x = jnp.pad(x, ((0, 0), (1, 1), (1, 1), (0, 0)))

    w_hwio = jnp.transpose(weight_oihw, (2, 3, 1, 0)).astype(jnp.float32)
    wm = _fold_upsample_conv_weights(w_hwio).astype(conv_dtype)

    # ---- kernel 1: fused upsample + conv  (+ per-tile BN partial stats) ----
    # The padded original-resolution input stays resident in VMEM per sample
    # (index_map ignores the row-tile axis); _pick_row_tile budgets this.
    # TODO(synk): for decoder-scale maps whose resident input exceeds the VMEM
    # budget (mainly v7x, 64 MiB), switch in_specs[0] to memory_space=pl.ANY
    # and manually DMA a halo'd (TH+2)-row slab per grid step (P4 pattern).
    y5, psum, pssq = pl.pallas_call(
        _upconv_conv_kernel,
        out_shape=(
            jax.ShapeDtypeStruct((N, H, 2, W, C2), conv_dtype),
            jax.ShapeDtypeStruct((N, T, 1, C2), jnp.float32),
            jax.ShapeDtypeStruct((N, T, 1, C2), jnp.float32),
        ),
        grid_spec=pltpu.PrefetchScalarGridSpec(
            num_scalar_prefetch=0,
            grid=(N, T),
            in_specs=[
                pl.BlockSpec((1, H + 2, W + 2, Cin), lambda n, t: (n, 0, 0, 0)),
                pl.BlockSpec((2, 6 * Cin, C2), lambda n, t: (0, 0, 0)),
            ],
            out_specs=[
                # Lane width of this store is 2*Cout: dense for Cout >= 64
                # (typical decoder); smaller Cout pays masked stores.
                # TODO(synk): on v5e add pipeline_mode=pl.Buffered(3) here to
                # hide the output writeback behind the next tile's matmul.
                pl.BlockSpec((1, TH, 2, W, C2), lambda n, t: (n, t, 0, 0, 0)),
                pl.BlockSpec((1, 1, 1, C2), lambda n, t: (n, t, 0, 0)),
                pl.BlockSpec((1, 1, 1, C2), lambda n, t: (n, t, 0, 0)),
            ],
        ),
        compiler_params=cparams,
    )(x, wm)

    # ---- tiny reduction of fused partial stats (a few KB; done in XLA) ----
    count = jnp.float32(N * H2 * W2)
    s = jnp.sum(psum, axis=(0, 1, 2)).reshape(2, Cout).sum(axis=0)
    q = jnp.sum(pssq, axis=(0, 1, 2)).reshape(2, Cout).sum(axis=0)
    mean = s / count
    var = jnp.maximum(q / count - mean * mean, 0.0)   # biased (training-mode) var
    # TODO(synk): E[x^2]-E[x]^2 can lose precision for very large N*H*W; switch
    # to mean-centered (Chan/Welford) per-tile partials if bit-closeness matters.
    inv = lax.rsqrt(var + jnp.float32(eps))
    scale = gamma.astype(jnp.float32) * inv
    shift = beta.astype(jnp.float32) - mean * scale

    if channels_last:
        # Zero-copy layout path: no relayout pass at all; the phase layout
        # (N, H, 2, W, 2*Cout) reshapes to (N, 2H, 2W, Cout) NHWC for free.
        scale_b = jnp.tile(scale, 2).reshape(1, C2)   # lane layout = px*Cout + c
        shift_b = jnp.tile(shift, 2).reshape(1, C2)
        out5 = pl.pallas_call(
            _bn_relu_kernel,
            out_shape=jax.ShapeDtypeStruct((N, H, 2, W, C2), jnp.float32),
            grid_spec=pltpu.PrefetchScalarGridSpec(
                num_scalar_prefetch=0,
                grid=(N, T),
                in_specs=[
                    pl.BlockSpec((1, TH, 2, W, C2), lambda n, t: (n, t, 0, 0, 0)),
                    pl.BlockSpec((1, C2), lambda n, t: (0, 0)),
                    pl.BlockSpec((1, C2), lambda n, t: (0, 0)),
                ],
                out_specs=pl.BlockSpec((1, TH, 2, W, C2),
                                       lambda n, t: (n, t, 0, 0, 0)),
            ),
            compiler_params=cparams,
        )(y5, scale_b, shift_b)
        return out5.reshape(N, H2, W2, Cout)

    # Default (PyTorch-parity NCHW) path: the channels-last -> channels-first
    # relayout is ONE XLA transpose of the *bf16* intermediate (half the bytes
    # of the old f32 post-BN transpose); kernel 2 then reads NCHW-tiled bf16
    # and writes the final f32 NCHW tensor directly.  Big-tensor HBM traffic:
    # ~3 f32-equivalent passes (was ~5).
    # TODO(synk): folding this relayout into kernel 2 (in-VMEM lane-crossing
    # transpose) would reach ~2 passes, but depends on Mosaic minor-dim
    # reshape/transpose relayouts; kept out for compile robustness.
    y5t = (y5.reshape(N, H, 2, W, 2, Cout)
             .transpose(0, 5, 1, 2, 3, 4)
             .reshape(N, Cout, H2, W2))
    scale_b = scale.reshape(Cout, 1, 1)
    shift_b = shift.reshape(Cout, 1, 1)
    out = pl.pallas_call(
        _bn_relu_kernel,
        out_shape=jax.ShapeDtypeStruct((N, Cout, H2, W2), jnp.float32),
        grid_spec=pltpu.PrefetchScalarGridSpec(
            num_scalar_prefetch=0,
            grid=(N, T),
            in_specs=[
                pl.BlockSpec((1, Cout, 2 * TH, W2), lambda n, t: (n, 0, t, 0)),
                pl.BlockSpec((Cout, 1, 1), lambda n, t: (0, 0, 0)),
                pl.BlockSpec((Cout, 1, 1), lambda n, t: (0, 0, 0)),
            ],
            out_specs=pl.BlockSpec((1, Cout, 2 * TH, W2),
                                   lambda n, t: (n, 0, t, 0)),
        ),
        compiler_params=cparams,
    )(y5t, scale_b, shift_b)
    return out


# ----------------------------------------------------------------------------
# Parameter init (matches up_conv.initialize_weights semantics)
# ----------------------------------------------------------------------------
def init_params(key, in_ch, out_ch):
    # Conv2d: kaiming_normal_, mode='fan_out', nonlinearity='relu'
    fan_out = out_ch * 3 * 3
    std = (2.0 / fan_out) ** 0.5
    weight = std * jax.random.normal(key, (out_ch, in_ch, 3, 3), dtype=jnp.float32)
    bias = jnp.zeros((out_ch,), dtype=jnp.float32)     # constant_(bias, 0)
    gamma = jnp.ones((out_ch,), dtype=jnp.float32)     # BN weight = 1
    beta = jnp.zeros((out_ch,), dtype=jnp.float32)     # BN bias = 0
    return weight, bias, gamma, beta


# ----------------------------------------------------------------------------
# Pure-JAX reference (for the self-check in __main__)
# ----------------------------------------------------------------------------
def _reference(x, w, b, gamma, beta, eps=1e-5):
    xu = jnp.repeat(jnp.repeat(x, 2, axis=2), 2, axis=3)
    y = lax.conv_general_dilated(
        xu, w, window_strides=(1, 1), padding=((1, 1), (1, 1)),
        dimension_numbers=("NCHW", "OIHW", "NCHW"))
    y = y + b[None, :, None, None]
    mean = jnp.mean(y, axis=(0, 2, 3), keepdims=True)
    var = jnp.mean((y - mean) ** 2, axis=(0, 2, 3), keepdims=True)
    yn = (y - mean) * lax.rsqrt(var + eps)
    yn = yn * gamma[None, :, None, None] + beta[None, :, None, None]
    return jnp.maximum(yn, 0.0)


if __name__ == "__main__":
    key = jax.random.PRNGKey(0)
    k_x, k_w = jax.random.split(key)

    N, Cin, Cout, H, W = 2, 4, 8, 16, 16
    x = jax.random.normal(k_x, (N, Cin, H, W), dtype=jnp.float32)
    weight, bias, gamma, beta = init_params(k_w, Cin, Cout)

    ref = _reference(x, weight, bias, gamma, beta)

    # 1) Default path: bf16 inputs + bf16 conv intermediate, NCHW output.
    #    Tolerance accounts for the bf16 storage of the conv activations
    #    (stats / BN math / final output stay f32).
    out = jax.block_until_ready(
        jax.jit(up_conv_forward)(x, weight, bias, gamma, beta))
    assert out.shape == (N, Cout, 2 * H, 2 * W), out.shape
    max_err = float(jnp.max(jnp.abs(out - ref)))
    mean_err = float(jnp.mean(jnp.abs(out - ref)))
    assert max_err < 1.2e-1, f"bf16 path max abs err vs reference = {max_err}"
    assert mean_err < 1.5e-2, f"bf16 path mean abs err vs reference = {mean_err}"
    assert bool(jnp.all(out >= 0.0)), "ReLU output must be non-negative"

    # 2) f32 path: tight algorithmic check (no low-precision storage).
    out32 = jax.block_until_ready(
        jax.jit(lambda *a: up_conv_forward(*a, conv_dtype=jnp.float32))(
            x, weight, bias, gamma, beta))
    err32 = float(jnp.max(jnp.abs(out32 - ref)))
    assert err32 < 2e-3, f"f32 path max abs err vs reference = {err32}"

    # 3) channels_last path must match the default path exactly (same values,
    #    different layout; skips the relayout pass).
    out_cl = jax.block_until_ready(
        jax.jit(lambda *a: up_conv_forward(*a, channels_last=True))(
            x, weight, bias, gamma, beta))
    assert out_cl.shape == (N, 2 * H, 2 * W, Cout), out_cl.shape
    err_cl = float(jnp.max(jnp.abs(jnp.transpose(out_cl, (0, 3, 1, 2)) - out)))
    assert err_cl < 1e-5, f"channels_last path mismatch = {err_cl}"

    print("KERNEL_OK")
</pallas_src>

<mosaic_0001>
module attributes {stable_mosaic.version = 11 : i64} {
  func.func @_upconv_conv_kernel(%arg0: i32, %arg1: i32, %arg2: memref<1x18x18x4xbf16, #tpu.memory_space<vmem>>, %arg3: memref<2x24x16xbf16, #tpu.memory_space<vmem>>, %arg4: memref<1x16x2x16x16xbf16, #tpu.memory_space<vmem>>, %arg5: memref<1x1x1x16xf32, #tpu.memory_space<vmem>>, %arg6: memref<1x1x1x16xf32, #tpu.memory_space<vmem>>) attributes {dimension_semantics = [#tpu.dimension_semantics<parallel>, #tpu.dimension_semantics<parallel>], iteration_bounds = array<i64: 2, 1>, scalar_prefetch = 0 : i64, scratch_operands = 0 : i64, tpu.core_type = #tpu.core_type<tc>, window_params = [{transform_indices = @transform_0, window_bounds = array<i64: 1, 18, 18, 4>}, {pipeline_mode = #tpu.pipeline_mode<synchronous>, transform_indices = @transform_1, window_bounds = array<i64: 2, 24, 16>}, {transform_indices = @transform_2, window_bounds = array<i64: 1, 16, 2, 16, 16>}, {transform_indices = @transform_3, window_bounds = array<i64: 1, 1, 1, 16>}, {transform_indices = @transform_4, window_bounds = array<i64: 1, 1, 1, 16>}]} {
    %c16_i32 = arith.constant 16 : i32
    %0 = arith.muli %arg1, %c16_i32 : i32
    %1 = tpu.assume_multiple %0, 16 : i32
    %c0_i32 = arith.constant 0 : i32
    %2 = arith.addi %1, %c0_i32 : i32
    %c0 = arith.constant 0 : index
    %3 = arith.index_cast %2 : i32 to index
    %c0_0 = arith.constant 0 : index
    %c0_1 = arith.constant 0 : index
    %4 = vector.load %arg2[%c0, %3, %c0_0, %c0_1] : memref<1x18x18x4xbf16, #tpu.memory_space<vmem>>, vector<1x16x18x4xbf16>
    %5 = vector.shape_cast %4 : vector<1x16x18x4xbf16> to vector<16x18x4xbf16>
    %c1_i32 = arith.constant 1 : i32
    %6 = arith.addi %1, %c1_i32 : i32
    %c0_2 = arith.constant 0 : index
    %7 = arith.index_cast %6 : i32 to index
    %c0_3 = arith.constant 0 : index
    %c0_4 = arith.constant 0 : index
    %8 = vector.load %arg2[%c0_2, %7, %c0_3, %c0_4] : memref<1x18x18x4xbf16, #tpu.memory_space<vmem>>, vector<1x16x18x4xbf16>
    %9 = vector.shape_cast %8 : vector<1x16x18x4xbf16> to vector<16x18x4xbf16>
    %c2_i32 = arith.constant 2 : i32
    %10 = arith.addi %1, %c2_i32 : i32
    %c0_5 = arith.constant 0 : index
    %11 = arith.index_cast %10 : i32 to index
    %c0_6 = arith.constant 0 : index
    %c0_7 = arith.constant 0 : index
    %12 = vector.load %arg2[%c0_5, %11, %c0_6, %c0_7] : memref<1x18x18x4xbf16, #tpu.memory_space<vmem>>, vector<1x16x18x4xbf16>
    %13 = vector.shape_cast %12 : vector<1x16x18x4xbf16> to vector<16x18x4xbf16>
    %14 = vector.extract_strided_slice %5 {offsets = [0, 0, 0], sizes = [16, 16, 4], strides = [1, 1, 1]} : vector<16x18x4xbf16> to vector<16x16x4xbf16>
    %15 = vector.extract_strided_slice %5 {offsets = [0, 1, 0], sizes = [16, 16, 4], strides = [1, 1, 1]} : vector<16x18x4xbf16> to vector<16x16x4xbf16>
    %16 = vector.extract_strided_slice %5 {offsets = [0, 2, 0], sizes = [16, 16, 4], strides = [1, 1, 1]} : vector<16x18x4xbf16> to vector<16x16x4xbf16>
    %17 = vector.extract_strided_slice %9 {offsets = [0, 0, 0], sizes = [16, 16, 4], strides = [1, 1, 1]} : vector<16x18x4xbf16> to vector<16x16x4xbf16>
    %18 = vector.extract_strided_slice %9 {offsets = [0, 1, 0], sizes = [16, 16, 4], strides = [1, 1, 1]} : vector<16x18x4xbf16> to vector<16x16x4xbf16>
    %19 = vector.extract_strided_slice %9 {offsets = [0, 2, 0], sizes = [16, 16, 4], strides = [1, 1, 1]} : vector<16x18x4xbf16> to vector<16x16x4xbf16>
    %20 = vector.extract_strided_slice %13 {offsets = [0, 0, 0], sizes = [16, 16, 4], strides = [1, 1, 1]} : vector<16x18x4xbf16> to vector<16x16x4xbf16>
    %21 = vector.extract_strided_slice %13 {offsets = [0, 1, 0], sizes = [16, 16, 4], strides = [1, 1, 1]} : vector<16x18x4xbf16> to vector<16x16x4xbf16>
    %22 = vector.extract_strided_slice %13 {offsets = [0, 2, 0], sizes = [16, 16, 4], strides = [1, 1, 1]} : vector<16x18x4xbf16> to vector<16x16x4xbf16>
    %cst = arith.constant 0.000000e+00 : f32
    %23 = vector.broadcast %cst : f32 to vector<1x16xf32>
    %cst_8 = arith.constant 0.000000e+00 : f32
    %24 = vector.broadcast %cst_8 : f32 to vector<1x16xf32>
    %25 = tpu.concatenate %14, %15, %16, %17, %18, %19 in 2 : vector<16x16x4xbf16>, vector<16x16x4xbf16>, vector<16x16x4xbf16>, vector<16x16x4xbf16>, vector<16x16x4xbf16>, vector<16x16x4xbf16> -> vector<16x16x24xbf16>
    %26 = vector.shape_cast %25 : vector<16x16x24xbf16> to vector<256x24xbf16>
    %c0_9 = arith.constant 0 : index
    %c0_10 = arith.constant 0 : index
    %c0_11 = arith.constant 0 : index
    %27 = vector.load %arg3[%c0_9, %c0_10, %c0_11] : memref<2x24x16xbf16, #tpu.memory_space<vmem>>, vector<1x24x16xbf16>
    %28 = vector.shape_cast %27 : vector<1x24x16xbf16> to vector<24x16xbf16>
    %cst_12 = arith.constant dense<0.000000e+00> : vector<256x16xf32>
    %29 = tpu.matmul %26, %28, %cst_12 {dimension_numbers = #tpu.dot_dimension_numbers<[1], [0], [0], [1], [0, 0, 1, 1], [], []>} : vector<256x24xbf16>, vector<24x16xbf16>, vector<256x16xf32> -> vector<256x16xf32>
    %cst_13 = arith.constant dense<0.000000e+00> : vector<16xf32>
    %30 = vector.multi_reduction <add>, %29, %cst_13 [0] : vector<256x16xf32> to vector<16xf32>
    %31 = vector.shape_cast %30 : vector<16xf32> to vector<1x16xf32>
    %32 = arith.addf %23, %31 : vector<1x16xf32>
    %33 = arith.mulf %29, %29 : vector<256x16xf32>
    %cst_14 = arith.constant dense<0.000000e+00> : vector<16xf32>
    %34 = vector.multi_reduction <add>, %33, %cst_14 [0] : vector<256x16xf32> to vector<16xf32>
    %35 = vector.shape_cast %34 : vector<16xf32> to vector<1x16xf32>
    %36 = arith.addf %24, %35 : vector<1x16xf32>
    %37 = vector.shape_cast %29 : vector<256x16xf32> to vector<16x16x16xf32>
    %38 = arith.truncf %37 : vector<16x16x16xf32> to vector<16x16x16xbf16>
    %c0_15 = arith.constant 0 : index
    %c0_16 = arith.constant 0 : index
    %c0_17 = arith.constant 0 : index
    %c0_18 = arith.constant 0 : index
    %c0_19 = arith.constant 0 : index
    %39 = vector.load %arg4[%c0_15, %c0_16, %c0_17, %c0_18, %c0_19] : memref<1x16x2x16x16xbf16, #tpu.memory_space<vmem>>, vector<1x16x1x16x16xbf16>
    %40 = vector.shape_cast %39 : vector<1x16x1x16x16xbf16> to vector<16x16x16xbf16>
    %41 = vector.shape_cast %38 : vector<16x16x16xbf16> to vector<1x16x1x16x16xbf16>
    tpu.vector_store %arg4[%c0_15, %c0_16, %c0_17, %c0_18, %c0_19], %41 {strides = array<i32>} : memref<1x16x2x16x16xbf16, #tpu.memory_space<vmem>>, vector<1x16x1x16x16xbf16>,
    %42 = tpu.concatenate %17, %18, %19, %20, %21, %22 in 2 : vector<16x16x4xbf16>, vector<16x16x4xbf16>, vector<16x16x4xbf16>, vector<16x16x4xbf16>, vector<16x16x4xbf16>, vector<16x16x4xbf16> -> vector<16x16x24xbf16>
    %43 = vector.shape_cast %42 : vector<16x16x24xbf16> to vector<256x24xbf16>
    %c1 = arith.constant 1 : index
    %c0_20 = arith.constant 0 : index
    %c0_21 = arith.constant 0 : index
    %44 = vector.load %arg3[%c1, %c0_20, %c0_21] : memref<2x24x16xbf16, #tpu.memory_space<vmem>>, vector<1x24x16xbf16>
    %45 = vector.shape_cast %44 : vector<1x24x16xbf16> to vector<24x16xbf16>
    %cst_22 = arith.constant dense<0.000000e+00> : vector<256x16xf32>
    %46 = tpu.matmul %43, %45, %cst_22 {dimension_numbers = #tpu.dot_dimension_numbers<[1], [0], [0], [1], [0, 0, 1, 1], [], []>} : vector<256x24xbf16>, vector<24x16xbf16>, vector<256x16xf32> -> vector<256x16xf32>
    %cst_23 = arith.constant dense<0.000000e+00> : vector<16xf32>
    %47 = vector.multi_reduction <add>, %46, %cst_23 [0] : vector<256x16xf32> to vector<16xf32>
    %48 = vector.shape_cast %47 : vector<16xf32> to vector<1x16xf32>
    %49 = arith.addf %32, %48 : vector<1x16xf32>
    %50 = arith.mulf %46, %46 : vector<256x16xf32>
    %cst_24 = arith.constant dense<0.000000e+00> : vector<16xf32>
    %51 = vector.multi_reduction <add>, %50, %cst_24 [0] : vector<256x16xf32> to vector<16xf32>
    %52 = vector.shape_cast %51 : vector<16xf32> to vector<1x16xf32>
    %53 = arith.addf %36, %52 : vector<1x16xf32>
    %54 = vector.shape_cast %46 : vector<256x16xf32> to vector<16x16x16xf32>
    %55 = arith.truncf %54 : vector<16x16x16xf32> to vector<16x16x16xbf16>
    %c0_25 = arith.constant 0 : index
    %c0_26 = arith.constant 0 : index
    %c1_27 = arith.constant 1 : index
    %c0_28 = arith.constant 0 : index
    %c0_29 = arith.constant 0 : index
    %56 = vector.load %arg4[%c0_25, %c0_26, %c1_27, %c0_28, %c0_29] : memref<1x16x2x16x16xbf16, #tpu.memory_space<vmem>>, vector<1x16x1x16x16xbf16>
    %57 = vector.shape_cast %56 : vector<1x16x1x16x16xbf16> to vector<16x16x16xbf16>
    %58 = vector.shape_cast %55 : vector<16x16x16xbf16> to vector<1x16x1x16x16xbf16>
    tpu.vector_store %arg4[%c0_25, %c0_26, %c1_27, %c0_28, %c0_29], %58 {strides = array<i32>} : memref<1x16x2x16x16xbf16, #tpu.memory_space<vmem>>, vector<1x16x1x16x16xbf16>,
    %c0_30 = arith.constant 0 : index
    %c0_31 = arith.constant 0 : index
    %c0_32 = arith.constant 0 : index
    %c0_33 = arith.constant 0 : index
    %59 = vector.load %arg5[%c0_30, %c0_31, %c0_32, %c0_33] : memref<1x1x1x16xf32, #tpu.memory_space<vmem>>, vector<1x1x1x16xf32>
    %60 = vector.shape_cast %59 : vector<1x1x1x16xf32> to vector<1x16xf32>
    %61 = vector.shape_cast %49 : vector<1x16xf32> to vector<1x1x1x16xf32>
    tpu.vector_store %arg5[%c0_30, %c0_31, %c0_32, %c0_33], %61 {strides = array<i32>} : memref<1x1x1x16xf32, #tpu.memory_space<vmem>>, vector<1x1x1x16xf32>,
    %c0_34 = arith.constant 0 : index
    %c0_35 = arith.constant 0 : index
    %c0_36 = arith.constant 0 : index
    %c0_37 = arith.constant 0 : index
    %62 = vector.load %arg6[%c0_34, %c0_35, %c0_36, %c0_37] : memref<1x1x1x16xf32, #tpu.memory_space<vmem>>, vector<1x1x1x16xf32>
    %63 = vector.shape_cast %62 : vector<1x1x1x16xf32> to vector<1x16xf32>
    %64 = vector.shape_cast %53 : vector<1x16xf32> to vector<1x1x1x16xf32>
    tpu.vector_store %arg6[%c0_34, %c0_35, %c0_36, %c0_37], %64 {strides = array<i32>} : memref<1x1x1x16xf32, #tpu.memory_space<vmem>>, vector<1x1x1x16xf32>,
    return
  }
  func.func @transform_0(%arg0: i32, %arg1: i32) -> (i32, i32, i32, i32) {
    %c0_i32 = arith.constant 0 : i32
    %c0_i32_0 = arith.constant 0 : i32
    %c0_i32_1 = arith.constant 0 : i32
    %c0_i32_2 = arith.constant 0 : i32
    return %arg0, %c0_i32, %c0_i32_0, %c0_i32_1 : i32, i32, i32, i32
  }
  func.func @transform_1(%arg0: i32, %arg1: i32) -> (i32, i32, i32) {
    %c0_i32 = arith.constant 0 : i32
    %c0_i32_0 = arith.constant 0 : i32
    %c0_i32_1 = arith.constant 0 : i32
    %c0_i32_2 = arith.constant 0 : i32
    return %c0_i32, %c0_i32_0, %c0_i32_1 : i32, i32, i32
  }
  func.func @transform_2(%arg0: i32, %arg1: i32) -> (i32, i32, i32, i32, i32) {
    %c0_i32 = arith.constant 0 : i32
    %c0_i32_0 = arith.constant 0 : i32
    %c0_i32_1 = arith.constant 0 : i32
    %c0_i32_2 = arith.constant 0 : i32
    return %arg0, %arg1, %c0_i32, %c0_i32_0, %c0_i32_1 : i32, i32, i32, i32, i32
  }
  func.func @transform_3(%arg0: i32, %arg1: i32) -> (i32, i32, i32, i32) {
    %c0_i32 = arith.constant 0 : i32
    %c0_i32_0 = arith.constant 0 : i32
    %c0_i32_1 = arith.constant 0 : i32
    return %arg0, %arg1, %c0_i32, %c0_i32_0 : i32, i32, i32, i32
  }
  func.func @transform_4(%arg0: i32, %arg1: i32) -> (i32, i32, i32, i32) {
    %c0_i32 = arith.constant 0 : i32
    %c0_i32_0 = arith.constant 0 : i32
    %c0_i32_1 = arith.constant 0 : i32
    return %arg0, %arg1, %c0_i32, %c0_i32_0 : i32, i32, i32, i32
  }
}

module attributes {stable_mosaic.version = 11 : i64} {
  func.func @_bn_relu_kernel(%arg0: i32, %arg1: i32, %arg2: memref<1x8x32x32xbf16, #tpu.memory_space<vmem>>, %arg3: memref<8x1x1xf32, #tpu.memory_space<vmem>>, %arg4: memref<8x1x1xf32, #tpu.memory_space<vmem>>, %arg5: memref<1x8x32x32xf32, #tpu.memory_space<vmem>>) attributes {dimension_semantics = [#tpu.dimension_semantics<parallel>, #tpu.dimension_semantics<parallel>], iteration_bounds = array<i64: 2, 1>, scalar_prefetch = 0 : i64, scratch_operands = 0 : i64, tpu.core_type = #tpu.core_type<tc>, window_params = [{transform_indices = @transform_0, window_bounds = array<i64: 1, 8, 32, 32>}, {pipeline_mode = #tpu.pipeline_mode<synchronous>, transform_indices = @transform_1, window_bounds = array<i64: 8, 1, 1>}, {pipeline_mode = #tpu.pipeline_mode<synchronous>, transform_indices = @transform_2, window_bounds = array<i64: 8, 1, 1>}, {transform_indices = @transform_3, window_bounds = array<i64: 1, 8, 32, 32>}]} {
    %c0 = arith.constant 0 : index
    %c0_0 = arith.constant 0 : index
    %c0_1 = arith.constant 0 : index
    %c0_2 = arith.constant 0 : index
    %0 = vector.load %arg2[%c0, %c0_0, %c0_1, %c0_2] : memref<1x8x32x32xbf16, #tpu.memory_space<vmem>>, vector<1x8x32x32xbf16>
    %1 = arith.extf %0 : vector<1x8x32x32xbf16> to vector<1x8x32x32xf32>
    %c0_3 = arith.constant 0 : index
    %c0_4 = arith.constant 0 : index
    %c0_5 = arith.constant 0 : index
    %2 = vector.load %arg3[%c0_3, %c0_4, %c0_5] : memref<8x1x1xf32, #tpu.memory_space<vmem>>, vector<8x1x1xf32>
    %3 = vector.shape_cast %2 : vector<8x1x1xf32> to vector<1x8x1x1xf32>
    %4 = vector.broadcast %3 : vector<1x8x1x1xf32> to vector<1x8x32x32xf32>
    %5 = arith.mulf %1, %4 : vector<1x8x32x32xf32>
    %c0_6 = arith.constant 0 : index
    %c0_7 = arith.constant 0 : index
    %c0_8 = arith.constant 0 : index
    %6 = vector.load %arg4[%c0_6, %c0_7, %c0_8] : memref<8x1x1xf32, #tpu.memory_space<vmem>>, vector<8x1x1xf32>
    %7 = vector.shape_cast %6 : vector<8x1x1xf32> to vector<1x8x1x1xf32>
    %8 = vector.broadcast %7 : vector<1x8x1x1xf32> to vector<1x8x32x32xf32>
    %9 = arith.addf %5, %8 : vector<1x8x32x32xf32>
    %cst = arith.constant 0.000000e+00 : f32
    %10 = vector.broadcast %cst : f32 to vector<1x8x32x32xf32>
    %11 = arith.maximumf %9, %10 : vector<1x8x32x32xf32>
    %c0_9 = arith.constant 0 : index
    %c0_10 = arith.constant 0 : index
    %c0_11 = arith.constant 0 : index
    %c0_12 = arith.constant 0 : index
    %12 = vector.load %arg5[%c0_9, %c0_10, %c0_11, %c0_12] : memref<1x8x32x32xf32, #tpu.memory_space<vmem>>, vector<1x8x32x32xf32>
    tpu.vector_store %arg5[%c0_9, %c0_10, %c0_11, %c0_12], %11 {strides = array<i32>} : memref<1x8x32x32xf32, #tpu.memory_space<vmem>>, vector<1x8x32x32xf32>,
    return
  }
  func.func @transform_0(%arg0: i32, %arg1: i32) -> (i32, i32, i32, i32) {
    %c0_i32 = arith.constant 0 : i32
    %c0_i32_0 = arith.constant 0 : i32
    %c0_i32_1 = arith.constant 0 : i32
    return %arg0, %c0_i32, %arg1, %c0_i32_0 : i32, i32, i32, i32
  }
  func.func @transform_1(%arg0: i32, %arg1: i32) -> (i32, i32, i32) {
    %c0_i32 = arith.constant 0 : i32
    %c0_i32_0 = arith.constant 0 : i32
    %c0_i32_1 = arith.constant 0 : i32
    %c0_i32_2 = arith.constant 0 : i32
    return %c0_i32, %c0_i32_0, %c0_i32_1 : i32, i32, i32
  }
  func.func @transform_2(%arg0: i32, %arg1: i32) -> (i32, i32, i32) {
    %c0_i32 = arith.constant 0 : i32
    %c0_i32_0 = arith.constant 0 : i32
    %c0_i32_1 = arith.constant 0 : i32
    %c0_i32_2 = arith.constant 0 : i32
    return %c0_i32, %c0_i32_0, %c0_i32_1 : i32, i32, i32
  }
  func.func @transform_3(%arg0: i32, %arg1: i32) -> (i32, i32, i32, i32) {
    %c0_i32 = arith.constant 0 : i32
    %c0_i32_0 = arith.constant 0 : i32
    %c0_i32_1 = arith.constant 0 : i32
    return %arg0, %c0_i32, %arg1, %c0_i32_0 : i32, i32, i32, i32
  }
}

</mosaic_0001>

<llo_original>
// kernel: up_conv_forward.3
$region0: #{up_conv_forward.3}
  #allocation0 [shape = 'u32[]', space=smem, size = 0x4, offset = 0x4, fixed_abs, tag = 'smem constant byte address 0x4 - core index']
  #allocation1 [shape = 'u32[144,128]{1,0:T(1,128)}', space=vmem, size = 0x12000, scoped, tag = 'internal scratch']
  %s0 = inlined_call_operand.vmem [shape: bf16[2,8,32,32], index: 0, kind: input, shape index: {}]
  %s1 = inlined_call_operand.vmem [shape: f32[8,1,1], index: 1, kind: input, shape index: {}]
  %s2 = inlined_call_operand.vmem [shape: f32[8,1,1], index: 2, kind: input, shape index: {}]
  %s3 = inlined_call_operand.hbm [shape: f32[2,8,32,32], index: 3, kind: output, shape index: {}]
  %s4 = sld [smem:[#allocation0]]
  $region45: #{up_conv_forward.3} parent=0
    _
  %s6 = ssub.s32 1, %s4
  %s7 = scalar_select 0, %s6, %s4
  $region1: #{up_conv_forward.3} parent=0
    #allocation2 [shape = 'u8[262144]{0}', space=vmem, size = 0x40000, scoped, tag = 'output window, operand 0']
    #allocation3 [shape = 's32[2]{0}', space=sflag, size = 0x8, scoped, tag = 'scoped memory for up_conv_forward.3']
    %8 = vsyncpa [#allocation3], 0
    %s9 = scalar_lea.sflag [#allocation3], 1
    %10 = vsyncpa %s9, 0
    loop: start=0, step=1, limit=4
    $region2: #{up_conv_forward.3} parent=1 // loop_pre_header
      _
    $region3: #{up_conv_forward.3} parent=1 // loop_header
      %s12 = sphi 0, %s16
      %p13 = scmp.ge.s32.totalorder %s12, 4
      %s19 = sphi 0, %s31
      %s20 = sphi 0, %s27
      %s21 = sphi 0, %s19
      %s22 = sphi 0, %s20
      %s23 = sphi 0, %s21
      %s24 = sphi 0, %s22
      %s36 = sphi 0, %s38
      %s39 = sphi 0, %s36
      %s40 = sphi 0, %s39
      %s56 = sphi 0, %s40
      %s60 = sphi 0, %s60
      %s62 = sphi 0, %s60
      %s63 = sphi 0, %s62
      %s77 = sphi 0, %s63
      %s81 = sphi 0, %s81
      %s83 = sphi 0, %s81
      %s84 = sphi 0, %s83
      %s98 = sphi 0, %s84
      %s106 = sphi 0, %s108
      %s109 = sphi 0, %s106
      %s110 = sphi 0, %s109
      %s126 = sphi 0, %s110
    $region4: #{up_conv_forward.3} parent=1 // loop_header_branch
      %15 = sbr.rel (%p13) target = $region8
    $region5: #{up_conv_forward.3} parent=1 // loop_body
      %s17 = ssub.s32 %s12, 1
      %s18 = ssub.s32 %s12, 2
      %s25 = sadd.s32 1, %s20
      %p26 = scmp.ge.s32.totalorder %s25, 1
      %s27 = scalar_select %p26, 0, %s25
      %s28 = sadd.s32 1, %s19
      %s29 = scalar_select %p26, %s28, %s19
      %p30 = scmp.ge.s32.totalorder %s29, 2
      %s31 = scalar_select %p30, 0, %s29
      %s32 = ssub.s32 %s19, %s31
      %s33 = ssub.s32 %s20, %s27
      %s34 = sor.u32 %s32, %s33
      %p35 = scmp.eq.s32.totalorder %s34, 0
      %s37 = sadd.s32 %s36, 1
      %s38 = scalar_select %p35, %s36, %s37
      %p41 = pneg %p35
      %p42 = scmp.eq.s32.totalorder %s12, 1
      %p43 = por %p41, %p42
      %p44 = scmp.ne.s32.totalorder %s36, %s39
      %p45 = scmp.eq.s32.totalorder %s12, 0
      %p46 = por %p44, %p45
      %p47 = scmp.ne.s32.totalorder %s36, %s39
      %p48 = scmp.eq.s32.totalorder %s17, 1
      %p49 = por %p47, %p48
      %p50 = scmp.ne.s32.totalorder %s39, %s40
      %p51 = scmp.eq.s32.totalorder %s17, 0
      %p52 = por %p50, %p51
      %p53 = scmp.ne.s32.totalorder %s39, %s40
      %p54 = scmp.eq.s32.totalorder %s18, 1
      %p55 = por %p53, %p54
      %p57 = scmp.ne.s32.totalorder %s40, %s56
      %p58 = scmp.eq.s32.totalorder %s18, 0
      %p59 = por %p57, %p58
      %s61 = sadd.s32 %s60, 1
      %p64 = scmp.eq.s32.totalorder %s12, 1
      %p65 = scmp.ne.s32.totalorder %s60, %s62
      %p66 = scmp.eq.s32.totalorder %s12, 0
      %p67 = por %p65, %p66
      %p68 = scmp.ne.s32.totalorder %s60, %s62
      %p69 = scmp.eq.s32.totalorder %s17, 1
      %p70 = por %p68, %p69
      %p71 = scmp.ne.s32.totalorder %s62, %s63
      %p72 = scmp.eq.s32.totalorder %s17, 0
      %p73 = por %p71, %p72
      %p74 = scmp.ne.s32.totalorder %s62, %s63
      %p75 = scmp.eq.s32.totalorder %s18, 1
      %p76 = por %p74, %p75
      %p78 = scmp.ne.s32.totalorder %s63, %s77
      %p79 = scmp.eq.s32.totalorder %s18, 0
      %p80 = por %p78, %p79
      %s82 = sadd.s32 %s81, 1
      %p85 = scmp.eq.s32.totalorder %s12, 1
      %p86 = scmp.ne.s32.totalorder %s81, %s83
      %p87 = scmp.eq.s32.totalorder %s12, 0
      %p88 = por %p86, %p87
      %p89 = scmp.ne.s32.totalorder %s81, %s83
      %p90 = scmp.eq.s32.totalorder %s17, 1
      %p91 = por %p89, %p90
      %p92 = scmp.ne.s32.totalorder %s83, %s84
      %p93 = scmp.eq.s32.totalorder %s17, 0
      %p94 = por %p92, %p93
      %p95 = scmp.ne.s32.totalorder %s83, %s84
      %p96 = scmp.eq.s32.totalorder %s18, 1
      %p97 = por %p95, %p96
      %p99 = scmp.ne.s32.totalorder %s84, %s98
      %p100 = scmp.eq.s32.totalorder %s18, 0
      %p101 = por %p99, %p100
      %s102 = ssub.s32 %s19, %s31
      %s103 = ssub.s32 %s20, %s27
      %s104 = sor.u32 %s102, %s103
      %p105 = scmp.eq.s32.totalorder %s104, 0
      %s107 = sadd.s32 %s106, 1
      %s108 = scalar_select %p105, %s106, %s107
      %p111 = pneg %p105
      %p112 = scmp.eq.s32.totalorder %s12, 1
      %p113 = por %p111, %p112
      %p114 = scmp.ne.s32.totalorder %s106, %s109
      %p115 = scmp.eq.s32.totalorder %s12, 0
      %p116 = por %p114, %p115
      %p117 = scmp.ne.s32.totalorder %s106, %s109
      %p118 = scmp.eq.s32.totalorder %s17, 1
      %p119 = por %p117, %p118
      %p120 = scmp.ne.s32.totalorder %s109, %s110
      %p121 = scmp.eq.s32.totalorder %s17, 0
      %p122 = por %p120, %p121
      %p123 = scmp.ne.s32.totalorder %s109, %s110
      %p124 = scmp.eq.s32.totalorder %s18, 1
      %p125 = por %p123, %p124
      %p127 = scmp.ne.s32.totalorder %s110, %s126
      %p128 = scmp.eq.s32.totalorder %s18, 0
      %p129 = por %p127, %p128
      %p130 = scmp.le.s32.totalorder 1, %s12
      %p131 = scmp.lt.s32.totalorder %s12, 3
      %p132 = pnand %p130, %p131
      %p133 = pneg %p132
      // Predicated region
      $region9: #{up_conv_forward.3} parent=5 // pred_check
        _
      $region10: #{up_conv_forward.3} parent=5 // pred_check_branch
        %135 = sbr.rel (%p132) target = $region12
      $region11: #{up_conv_forward.3} parent=5 // pred_region
        %s136 = ssub.s32 %s12, 1
        // Predicated region
        $region13: #{up_conv_forward.3} parent=11 // pred_check
          %p137 = pneg %p73
        $region14: #{up_conv_forward.3} parent=11 // pred_check_branch
          %139 = sbr.rel (%p137) target = $region16
        $region15: #{up_conv_forward.3} parent=11 // pred_region
          _
        $region16: #{up_conv_forward.3} parent=11 // pred_fallthru
          _
        // Predicated region
        $region17: #{up_conv_forward.3} parent=11 // pred_check
          %p140 = pneg %p94
        $region18: #{up_conv_forward.3} parent=11 // pred_check_branch
          %142 = sbr.rel (%p140) target = $region20
        $region19: #{up_conv_forward.3} parent=11 // pred_region
          _
        $region20: #{up_conv_forward.3} parent=11 // pred_fallthru
          _
      $region12: #{up_conv_forward.3} parent=5 // pred_fallthru
        _
      %p143 = scmp.lt.s32.totalorder %s12, 2
      // Predicated region
      $region21: #{up_conv_forward.3} parent=5 // pred_check
        %p144 = pneg %p143
      $region22: #{up_conv_forward.3} parent=5 // pred_check_branch
        %146 = sbr.rel (%p144) target = $region24
      $region23: #{up_conv_forward.3} parent=5 // pred_region
        // Predicated region
        $region25: #{up_conv_forward.3} parent=23 // pred_check
          %p147 = pneg %p46
        $region26: #{up_conv_forward.3} parent=23 // pred_check_branch
          %149 = sbr.rel (%p147) target = $region28
        $region27: #{up_conv_forward.3} parent=23 // pred_region
          %s150 = smul.u32 4, %s20
          %p151 = scmp.lt.s32.totalorder %s19, 1
          %s152 = scalar_select %p151, %s19, 1
          %p153 = scmp.lt.s32.totalorder %s150, 3
          %s154 = scalar_select %p153, %s150, 3
          %s155 = smul.addr %s152, 32
          %s156 = sadd.s32 %s154, %s155
          %s157 = smul.addr %s156, 4
          %s158 = scalar_lea.vmem %s0, %s157
          %s159 = smul.u32 4, %s20
        $region28: #{up_conv_forward.3} parent=23 // pred_fallthru
          _
      $region24: #{up_conv_forward.3} parent=5 // pred_fallthru
        _
      %p160 = scmp.le.s32.totalorder 1, %s12
      %p161 = scmp.lt.s32.totalorder %s12, 3
      %p162 = pnand %p160, %p161
      %p163 = pneg %p162
      // Predicated region
      $region29: #{up_conv_forward.3} parent=5 // pred_check
        _
      $region30: #{up_conv_forward.3} parent=5 // pred_check_branch
        %165 = sbr.rel (%p162) target = $region32
      $region31: #{up_conv_forward.3} parent=5 // pred_region
        %s166 = ssub.s32 %s12, 1
        %s167 = smul.u32 4, %s22
        %p168 = scmp.lt.s32.totalorder %s21, 1
        %s169 = scalar_select %p168, %s21, 1
        %p170 = scmp.lt.s32.totalorder %s167, 3
        %s171 = scalar_select %p170, %s167, 3
        %s172 = smul.addr %s169, 32
        %s173 = sadd.s32 %s171, %s172
        %s174 = smul.addr %s173, 4
        %s175 = scalar_lea.vmem %s0, %s174
        %p176 = pneg %p52
        %p177 = pneg %p49
        %p178 = pneg %p73
        %p179 = pneg %p70
        %p180 = pneg %p94
        %p181 = pneg %p91
        %p182 = pneg %p122
        %p183 = pneg %p119
        %s184 = sand.u32 %s109, 1
        %s185 = scalar_lea.sflag [#allocation3], %s184
        %s186 = sand.u32 %s109, 1
        %s187 = smul.addr %s186, 256
        %s188 = scalar_lea.vmem [#allocation2], %s187
        %s189 = smul.u32 4, %s22
        %p190 = scmp.lt.s32.totalorder %s21, 1
        %s191 = scalar_select %p190, %s21, 1
        %p192 = scmp.lt.s32.totalorder %s189, 3
        %s193 = scalar_select %p192, %s189, 3
        %s194 = smul.addr %s191, 32
        %s195 = sadd.s32 %s193, %s194
        %s196 = smul.addr %s195, 4
        %s197 = scalar_lea.vmem %s0, %s196
        %s198 = smul.u32 4, %s22
        %s199 = smul.u32 4, %s22
        %v200 = vld [vmem:[%s197] sm:$0xf]
        %v201 = vld [vmem:[%s197 + $0x4] sm:$0xf]
        %v202 = vld [vmem:[%s197 + $0x8] sm:$0xf]
        %v203 = vld [vmem:[%s197 + $0xc] sm:$0xf]
        %v204 = vld [vmem:[%s197 + $0x10] sm:$0xf]
        %v205 = vld [vmem:[%s197 + $0x14] sm:$0xf]
        %v206 = vld [vmem:[%s197 + $0x18] sm:$0xf]
        %v207 = vld [vmem:[%s197 + $0x1c] sm:$0xf]
        %v208 = vld [vmem:[%s197 + $0x20] sm:$0xf]
        %v209 = vld [vmem:[%s197 + $0x24] sm:$0xf]
        %v210 = vld [vmem:[%s197 + $0x28] sm:$0xf]
        %v211 = vld [vmem:[%s197 + $0x2c] sm:$0xf]
        %v212 = vld [vmem:[%s197 + $0x30] sm:$0xf]
        %v213 = vld [vmem:[%s197 + $0x34] sm:$0xf]
        %v214 = vld [vmem:[%s197 + $0x38] sm:$0xf]
        %v215 = vld [vmem:[%s197 + $0x3c] sm:$0xf]
        %v216 = vld [vmem:[%s197 + $0x40] sm:$0xf]
        %v217 = vld [vmem:[%s197 + $0x44] sm:$0xf]
        %v218 = vld [vmem:[%s197 + $0x48] sm:$0xf]
        %v219 = vld [vmem:[%s197 + $0x4c] sm:$0xf]
        %v220 = vld [vmem:[%s197 + $0x50] sm:$0xf]
        %v221 = vld [vmem:[%s197 + $0x54] sm:$0xf]
        %v222 = vld [vmem:[%s197 + $0x58] sm:$0xf]
        %v223 = vld [vmem:[%s197 + $0x5c] sm:$0xf]
        %v224 = vld [vmem:[%s197 + $0x60] sm:$0xf]
        %v225 = vld [vmem:[%s197 + $0x64] sm:$0xf]
        %v226 = vld [vmem:[%s197 + $0x68] sm:$0xf]
        %v227 = vld [vmem:[%s197 + $0x6c] sm:$0xf]
        %v228 = vld [vmem:[%s197 + $0x70] sm:$0xf]
        %v229 = vld [vmem:[%s197 + $0x74] sm:$0xf]
        %v230 = vld [vmem:[%s197 + $0x78] sm:$0xf]
        %v231 = vld [vmem:[%s197 + $0x7c] sm:$0xf]
        %v232 = vunpack.c.l.bf16 %v200
        %v233 = vunpack.c.l.bf16 %v201
        %v234 = vunpack.c.l.bf16 %v202
        %v235 = vunpack.c.l.bf16 %v203
        %v236 = vunpack.c.l.bf16 %v204
        %v237 = vunpack.c.l.bf16 %v205
        %v238 = vunpack.c.l.bf16 %v206
        %v239 = vunpack.c.l.bf16 %v207
        %v240 = vunpack.c.l.bf16 %v208
        %v241 = vunpack.c.l.bf16 %v209
        %v242 = vunpack.c.l.bf16 %v210
        %v243 = vunpack.c.l.bf16 %v211
        %v244 = vunpack.c.l.bf16 %v212
        %v245 = vunpack.c.l.bf16 %v213
        %v246 = vunpack.c.l.bf16 %v214
        %v247 = vunpack.c.l.bf16 %v215
        %v248 = vunpack.c.l.bf16 %v216
        %v249 = vunpack.c.l.bf16 %v217
        %v250 = vunpack.c.l.bf16 %v218
        %v251 = vunpack.c.l.bf16 %v219
        %v252 = vunpack.c.l.bf16 %v220
        %v253 = vunpack.c.l.bf16 %v221
        %v254 = vunpack.c.l.bf16 %v222
        %v255 = vunpack.c.l.bf16 %v223
        %v256 = vunpack.c.l.bf16 %v224
        %v257 = vunpack.c.l.bf16 %v225
        %v258 = vunpack.c.l.bf16 %v226
        %v259 = vunpack.c.l.bf16 %v227
        %v260 = vunpack.c.l.bf16 %v228
        %v261 = vunpack.c.l.bf16 %v229
        %v262 = vunpack.c.l.bf16 %v230
        %v263 = vunpack.c.l.bf16 %v231
        %v264 = vld [vmem:[%s1] sm:$0x1]
        %v265 = vld [vmem:[%s1 + $0x1] sm:$0x1]
        %v266 = vld [vmem:[%s1 + $0x2] sm:$0x1]
        %v267 = vld [vmem:[%s1 + $0x3] sm:$0x1]
        %v268 = vld [vmem:[%s1 + $0x4] sm:$0x1]
        %v269 = vld [vmem:[%s1 + $0x5] sm:$0x1]
        %v270 = vld [vmem:[%s1 + $0x6] sm:$0x1]
        %v271 = vld [vmem:[%s1 + $0x7] sm:$0x1]
        %v280 = vlaneseq
        %v281 = vshrl.u32 %v280, 7
        %v282 = vsub.s32 0, %v281
        %v283 = vrot.slane %v264, %v282
        %v284 = vlaneseq
        %v285 = vshrl.u32 %v284, 7
        %v286 = vsub.s32 0, %v285
        %v287 = vrot.slane %v265, %v286
        %v288 = vlaneseq
        %v289 = vshrl.u32 %v288, 7
        %v290 = vsub.s32 0, %v289
        %v291 = vrot.slane %v266, %v290
        %v292 = vlaneseq
        %v293 = vshrl.u32 %v292, 7
        %v294 = vsub.s32 0, %v293
        %v295 = vrot.slane %v267, %v294
        %v296 = vlaneseq
        %v297 = vshrl.u32 %v296, 7
        %v298 = vsub.s32 0, %v297
        %v299 = vrot.slane %v268, %v298
        %v300 = vlaneseq
        %v301 = vshrl.u32 %v300, 7
        %v302 = vsub.s32 0, %v301
        %v303 = vrot.slane %v269, %v302
        %v304 = vlaneseq
        %v305 = vshrl.u32 %v304, 7
        %v306 = vsub.s32 0, %v305
        %v307 = vrot.slane %v270, %v306
        %v308 = vlaneseq
        %v309 = vshrl.u32 %v308, 7
        %v310 = vsub.s32 0, %v309
        %v311 = vrot.slane %v271, %v310
        %312 = vset.pattern.permute.xlu0 0
        %313 = vperm.xlu0 %312, %v283
        %v314 = vpop.permute.xlu0 %313
        %316 = vset.pattern.permute.xlu0 0
        %317 = vperm.xlu0 %316, %v287
        %v318 = vpop.permute.xlu0 %317
        %320 = vset.pattern.permute.xlu0 0
        %321 = vperm.xlu0 %320, %v291
        %v322 = vpop.permute.xlu0 %321
        %324 = vset.pattern.permute.xlu0 0
        %325 = vperm.xlu0 %324, %v295
        %v326 = vpop.permute.xlu0 %325
        %328 = vset.pattern.permute.xlu0 0
        %329 = vperm.xlu0 %328, %v299
        %v330 = vpop.permute.xlu0 %329
        %332 = vset.pattern.permute.xlu0 0
        %333 = vperm.xlu0 %332, %v303
        %v334 = vpop.permute.xlu0 %333
        %336 = vset.pattern.permute.xlu0 0
        %337 = vperm.xlu0 %336, %v307
        %v338 = vpop.permute.xlu0 %337
        %340 = vset.pattern.permute.xlu0 0
        %341 = vperm.xlu0 %340, %v311
        %v342 = vpop.permute.xlu0 %341
        %v344 = vmul.f32 %v232, %v314
        %v345 = vmul.f32 %v233, %v314
        %v346 = vmul.f32 %v234, %v314
        %v347 = vmul.f32 %v235, %v314
        %v348 = vmul.f32 %v236, %v318
        %v349 = vmul.f32 %v237, %v318
        %v350 = vmul.f32 %v238, %v318
        %v351 = vmul.f32 %v239, %v318
        %v352 = vmul.f32 %v240, %v322
        %v353 = vmul.f32 %v241, %v322
        %v354 = vmul.f32 %v242, %v322
        %v355 = vmul.f32 %v243, %v322
        %v356 = vmul.f32 %v244, %v326
        %v357 = vmul.f32 %v245, %v326
        %v358 = vmul.f32 %v246, %v326
        %v359 = vmul.f32 %v247, %v326
        %v360 = vmul.f32 %v248, %v330
        %v361 = vmul.f32 %v249, %v330
        %v362 = vmul.f32 %v250, %v330
        %v363 = vmul.f32 %v251, %v330
        %v364 = vmul.f32 %v252, %v334
        %v365 = vmul.f32 %v253, %v334
        %v366 = vmul.f32 %v254, %v334
        %v367 = vmul.f32 %v255, %v334
        %v368 = vmul.f32 %v256, %v338
        %v369 = vmul.f32 %v257, %v338
        %v370 = vmul.f32 %v258, %v338
        %v371 = vmul.f32 %v259, %v338
        %v372 = vmul.f32 %v260, %v342
        %v373 = vmul.f32 %v261, %v342
        %v374 = vmul.f32 %v262, %v342
        %v375 = vmul.f32 %v263, %v342
        %v376 = vld [vmem:[%s2] sm:$0x1]
        %v377 = vld [vmem:[%s2 + $0x1] sm:$0x1]
        %v378 = vld [vmem:[%s2 + $0x2] sm:$0x1]
        %v379 = vld [vmem:[%s2 + $0x3] sm:$0x1]
        %v380 = vld [vmem:[%s2 + $0x4] sm:$0x1]
        %v381 = vld [vmem:[%s2 + $0x5] sm:$0x1]
        %v382 = vld [vmem:[%s2 + $0x6] sm:$0x1]
        %v383 = vld [vmem:[%s2 + $0x7] sm:$0x1]
        %v392 = vlaneseq
        %v393 = vshrl.u32 %v392, 7
        %v394 = vsub.s32 0, %v393
        %v395 = vrot.slane %v376, %v394
        %v396 = vlaneseq
        %v397 = vshrl.u32 %v396, 7
        %v398 = vsub.s32 0, %v397
        %v399 = vrot.slane %v377, %v398
        %v400 = vlaneseq
        %v401 = vshrl.u32 %v400, 7
        %v402 = vsub.s32 0, %v401
        %v403 = vrot.slane %v378, %v402
        %v404 = vlaneseq
        %v405 = vshrl.u32 %v404, 7
        %v406 = vsub.s32 0, %v405
        %v407 = vrot.slane %v379, %v406
        %v408 = vlaneseq
        %v409 = vshrl.u32 %v408, 7
        %v410 = vsub.s32 0, %v409
        %v411 = vrot.slane %v380, %v410
        %v412 = vlaneseq
        %v413 = vshrl.u32 %v412, 7
        %v414 = vsub.s32 0, %v413
        %v415 = vrot.slane %v381, %v414
        %v416 = vlaneseq
        %v417 = vshrl.u32 %v416, 7
        %v418 = vsub.s32 0, %v417
        %v419 = vrot.slane %v382, %v418
        %v420 = vlaneseq
        %v421 = vshrl.u32 %v420, 7
        %v422 = vsub.s32 0, %v421
        %v423 = vrot.slane %v383, %v422
        %424 = vset.pattern.permute.xlu0 0
        %425 = vperm.xlu0 %424, %v395
        %v426 = vpop.permute.xlu0 %425
        %428 = vset.pattern.permute.xlu0 0
        %429 = vperm.xlu0 %428, %v399
        %v430 = vpop.permute.xlu0 %429
        %432 = vset.pattern.permute.xlu0 0
        %433 = vperm.xlu0 %432, %v403
        %v434 = vpop.permute.xlu0 %433
        %436 = vset.pattern.permute.xlu0 0
        %437 = vperm.xlu0 %436, %v407
        %v438 = vpop.permute.xlu0 %437
        %440 = vset.pattern.permute.xlu0 0
        %441 = vperm.xlu0 %440, %v411
        %v442 = vpop.permute.xlu0 %441
        %444 = vset.pattern.permute.xlu0 0
        %445 = vperm.xlu0 %444, %v415
        %v446 = vpop.permute.xlu0 %445
        %448 = vset.pattern.permute.xlu0 0
        %449 = vperm.xlu0 %448, %v419
        %v450 = vpop.permute.xlu0 %449
        %452 = vset.pattern.permute.xlu0 0
        %453 = vperm.xlu0 %452, %v423
        %v454 = vpop.permute.xlu0 %453
        %v456 = vadd.f32 %v344, %v426
        %v457 = vadd.f32 %v345, %v426
        %v458 = vadd.f32 %v346, %v426
        %v459 = vadd.f32 %v347, %v426
        %v460 = vadd.f32 %v348, %v430
        %v461 = vadd.f32 %v349, %v430
        %v462 = vadd.f32 %v350, %v430
        %v463 = vadd.f32 %v351, %v430
        %v464 = vadd.f32 %v352, %v434
        %v465 = vadd.f32 %v353, %v434
        %v466 = vadd.f32 %v354, %v434
        %v467 = vadd.f32 %v355, %v434
        %v468 = vadd.f32 %v356, %v438
        %v469 = vadd.f32 %v357, %v438
        %v470 = vadd.f32 %v358, %v438
        %v471 = vadd.f32 %v359, %v438
        %v472 = vadd.f32 %v360, %v442
        %v473 = vadd.f32 %v361, %v442
        %v474 = vadd.f32 %v362, %v442
        %v475 = vadd.f32 %v363, %v442
        %v476 = vadd.f32 %v364, %v446
        %v477 = vadd.f32 %v365, %v446
        %v478 = vadd.f32 %v366, %v446
        %v479 = vadd.f32 %v367, %v446
        %v480 = vadd.f32 %v368, %v450
        %v481 = vadd.f32 %v369, %v450
        %v482 = vadd.f32 %v370, %v450
        %v483 = vadd.f32 %v371, %v450
        %v484 = vadd.f32 %v372, %v454
        %v485 = vadd.f32 %v373, %v454
        %v486 = vadd.f32 %v374, %v454
        %v487 = vadd.f32 %v375, %v454
        %v488 = vmax.f32 %v456, 0.0
        %v489 = vmax.f32 %v457, 0.0
        %v490 = vmax.f32 %v458, 0.0
        %v491 = vmax.f32 %v459, 0.0
        %v492 = vmax.f32 %v460, 0.0
        %v493 = vmax.f32 %v461, 0.0
        %v494 = vmax.f32 %v462, 0.0
        %v495 = vmax.f32 %v463, 0.0
        %v496 = vmax.f32 %v464, 0.0
        %v497 = vmax.f32 %v465, 0.0
        %v498 = vmax.f32 %v466, 0.0
        %v499 = vmax.f32 %v467, 0.0
        %v500 = vmax.f32 %v468, 0.0
        %v501 = vmax.f32 %v469, 0.0
        %v502 = vmax.f32 %v470, 0.0
        %v503 = vmax.f32 %v471, 0.0
        %v504 = vmax.f32 %v472, 0.0
        %v505 = vmax.f32 %v473, 0.0
        %v506 = vmax.f32 %v474, 0.0
        %v507 = vmax.f32 %v475, 0.0
        %v508 = vmax.f32 %v476, 0.0
        %v509 = vmax.f32 %v477, 0.0
        %v510 = vmax.f32 %v478, 0.0
        %v511 = vmax.f32 %v479, 0.0
        %v512 = vmax.f32 %v480, 0.0
        %v513 = vmax.f32 %v481, 0.0
        %v514 = vmax.f32 %v482, 0.0
        %v515 = vmax.f32 %v483, 0.0
        %v516 = vmax.f32 %v484, 0.0
        %v517 = vmax.f32 %v485, 0.0
        %v518 = vmax.f32 %v486, 0.0
        %v519 = vmax.f32 %v487, 0.0
        %vm520 = vcmask 261120
        %521 = vst.msk [vmem:[%s188] sm:$0xff] %vm520, %v488
        %522 = vst.msk [vmem:[%s188 + $0x8] sm:$0xff] %vm520, %v489
        %523 = vst.msk [vmem:[%s188 + $0x10] sm:$0xff] %vm520, %v490
        %524 = vst.msk [vmem:[%s188 + $0x18] sm:$0xff] %vm520, %v491
        %525 = vst.msk [vmem:[%s188 + $0x20] sm:$0xff] %vm520, %v492
        %526 = vst.msk [vmem:[%s188 + $0x28] sm:$0xff] %vm520, %v493
        %527 = vst.msk [vmem:[%s188 + $0x30] sm:$0xff] %vm520, %v494
        %528 = vst.msk [vmem:[%s188 + $0x38] sm:$0xff] %vm520, %v495
        %529 = vst.msk [vmem:[%s188 + $0x40] sm:$0xff] %vm520, %v496
        %530 = vst.msk [vmem:[%s188 + $0x48] sm:$0xff] %vm520, %v497
        %531 = vst.msk [vmem:[%s188 + $0x50] sm:$0xff] %vm520, %v498
        %532 = vst.msk [vmem:[%s188 + $0x58] sm:$0xff] %vm520, %v499
        %533 = vst.msk [vmem:[%s188 + $0x60] sm:$0xff] %vm520, %v500
        %534 = vst.msk [vmem:[%s188 + $0x68] sm:$0xff] %vm520, %v501
        %535 = vst.msk [vmem:[%s188 + $0x70] sm:$0xff] %vm520, %v502
        %536 = vst.msk [vmem:[%s188 + $0x78] sm:$0xff] %vm520, %v503
        %537 = vst.msk [vmem:[%s188 + $0x80] sm:$0xff] %vm520, %v504
        %538 = vst.msk [vmem:[%s188 + $0x88] sm:$0xff] %vm520, %v505
        %539 = vst.msk [vmem:[%s188 + $0x90] sm:$0xff] %vm520, %v506
        %540 = vst.msk [vmem:[%s188 + $0x98] sm:$0xff] %vm520, %v507
        %541 = vst.msk [vmem:[%s188 + $0xa0] sm:$0xff] %vm520, %v508
        %542 = vst.msk [vmem:[%s188 + $0xa8] sm:$0xff] %vm520, %v509
        %543 = vst.msk [vmem:[%s188 + $0xb0] sm:$0xff] %vm520, %v510
        %544 = vst.msk [vmem:[%s188 + $0xb8] sm:$0xff] %vm520, %v511
        %545 = vst.msk [vmem:[%s188 + $0xc0] sm:$0xff] %vm520, %v512
        %546 = vst.msk [vmem:[%s188 + $0xc8] sm:$0xff] %vm520, %v513
        %547 = vst.msk [vmem:[%s188 + $0xd0] sm:$0xff] %vm520, %v514
        %548 = vst.msk [vmem:[%s188 + $0xd8] sm:$0xff] %vm520, %v515
        %549 = vst.msk [vmem:[%s188 + $0xe0] sm:$0xff] %vm520, %v516
        %550 = vst.msk [vmem:[%s188 + $0xe8] sm:$0xff] %vm520, %v517
        %551 = vst.msk [vmem:[%s188 + $0xf0] sm:$0xff] %vm520, %v518
        %552 = vst.msk [vmem:[%s188 + $0xf8] sm:$0xff] %vm520, %v519
        %s553 = sand.u32 %s109, 1
        %s554 = scalar_lea.sflag [#allocation3], %s553
        %s555 = sand.u32 %s109, 1
        %s556 = smul.addr %s555, 256
        %s557 = scalar_lea.vmem [#allocation2], %s556
        // Predicated region
        $region33: #{up_conv_forward.3} parent=31 // pred_check
          %p558 = pneg %p119
        $region34: #{up_conv_forward.3} parent=31 // pred_check_branch
          %560 = sbr.rel (%p558) target = $region36
        $region35: #{up_conv_forward.3} parent=31 // pred_region
          %s561 = smul.u32 4, %s22
          %s563 = ssub.s32 4096, 4096
          %564 = vsyncadd %s554, %s563
          %s565 = smul.addr %s21, 32
          %s566 = sadd.s32 %s561, %s565
          %s567 = smul.addr %s566, 128
          %s568 = scalar_lea.hbm %s3, %s567
          %s569 = sshll.u32 %s557, 4
          %s570 = int_to_ptr.vmem [resolvable:$true] %s569
          %575 = dma.vmem_to_hbm [thread:$0]  %s570, 4096, %s568, %s554, 128, 128, 8
        $region36: #{up_conv_forward.3} parent=31 // pred_fallthru
          _
      $region32: #{up_conv_forward.3} parent=5 // pred_fallthru
        _
      %p576 = scmp.le.s32.totalorder 2, %s12
      // Predicated region
      $region37: #{up_conv_forward.3} parent=5 // pred_check
        %p577 = pneg %p576
      $region38: #{up_conv_forward.3} parent=5 // pred_check_branch
        %579 = sbr.rel (%p577) target = $region40
      $region39: #{up_conv_forward.3} parent=5 // pred_region
        %s580 = ssub.s32 %s12, 2
        // Predicated region
        $region41: #{up_conv_forward.3} parent=39 // pred_check
          %p581 = pneg %p125
        $region42: #{up_conv_forward.3} parent=39 // pred_check_branch
          %583 = sbr.rel (%p581) target = $region44
        $region43: #{up_conv_forward.3} parent=39 // pred_region
          %s584 = sand.u32 %s110, 1
          %s585 = scalar_lea.sflag [#allocation3], %s584
          %s586 = sand.u32 %s110, 1
          %s587 = smul.addr %s586, 256
          %s588 = scalar_lea.vmem [#allocation2], %s587
          %589 = dma.done %s585, 4096
        $region44: #{up_conv_forward.3} parent=39 // pred_fallthru
          _
      $region40: #{up_conv_forward.3} parent=5 // pred_fallthru
        _
    $region6: #{up_conv_forward.3} parent=1 // loop_footer
      %s16 = sadd.s32 1, %s12
    $region7: #{up_conv_forward.3} parent=1 // loop_footer_branch
      %11 = sbr.rel target = $region3
    $region8: #{up_conv_forward.3} parent=1 // loop_exit
      _
    %590 = vsyncpa [#allocation3], 1
    %s591 = scalar_lea.sflag [#allocation3], 1
    %592 = vsyncpa %s591, 1

// kernel: up_conv_forward.2
$region0: #{up_conv_forward.2}
  #allocation0 [shape = 'u32[]', space=smem, size = 0x4, offset = 0x4, fixed_abs, tag = 'smem constant byte address 0x4 - core index']
  #allocation1 [shape = 'u32[144,128]{1,0:T(1,128)}', space=vmem, size = 0x12000, scoped, tag = 'internal scratch']
  %s0 = inlined_call_operand.vmem [shape: bf16[2,18,18,4], index: 0, kind: input, shape index: {}]
  %s1 = inlined_call_operand.vmem [shape: bf16[2,24,16], index: 1, kind: input, shape index: {}]
  %s2 = inlined_call_operand.vmem [shape: bf16[2,16,2,16,16], index: 2, kind: output, shape index: {0}]
  %s3 = inlined_call_operand.vmem [shape: f32[2,1,1,16], index: 3, kind: output, shape index: {1}]
  %s4 = inlined_call_operand.vmem [shape: f32[2,1,1,16], index: 4, kind: output, shape index: {2}]
  %5 = xla_tuple %s2, %s3, %s4
  %s6 = sld [smem:[#allocation0]]
  $region57: #{up_conv_forward.2} parent=0
    _
  %s8 = ssub.s32 1, %s6
  %s9 = scalar_select 0, %s8, %s6
  loop: start=0, step=1, limit=4
  $region2: #{up_conv_forward.2} parent=0 // loop_pre_header
    _
  $region3: #{up_conv_forward.2} parent=0 // loop_header
    %s11 = sphi 0, %s15
    %p12 = scmp.ge.s32.totalorder %s11, 4
    %s18 = sphi 0, %s30
    %s19 = sphi 0, %s26
    %s20 = sphi 0, %s18
    %s21 = sphi 0, %s19
    %s22 = sphi 0, %s20
    %s23 = sphi 0, %s21
    %s33 = sphi 0, %s35
    %s36 = sphi 0, %s33
    %s37 = sphi 0, %s36
    %s53 = sphi 0, %s37
    %s57 = sphi 0, %s57
    %s59 = sphi 0, %s57
    %s60 = sphi 0, %s59
    %s74 = sphi 0, %s60
    %s82 = sphi 0, %s84
    %s85 = sphi 0, %s82
    %s86 = sphi 0, %s85
    %s102 = sphi 0, %s86
    %s110 = sphi 0, %s112
    %s113 = sphi 0, %s110
    %s114 = sphi 0, %s113
    %s130 = sphi 0, %s114
    %s138 = sphi 0, %s140
    %s141 = sphi 0, %s138
    %s142 = sphi 0, %s141
    %s158 = sphi 0, %s142
  $region4: #{up_conv_forward.2} parent=0 // loop_header_branch
    %14 = sbr.rel (%p12) target = $region8
  $region5: #{up_conv_forward.2} parent=0 // loop_body
    %s16 = ssub.s32 %s11, 1
    %s17 = ssub.s32 %s11, 2
    %s24 = sadd.s32 1, %s19
    %p25 = scmp.ge.s32.totalorder %s24, 1
    %s26 = scalar_select %p25, 0, %s24
    %s27 = sadd.s32 1, %s18
    %s28 = scalar_select %p25, %s27, %s18
    %p29 = scmp.ge.s32.totalorder %s28, 2
    %s30 = scalar_select %p29, 0, %s28
    %s31 = ssub.s32 %s18, %s30
    %p32 = scmp.eq.s32.totalorder %s31, 0
    %s34 = sadd.s32 %s33, 1
    %s35 = scalar_select %p32, %s33, %s34
    %p38 = pneg %p32
    %p39 = scmp.eq.s32.totalorder %s11, 1
    %p40 = por %p38, %p39
    %p41 = scmp.ne.s32.totalorder %s33, %s36
    %p42 = scmp.eq.s32.totalorder %s11, 0
    %p43 = por %p41, %p42
    %p44 = scmp.ne.s32.totalorder %s33, %s36
    %p45 = scmp.eq.s32.totalorder %s16, 1
    %p46 = por %p44, %p45
    %p47 = scmp.ne.s32.totalorder %s36, %s37
    %p48 = scmp.eq.s32.totalorder %s16, 0
    %p49 = por %p47, %p48
    %p50 = scmp.ne.s32.totalorder %s36, %s37
    %p51 = scmp.eq.s32.totalorder %s17, 1
    %p52 = por %p50, %p51
    %p54 = scmp.ne.s32.totalorder %s37, %s53
    %p55 = scmp.eq.s32.totalorder %s17, 0
    %p56 = por %p54, %p55
    %s58 = sadd.s32 %s57, 1
    %p61 = scmp.eq.s32.totalorder %s11, 1
    %p62 = scmp.ne.s32.totalorder %s57, %s59
    %p63 = scmp.eq.s32.totalorder %s11, 0
    %p64 = por %p62, %p63
    %p65 = scmp.ne.s32.totalorder %s57, %s59
    %p66 = scmp.eq.s32.totalorder %s16, 1
    %p67 = por %p65, %p66
    %p68 = scmp.ne.s32.totalorder %s59, %s60
    %p69 = scmp.eq.s32.totalorder %s16, 0
    %p70 = por %p68, %p69
    %p71 = scmp.ne.s32.totalorder %s59, %s60
    %p72 = scmp.eq.s32.totalorder %s17, 1
    %p73 = por %p71, %p72
    %p75 = scmp.ne.s32.totalorder %s60, %s74
    %p76 = scmp.eq.s32.totalorder %s17, 0
    %p77 = por %p75, %p76
    %s78 = ssub.s32 %s18, %s30
    %s79 = ssub.s32 %s19, %s26
    %s80 = sor.u32 %s78, %s79
    %p81 = scmp.eq.s32.totalorder %s80, 0
    %s83 = sadd.s32 %s82, 1
    %s84 = scalar_select %p81, %s82, %s83
    %p87 = pneg %p81
    %p88 = scmp.eq.s32.totalorder %s11, 1
    %p89 = por %p87, %p88
    %p90 = scmp.ne.s32.totalorder %s82, %s85
    %p91 = scmp.eq.s32.totalorder %s11, 0
    %p92 = por %p90, %p91
    %p93 = scmp.ne.s32.totalorder %s82, %s85
    %p94 = scmp.eq.s32.totalorder %s16, 1
    %p95 = por %p93, %p94
    %p96 = scmp.ne.s32.totalorder %s85, %s86
    %p97 = scmp.eq.s32.totalorder %s16, 0
    %p98 = por %p96, %p97
    %p99 = scmp.ne.s32.totalorder %s85, %s86
    %p100 = scmp.eq.s32.totalorder %s17, 1
    %p101 = por %p99, %p100
    %p103 = scmp.ne.s32.totalorder %s86, %s102
    %p104 = scmp.eq.s32.totalorder %s17, 0
    %p105 = por %p103, %p104
    %s106 = ssub.s32 %s18, %s30
    %s107 = ssub.s32 %s19, %s26
    %s108 = sor.u32 %s106, %s107
    %p109 = scmp.eq.s32.totalorder %s108, 0
    %s111 = sadd.s32 %s110, 1
    %s112 = scalar_select %p109, %s110, %s111
    %p115 = pneg %p109
    %p116 = scmp.eq.s32.totalorder %s11, 1
    %p117 = por %p115, %p116
    %p118 = scmp.ne.s32.totalorder %s110, %s113
    %p119 = scmp.eq.s32.totalorder %s11, 0
    %p120 = por %p118, %p119
    %p121 = scmp.ne.s32.totalorder %s110, %s113
    %p122 = scmp.eq.s32.totalorder %s16, 1
    %p123 = por %p121, %p122
    %p124 = scmp.ne.s32.totalorder %s113, %s114
    %p125 = scmp.eq.s32.totalorder %s16, 0
    %p126 = por %p124, %p125
    %p127 = scmp.ne.s32.totalorder %s113, %s114
    %p128 = scmp.eq.s32.totalorder %s17, 1
    %p129 = por %p127, %p128
    %p131 = scmp.ne.s32.totalorder %s114, %s130
    %p132 = scmp.eq.s32.totalorder %s17, 0
    %p133 = por %p131, %p132
    %s134 = ssub.s32 %s18, %s30
    %s135 = ssub.s32 %s19, %s26
    %s136 = sor.u32 %s134, %s135
    %p137 = scmp.eq.s32.totalorder %s136, 0
    %s139 = sadd.s32 %s138, 1
    %s140 = scalar_select %p137, %s138, %s139
    %p143 = pneg %p137
    %p144 = scmp.eq.s32.totalorder %s11, 1
    %p145 = por %p143, %p144
    %p146 = scmp.ne.s32.totalorder %s138, %s141
    %p147 = scmp.eq.s32.totalorder %s11, 0
    %p148 = por %p146, %p147
    %p149 = scmp.ne.s32.totalorder %s138, %s141
    %p150 = scmp.eq.s32.totalorder %s16, 1
    %p151 = por %p149, %p150
    %p152 = scmp.ne.s32.totalorder %s141, %s142
    %p153 = scmp.eq.s32.totalorder %s16, 0
    %p154 = por %p152, %p153
    %p155 = scmp.ne.s32.totalorder %s141, %s142
    %p156 = scmp.eq.s32.totalorder %s17, 1
    %p157 = por %p155, %p156
    %p159 = scmp.ne.s32.totalorder %s142, %s158
    %p160 = scmp.eq.s32.totalorder %s17, 0
    %p161 = por %p159, %p160
    %p162 = scmp.le.s32.totalorder 1, %s11
    %p163 = scmp.lt.s32.totalorder %s11, 3
    %p164 = pnand %p162, %p163
    %p165 = pneg %p164
    // Predicated region
    $region9: #{up_conv_forward.2} parent=5 // pred_check
      _
    $region10: #{up_conv_forward.2} parent=5 // pred_check_branch
      %167 = sbr.rel (%p164) target = $region12
    $region11: #{up_conv_forward.2} parent=5 // pred_region
      %s168 = ssub.s32 %s11, 1
      // Predicated region
      $region13: #{up_conv_forward.2} parent=11 // pred_check
        %p169 = pneg %p70
      $region14: #{up_conv_forward.2} parent=11 // pred_check_branch
        %171 = sbr.rel (%p169) target = $region16
      $region15: #{up_conv_forward.2} parent=11 // pred_region
        _
      $region16: #{up_conv_forward.2} parent=11 // pred_fallthru
        _
    $region12: #{up_conv_forward.2} parent=5 // pred_fallthru
      _
    %p172 = scmp.lt.s32.totalorder %s11, 2
    // Predicated region
    $region17: #{up_conv_forward.2} parent=5 // pred_check
      %p173 = pneg %p172
    $region18: #{up_conv_forward.2} parent=5 // pred_check_branch
      %175 = sbr.rel (%p173) target = $region20
    $region19: #{up_conv_forward.2} parent=5 // pred_region
      // Predicated region
      $region21: #{up_conv_forward.2} parent=19 // pred_check
        %p176 = pneg %p43
      $region22: #{up_conv_forward.2} parent=19 // pred_check_branch
        %178 = sbr.rel (%p176) target = $region24
      $region23: #{up_conv_forward.2} parent=19 // pred_region
        %p179 = scmp.lt.s32.totalorder %s18, 1
        %s180 = scalar_select %p179, %s18, 1
        %s181 = smul.addr %s180, 54
        %s182 = smul.addr %s181, 4
        %s183 = scalar_lea.vmem %s0, %s182
      $region24: #{up_conv_forward.2} parent=19 // pred_fallthru
        _
    $region20: #{up_conv_forward.2} parent=5 // pred_fallthru
      _
    %p184 = scmp.le.s32.totalorder 1, %s11
    %p185 = scmp.lt.s32.totalorder %s11, 3
    %p186 = pnand %p184, %p185
    %p187 = pneg %p186
    // Predicated region
    $region25: #{up_conv_forward.2} parent=5 // pred_check
      _
    $region26: #{up_conv_forward.2} parent=5 // pred_check_branch
      %189 = sbr.rel (%p186) target = $region28
    $region27: #{up_conv_forward.2} parent=5 // pred_region
      %s190 = ssub.s32 %s11, 1
      %p191 = scmp.lt.s32.totalorder %s20, 1
      %s192 = scalar_select %p191, %s20, 1
      %s193 = smul.addr %s192, 54
      %s194 = smul.addr %s193, 4
      %s195 = scalar_lea.vmem %s0, %s194
      %p196 = pneg %p49
      %p197 = pneg %p46
      %p198 = pneg %p70
      %p199 = pneg %p67
      %p200 = pneg %p98
      %p201 = pneg %p95
      %s202 = smul.u32 16, %s21
      %p203 = scmp.lt.s32.totalorder %s20, 1
      %s204 = scalar_select %p203, %s20, 1
      %p205 = scmp.lt.s32.totalorder %s202, 15
      %s206 = scalar_select %p205, %s202, 15
      %s207 = smul.addr %s206, 4
      %s208 = smul.addr %s204, 64
      %s209 = sadd.s32 %s207, %s208
      %s210 = smul.addr %s209, 4
      %s211 = scalar_lea.vmem %s2, %s210
      %p212 = pneg %p126
      %p213 = pneg %p123
      %p214 = scmp.lt.s32.totalorder %s20, 1
      %s215 = scalar_select %p214, %s20, 1
      %p216 = scmp.lt.s32.totalorder %s21, 0
      %s217 = scalar_select %p216, %s21, 0
      %s218 = sadd.s32 %s217, %s215
      %s219 = scalar_lea.vmem %s3, %s218
      %p220 = pneg %p154
      %p221 = pneg %p151
      %p222 = scmp.lt.s32.totalorder %s20, 1
      %s223 = scalar_select %p222, %s20, 1
      %p224 = scmp.lt.s32.totalorder %s21, 0
      %s225 = scalar_select %p224, %s21, 0
      %s226 = sadd.s32 %s225, %s223
      %s227 = scalar_lea.vmem %s4, %s226
      %p228 = scmp.lt.s32.totalorder %s20, 1
      %s229 = scalar_select %p228, %s20, 1
      %s230 = smul.addr %s229, 54
      %s231 = smul.addr %s230, 4
      %s232 = scalar_lea.vmem %s0, %s231
      %s233 = smul.u32 16, %s21
      %p234 = scmp.lt.s32.totalorder %s20, 1
      %s235 = scalar_select %p234, %s20, 1
      %p236 = scmp.lt.s32.totalorder %s233, 15
      %s237 = scalar_select %p236, %s233, 15
      %s238 = smul.addr %s237, 4
      %s239 = smul.addr %s235, 64
      %s240 = sadd.s32 %s238, %s239
      %s241 = smul.addr %s240, 4
      %s242 = scalar_lea.vmem %s2, %s241
      %s243 = smul.u32 16, %s21
      %p244 = scmp.lt.s32.totalorder %s20, 1
      %s245 = scalar_select %p244, %s20, 1
      %p246 = scmp.lt.s32.totalorder %s21, 0
      %s247 = scalar_select %p246, %s21, 0
      %s248 = sadd.s32 %s247, %s245
      %s249 = scalar_lea.vmem %s3, %s248
      %p250 = scmp.lt.s32.totalorder %s20, 1
      %s251 = scalar_select %p250, %s20, 1
      %p252 = scmp.lt.s32.totalorder %s21, 0
      %s253 = scalar_select %p252, %s21, 0
      %s254 = sadd.s32 %s253, %s251
      %s255 = scalar_lea.vmem %s4, %s254
      %s257 = smul.u32 %s21, 16
      %s258 = smul.u32 %s257, 3
      %s259 = smul.addr %s258, 4
      %s260 = scalar_lea.vmem %s232, %s259
      %v261 = vld [vmem:[%s260] sm:$0xf]
      %v262 = vld [vmem:[%s260 + $0x4] sm:$0xf]
      %v263 = vld [vmem:[%s260 + $0x8] sm:$0x1]
      %v264 = vld [vmem:[%s260 + $0xc] sm:$0xf]
      %v265 = vld [vmem:[%s260 + $0x10] sm:$0xf]
      %v266 = vld [vmem:[%s260 + $0x14] sm:$0x1]
      %v267 = vld [vmem:[%s260 + $0x18] sm:$0xf]
      %v268 = vld [vmem:[%s260 + $0x1c] sm:$0xf]
      %v269 = vld [vmem:[%s260 + $0x20] sm:$0x1]
      %v270 = vld [vmem:[%s260 + $0x24] sm:$0xf]
      %v271 = vld [vmem:[%s260 + $0x28] sm:$0xf]
      %v272 = vld [vmem:[%s260 + $0x2c] sm:$0x1]
      %v273 = vld [vmem:[%s260 + $0x30] sm:$0xf]
      %v274 = vld [vmem:[%s260 + $0x34] sm:$0xf]
      %v275 = vld [vmem:[%s260 + $0x38] sm:$0x1]
      %v276 = vld [vmem:[%s260 + $0x3c] sm:$0xf]
      %v277 = vld [vmem:[%s260 + $0x40] sm:$0xf]
      %v278 = vld [vmem:[%s260 + $0x44] sm:$0x1]
      %v279 = vld [vmem:[%s260 + $0x48] sm:$0xf]
      %v280 = vld [vmem:[%s260 + $0x4c] sm:$0xf]
      %v281 = vld [vmem:[%s260 + $0x50] sm:$0x1]
      %v282 = vld [vmem:[%s260 + $0x54] sm:$0xf]
      %v283 = vld [vmem:[%s260 + $0x58] sm:$0xf]
      %v284 = vld [vmem:[%s260 + $0x5c] sm:$0x1]
      %v285 = vld [vmem:[%s260 + $0x60] sm:$0xf]
      %v286 = vld [vmem:[%s260 + $0x64] sm:$0xf]
      %v287 = vld [vmem:[%s260 + $0x68] sm:$0x1]
      %v288 = vld [vmem:[%s260 + $0x6c] sm:$0xf]
      %v289 = vld [vmem:[%s260 + $0x70] sm:$0xf]
      %v290 = vld [vmem:[%s260 + $0x74] sm:$0x1]
      %v291 = vld [vmem:[%s260 + $0x78] sm:$0xf]
      %v292 = vld [vmem:[%s260 + $0x7c] sm:$0xf]
      %v293 = vld [vmem:[%s260 + $0x80] sm:$0x1]
      %v294 = vld [vmem:[%s260 + $0x84] sm:$0xf]
      %v295 = vld [vmem:[%s260 + $0x88] sm:$0xf]
      %v296 = vld [vmem:[%s260 + $0x8c] sm:$0x1]
      %v297 = vld [vmem:[%s260 + $0x90] sm:$0xf]
      %v298 = vld [vmem:[%s260 + $0x94] sm:$0xf]
      %v299 = vld [vmem:[%s260 + $0x98] sm:$0x1]
      %v300 = vld [vmem:[%s260 + $0x9c] sm:$0xf]
      %v301 = vld [vmem:[%s260 + $0xa0] sm:$0xf]
      %v302 = vld [vmem:[%s260 + $0xa4] sm:$0x1]
      %v303 = vld [vmem:[%s260 + $0xa8] sm:$0xf]
      %v304 = vld [vmem:[%s260 + $0xac] sm:$0xf]
      %v305 = vld [vmem:[%s260 + $0xb0] sm:$0x1]
      %v306 = vld [vmem:[%s260 + $0xb4] sm:$0xf]
      %v307 = vld [vmem:[%s260 + $0xb8] sm:$0xf]
      %v308 = vld [vmem:[%s260 + $0xbc] sm:$0x1]
      %s309 = sadd.s32 %s257, 1
      %s310 = smul.u32 %s309, 3
      %s311 = smul.addr %s310, 4
      %s312 = scalar_lea.vmem %s232, %s311
      %v313 = vld [vmem:[%s312] sm:$0xf]
      %v314 = vld [vmem:[%s312 + $0x4] sm:$0xf]
      %v315 = vld [vmem:[%s312 + $0x8] sm:$0x1]
      %v316 = vld [vmem:[%s312 + $0xc] sm:$0xf]
      %v317 = vld [vmem:[%s312 + $0x10] sm:$0xf]
      %v318 = vld [vmem:[%s312 + $0x14] sm:$0x1]
      %v319 = vld [vmem:[%s312 + $0x18] sm:$0xf]
      %v320 = vld [vmem:[%s312 + $0x1c] sm:$0xf]
      %v321 = vld [vmem:[%s312 + $0x20] sm:$0x1]
      %v322 = vld [vmem:[%s312 + $0x24] sm:$0xf]
      %v323 = vld [vmem:[%s312 + $0x28] sm:$0xf]
      %v324 = vld [vmem:[%s312 + $0x2c] sm:$0x1]
      %v325 = vld [vmem:[%s312 + $0x30] sm:$0xf]
      %v326 = vld [vmem:[%s312 + $0x34] sm:$0xf]
      %v327 = vld [vmem:[%s312 + $0x38] sm:$0x1]
      %v328 = vld [vmem:[%s312 + $0x3c] sm:$0xf]
      %v329 = vld [vmem:[%s312 + $0x40] sm:$0xf]
      %v330 = vld [vmem:[%s312 + $0x44] sm:$0x1]
      %v331 = vld [vmem:[%s312 + $0x48] sm:$0xf]
      %v332 = vld [vmem:[%s312 + $0x4c] sm:$0xf]
      %v333 = vld [vmem:[%s312 + $0x50] sm:$0x1]
      %v334 = vld [vmem:[%s312 + $0x54] sm:$0xf]
      %v335 = vld [vmem:[%s312 + $0x58] sm:$0xf]
      %v336 = vld [vmem:[%s312 + $0x5c] sm:$0x1]
      %v337 = vld [vmem:[%s312 + $0x60] sm:$0xf]
      %v338 = vld [vmem:[%s312 + $0x64] sm:$0xf]
      %v339 = vld [vmem:[%s312 + $0x68] sm:$0x1]
      %v340 = vld [vmem:[%s312 + $0x6c] sm:$0xf]
      %v341 = vld [vmem:[%s312 + $0x70] sm:$0xf]
      %v342 = vld [vmem:[%s312 + $0x74] sm:$0x1]
      %v343 = vld [vmem:[%s312 + $0x78] sm:$0xf]
      %v344 = vld [vmem:[%s312 + $0x7c] sm:$0xf]
      %v345 = vld [vmem:[%s312 + $0x80] sm:$0x1]
      %v346 = vld [vmem:[%s312 + $0x84] sm:$0xf]
      %v347 = vld [vmem:[%s312 + $0x88] sm:$0xf]
      %v348 = vld [vmem:[%s312 + $0x8c] sm:$0x1]
      %v349 = vld [vmem:[%s312 + $0x90] sm:$0xf]
      %v350 = vld [vmem:[%s312 + $0x94] sm:$0xf]
      %v351 = vld [vmem:[%s312 + $0x98] sm:$0x1]
      %v352 = vld [vmem:[%s312 + $0x9c] sm:$0xf]
      %v353 = vld [vmem:[%s312 + $0xa0] sm:$0xf]
      %v354 = vld [vmem:[%s312 + $0xa4] sm:$0x1]
      %v355 = vld [vmem:[%s312 + $0xa8] sm:$0xf]
      %v356 = vld [vmem:[%s312 + $0xac] sm:$0xf]
      %v357 = vld [vmem:[%s312 + $0xb0] sm:$0x1]
      %v358 = vld [vmem:[%s312 + $0xb4] sm:$0xf]
      %v359 = vld [vmem:[%s312 + $0xb8] sm:$0xf]
      %v360 = vld [vmem:[%s312 + $0xbc] sm:$0x1]
      %s361 = sadd.s32 %s257, 2
      %s362 = smul.u32 %s361, 3
      %s363 = smul.addr %s362, 4
      %s364 = scalar_lea.vmem %s232, %s363
      %v365 = vld [vmem:[%s364] sm:$0xf]
      %v366 = vld [vmem:[%s364 + $0x4] sm:$0xf]
      %v367 = vld [vmem:[%s364 + $0x8] sm:$0x1]
      %v368 = vld [vmem:[%s364 + $0xc] sm:$0xf]
      %v369 = vld [vmem:[%s364 + $0x10] sm:$0xf]
      %v370 = vld [vmem:[%s364 + $0x14] sm:$0x1]
      %v371 = vld [vmem:[%s364 + $0x18] sm:$0xf]
      %v372 = vld [vmem:[%s364 + $0x1c] sm:$0xf]
      %v373 = vld [vmem:[%s364 + $0x20] sm:$0x1]
      %v374 = vld [vmem:[%s364 + $0x24] sm:$0xf]
      %v375 = vld [vmem:[%s364 + $0x28] sm:$0xf]
      %v376 = vld [vmem:[%s364 + $0x2c] sm:$0x1]
      %v377 = vld [vmem:[%s364 + $0x30] sm:$0xf]
      %v378 = vld [vmem:[%s364 + $0x34] sm:$0xf]
      %v379 = vld [vmem:[%s364 + $0x38] sm:$0x1]
      %v380 = vld [vmem:[%s364 + $0x3c] sm:$0xf]
      %v381 = vld [vmem:[%s364 + $0x40] sm:$0xf]
      %v382 = vld [vmem:[%s364 + $0x44] sm:$0x1]
      %v383 = vld [vmem:[%s364 + $0x48] sm:$0xf]
      %v384 = vld [vmem:[%s364 + $0x4c] sm:$0xf]
      %v385 = vld [vmem:[%s364 + $0x50] sm:$0x1]
      %v386 = vld [vmem:[%s364 + $0x54] sm:$0xf]
      %v387 = vld [vmem:[%s364 + $0x58] sm:$0xf]
      %v388 = vld [vmem:[%s364 + $0x5c] sm:$0x1]
      %v389 = vld [vmem:[%s364 + $0x60] sm:$0xf]
      %v390 = vld [vmem:[%s364 + $0x64] sm:$0xf]
      %v391 = vld [vmem:[%s364 + $0x68] sm:$0x1]
      %v392 = vld [vmem:[%s364 + $0x6c] sm:$0xf]
      %v393 = vld [vmem:[%s364 + $0x70] sm:$0xf]
      %v394 = vld [vmem:[%s364 + $0x74] sm:$0x1]
      %v395 = vld [vmem:[%s364 + $0x78] sm:$0xf]
      %v396 = vld [vmem:[%s364 + $0x7c] sm:$0xf]
      %v397 = vld [vmem:[%s364 + $0x80] sm:$0x1]
      %v398 = vld [vmem:[%s364 + $0x84] sm:$0xf]
      %v399 = vld [vmem:[%s364 + $0x88] sm:$0xf]
      %v400 = vld [vmem:[%s364 + $0x8c] sm:$0x1]
      %v401 = vld [vmem:[%s364 + $0x90] sm:$0xf]
      %v402 = vld [vmem:[%s364 + $0x94] sm:$0xf]
      %v403 = vld [vmem:[%s364 + $0x98] sm:$0x1]
      %v404 = vld [vmem:[%s364 + $0x9c] sm:$0xf]
      %v405 = vld [vmem:[%s364 + $0xa0] sm:$0xf]
      %v406 = vld [vmem:[%s364 + $0xa4] sm:$0x1]
      %v407 = vld [vmem:[%s364 + $0xa8] sm:$0xf]
      %v408 = vld [vmem:[%s364 + $0xac] sm:$0xf]
      %v409 = vld [vmem:[%s364 + $0xb0] sm:$0x1]
      %v410 = vld [vmem:[%s364 + $0xb4] sm:$0xf]
      %v411 = vld [vmem:[%s364 + $0xb8] sm:$0xf]
      %v412 = vld [vmem:[%s364 + $0xbc] sm:$0x1]
      %v445 = vunpack.c.l.b16 %v261
      %v446 = vunpack.c.l.b16 %v262
      %v447 = vunpack.c.l.b16 %v264
      %v448 = vunpack.c.l.b16 %v265
      %v449 = vunpack.c.l.b16 %v267
      %v450 = vunpack.c.l.b16 %v268
      %v451 = vunpack.c.l.b16 %v270
      %v452 = vunpack.c.l.b16 %v271
      %v453 = vunpack.c.l.b16 %v273
      %v454 = vunpack.c.l.b16 %v274
      %v455 = vunpack.c.l.b16 %v276
      %v456 = vunpack.c.l.b16 %v277
      %v457 = vunpack.c.l.b16 %v279
      %v458 = vunpack.c.l.b16 %v280
      %v459 = vunpack.c.l.b16 %v282
      %v460 = vunpack.c.l.b16 %v283
      %v461 = vunpack.c.l.b16 %v285
      %v462 = vunpack.c.l.b16 %v286
      %v463 = vunpack.c.l.b16 %v288
      %v464 = vunpack.c.l.b16 %v289
      %v465 = vunpack.c.l.b16 %v291
      %v466 = vunpack.c.l.b16 %v292
      %v467 = vunpack.c.l.b16 %v294
      %v468 = vunpack.c.l.b16 %v295
      %v469 = vunpack.c.l.b16 %v297
      %v470 = vunpack.c.l.b16 %v298
      %v471 = vunpack.c.l.b16 %v300
      %v472 = vunpack.c.l.b16 %v301
      %v473 = vunpack.c.l.b16 %v303
      %v474 = vunpack.c.l.b16 %v304
      %v475 = vunpack.c.l.b16 %v306
      %v476 = vunpack.c.l.b16 %v307
      %v477 = vpack.c.b16 %v446, %v445
      %v478 = vpack.c.b16 %v448, %v447
      %v479 = vpack.c.b16 %v450, %v449
      %v480 = vpack.c.b16 %v452, %v451
      %v481 = vpack.c.b16 %v454, %v453
      %v482 = vpack.c.b16 %v456, %v455
      %v483 = vpack.c.b16 %v458, %v457
      %v484 = vpack.c.b16 %v460, %v459
      %v485 = vpack.c.b16 %v462, %v461
      %v486 = vpack.c.b16 %v464, %v463
      %v487 = vpack.c.b16 %v466, %v465
      %v488 = vpack.c.b16 %v468, %v467
      %v489 = vpack.c.b16 %v470, %v469
      %v490 = vpack.c.b16 %v472, %v471
      %v491 = vpack.c.b16 %v474, %v473
      %v492 = vpack.c.b16 %v476, %v475
      %v509 = vunpack.c.l.b16 %v263
      %v510 = vunpack.c.l.b16 %v266
      %v511 = vunpack.c.l.b16 %v269
      %v512 = vunpack.c.l.b16 %v272
      %v513 = vunpack.c.l.b16 %v275
      %v514 = vunpack.c.l.b16 %v278
      %v515 = vunpack.c.l.b16 %v281
      %v516 = vunpack.c.l.b16 %v284
      %v517 = vunpack.c.l.b16 %v287
      %v518 = vunpack.c.l.b16 %v290
      %v519 = vunpack.c.l.b16 %v293
      %v520 = vunpack.c.l.b16 %v296
      %v521 = vunpack.c.l.b16 %v299
      %v522 = vunpack.c.l.b16 %v302
      %v523 = vunpack.c.l.b16 %v305
      %v524 = vunpack.c.l.b16 %v308
      %v525 = vpack.c.b16 %v509, %v509
      %v526 = vpack.c.b16 %v510, %v510
      %v527 = vpack.c.b16 %v511, %v511
      %v528 = vpack.c.b16 %v512, %v512
      %v529 = vpack.c.b16 %v513, %v513
      %v530 = vpack.c.b16 %v514, %v514
      %v531 = vpack.c.b16 %v515, %v515
      %v532 = vpack.c.b16 %v516, %v516
      %v533 = vpack.c.b16 %v517, %v517
      %v534 = vpack.c.b16 %v518, %v518
      %v535 = vpack.c.b16 %v519, %v519
      %v536 = vpack.c.b16 %v520, %v520
      %v537 = vpack.c.b16 %v521, %v521
      %v538 = vpack.c.b16 %v522, %v522
      %v539 = vpack.c.b16 %v523, %v523
      %v540 = vpack.c.b16 %v524, %v524
      %vm541 = vsmask.f32 7424
      %v543 = vshrl.u32 %v477, 16
      %v545 = vshll.u32 %v477, 16
      %v547 = vrot.slane %v545, 1
      %v548 = vor.u32 %v543, %v547
      %v550 = vshll.u32 %v525, 16
      %v552 = vrot.slane %v550, 1
      %v553 = vsel %vm541, %v548, %v552
      %v555 = vshrl.u32 %v478, 16
      %v557 = vshll.u32 %v478, 16
      %v559 = vrot.slane %v557, 1
      %v560 = vor.u32 %v555, %v559
      %v562 = vshll.u32 %v526, 16
      %v564 = vrot.slane %v562, 1
      %v565 = vsel %vm541, %v560, %v564
      %v567 = vshrl.u32 %v479, 16
      %v569 = vshll.u32 %v479, 16
      %v571 = vrot.slane %v569, 1
      %v572 = vor.u32 %v567, %v571
      %v574 = vshll.u32 %v527, 16
      %v576 = vrot.slane %v574, 1
      %v577 = vsel %vm541, %v572, %v576
      %v579 = vshrl.u32 %v480, 16
      %v581 = vshll.u32 %v480, 16
      %v583 = vrot.slane %v581, 1
      %v584 = vor.u32 %v579, %v583
      %v586 = vshll.u32 %v528, 16
      %v588 = vrot.slane %v586, 1
      %v589 = vsel %vm541, %v584, %v588
      %v591 = vshrl.u32 %v481, 16
      %v593 = vshll.u32 %v481, 16
      %v595 = vrot.slane %v593, 1
      %v596 = vor.u32 %v591, %v595
      %v598 = vshll.u32 %v529, 16
      %v600 = vrot.slane %v598, 1
      %v601 = vsel %vm541, %v596, %v600
      %v603 = vshrl.u32 %v482, 16
      %v605 = vshll.u32 %v482, 16
      %v607 = vrot.slane %v605, 1
      %v608 = vor.u32 %v603, %v607
      %v610 = vshll.u32 %v530, 16
      %v612 = vrot.slane %v610, 1
      %v613 = vsel %vm541, %v608, %v612
      %v615 = vshrl.u32 %v483, 16
      %v617 = vshll.u32 %v483, 16
      %v619 = vrot.slane %v617, 1
      %v620 = vor.u32 %v615, %v619
      %v622 = vshll.u32 %v531, 16
      %v624 = vrot.slane %v622, 1
      %v625 = vsel %vm541, %v620, %v624
      %v627 = vshrl.u32 %v484, 16
      %v629 = vshll.u32 %v484, 16
      %v631 = vrot.slane %v629, 1
      %v632 = vor.u32 %v627, %v631
      %v634 = vshll.u32 %v532, 16
      %v636 = vrot.slane %v634, 1
      %v637 = vsel %vm541, %v632, %v636
      %v639 = vshrl.u32 %v485, 16
      %v641 = vshll.u32 %v485, 16
      %v643 = vrot.slane %v641, 1
      %v644 = vor.u32 %v639, %v643
      %v646 = vshll.u32 %v533, 16
      %v648 = vrot.slane %v646, 1
      %v649 = vsel %vm541, %v644, %v648
      %v651 = vshrl.u32 %v486, 16
      %v653 = vshll.u32 %v486, 16
      %v655 = vrot.slane %v653, 1
      %v656 = vor.u32 %v651, %v655
      %v658 = vshll.u32 %v534, 16
      %v660 = vrot.slane %v658, 1
      %v661 = vsel %vm541, %v656, %v660
      %v663 = vshrl.u32 %v487, 16
      %v665 = vshll.u32 %v487, 16
      %v667 = vrot.slane %v665, 1
      %v668 = vor.u32 %v663, %v667
      %v670 = vshll.u32 %v535, 16
      %v672 = vrot.slane %v670, 1
      %v673 = vsel %vm541, %v668, %v672
      %v675 = vshrl.u32 %v488, 16
      %v677 = vshll.u32 %v488, 16
      %v679 = vrot.slane %v677, 1
      %v680 = vor.u32 %v675, %v679
      %v682 = vshll.u32 %v536, 16
      %v684 = vrot.slane %v682, 1
      %v685 = vsel %vm541, %v680, %v684
      %v687 = vshrl.u32 %v489, 16
      %v689 = vshll.u32 %v489, 16
      %v691 = vrot.slane %v689, 1
      %v692 = vor.u32 %v687, %v691
      %v694 = vshll.u32 %v537, 16
      %v696 = vrot.slane %v694, 1
      %v697 = vsel %vm541, %v692, %v696
      %v699 = vshrl.u32 %v490, 16
      %v701 = vshll.u32 %v490, 16
      %v703 = vrot.slane %v701, 1
      %v704 = vor.u32 %v699, %v703
      %v706 = vshll.u32 %v538, 16
      %v708 = vrot.slane %v706, 1
      %v709 = vsel %vm541, %v704, %v708
      %v711 = vshrl.u32 %v491, 16
      %v713 = vshll.u32 %v491, 16
      %v715 = vrot.slane %v713, 1
      %v716 = vor.u32 %v711, %v715
      %v718 = vshll.u32 %v539, 16
      %v720 = vrot.slane %v718, 1
      %v721 = vsel %vm541, %v716, %v720
      %v723 = vshrl.u32 %v492, 16
      %v725 = vshll.u32 %v492, 16
      %v727 = vrot.slane %v725, 1
      %v728 = vor.u32 %v723, %v727
      %v730 = vshll.u32 %v540, 16
      %v732 = vrot.slane %v730, 1
      %v733 = vsel %vm541, %v728, %v732
      %734 = vrot.lane.b32.xlu0 %v553, 4
      %v735 = vpop.permute.xlu0 %734
      %736 = vrot.lane.b32.xlu0 %v565, 4
      %v737 = vpop.permute.xlu0 %736
      %738 = vrot.lane.b32.xlu0 %v577, 4
      %v739 = vpop.permute.xlu0 %738
      %740 = vrot.lane.b32.xlu0 %v589, 4
      %v741 = vpop.permute.xlu0 %740
      %742 = vrot.lane.b32.xlu0 %v601, 4
      %v743 = vpop.permute.xlu0 %742
      %744 = vrot.lane.b32.xlu0 %v613, 4
      %v745 = vpop.permute.xlu0 %744
      %746 = vrot.lane.b32.xlu0 %v625, 4
      %v747 = vpop.permute.xlu0 %746
      %748 = vrot.lane.b32.xlu0 %v637, 4
      %v749 = vpop.permute.xlu0 %748
      %750 = vrot.lane.b32.xlu0 %v649, 4
      %v751 = vpop.permute.xlu0 %750
      %752 = vrot.lane.b32.xlu0 %v661, 4
      %v753 = vpop.permute.xlu0 %752
      %754 = vrot.lane.b32.xlu0 %v673, 4
      %v755 = vpop.permute.xlu0 %754
      %756 = vrot.lane.b32.xlu0 %v685, 4
      %v757 = vpop.permute.xlu0 %756
      %758 = vrot.lane.b32.xlu0 %v697, 4
      %v759 = vpop.permute.xlu0 %758
      %760 = vrot.lane.b32.xlu0 %v709, 4
      %v761 = vpop.permute.xlu0 %760
      %762 = vrot.lane.b32.xlu0 %v721, 4
      %v763 = vpop.permute.xlu0 %762
      %764 = vrot.lane.b32.xlu0 %v733, 4
      %v765 = vpop.permute.xlu0 %764
      %vm766 = vcmask 1046528
      %v767 = vrot.slane %v477, 1
      %v768 = vrot.slane %v525, 1
      %v769 = vsel %vm766, %v767, %v768
      %v770 = vrot.slane %v478, 1
      %v771 = vrot.slane %v526, 1
      %v772 = vsel %vm766, %v770, %v771
      %v773 = vrot.slane %v479, 1
      %v774 = vrot.slane %v527, 1
      %v775 = vsel %vm766, %v773, %v774
      %v776 = vrot.slane %v480, 1
      %v777 = vrot.slane %v528, 1
      %v778 = vsel %vm766, %v776, %v777
      %v779 = vrot.slane %v481, 1
      %v780 = vrot.slane %v529, 1
      %v781 = vsel %vm766, %v779, %v780
      %v782 = vrot.slane %v482, 1
      %v783 = vrot.slane %v530, 1
      %v784 = vsel %vm766, %v782, %v783
      %v785 = vrot.slane %v483, 1
      %v786 = vrot.slane %v531, 1
      %v787 = vsel %vm766, %v785, %v786
      %v788 = vrot.slane %v484, 1
      %v789 = vrot.slane %v532, 1
      %v790 = vsel %vm766, %v788, %v789
      %v791 = vrot.slane %v485, 1
      %v792 = vrot.slane %v533, 1
      %v793 = vsel %vm766, %v791, %v792
      %v794 = vrot.slane %v486, 1
      %v795 = vrot.slane %v534, 1
      %v796 = vsel %vm766, %v794, %v795
      %v797 = vrot.slane %v487, 1
      %v798 = vrot.slane %v535, 1
      %v799 = vsel %vm766, %v797, %v798
      %v800 = vrot.slane %v488, 1
      %v801 = vrot.slane %v536, 1
      %v802 = vsel %vm766, %v800, %v801
      %v803 = vrot.slane %v489, 1
      %v804 = vrot.slane %v537, 1
      %v805 = vsel %vm766, %v803, %v804
      %v806 = vrot.slane %v490, 1
      %v807 = vrot.slane %v538, 1
      %v808 = vsel %vm766, %v806, %v807
      %v809 = vrot.slane %v491, 1
      %v810 = vrot.slane %v539, 1
      %v811 = vsel %vm766, %v809, %v810
      %v812 = vrot.slane %v492, 1
      %v813 = vrot.slane %v540, 1
      %v814 = vsel %vm766, %v812, %v813
      %815 = vrot.lane.b32.xlu0 %v769, 8
      %v816 = vpop.permute.xlu0 %815
      %817 = vrot.lane.b32.xlu0 %v772, 8
      %v818 = vpop.permute.xlu0 %817
      %819 = vrot.lane.b32.xlu0 %v775, 8
      %v820 = vpop.permute.xlu0 %819
      %821 = vrot.lane.b32.xlu0 %v778, 8
      %v822 = vpop.permute.xlu0 %821
      %823 = vrot.lane.b32.xlu0 %v781, 8
      %v824 = vpop.permute.xlu0 %823
      %825 = vrot.lane.b32.xlu0 %v784, 8
      %v826 = vpop.permute.xlu0 %825
      %827 = vrot.lane.b32.xlu0 %v787, 8
      %v828 = vpop.permute.xlu0 %827
      %829 = vrot.lane.b32.xlu0 %v790, 8
      %v830 = vpop.permute.xlu0 %829
      %831 = vrot.lane.b32.xlu0 %v793, 8
      %v832 = vpop.permute.xlu0 %831
      %833 = vrot.lane.b32.xlu0 %v796, 8
      %v834 = vpop.permute.xlu0 %833
      %835 = vrot.lane.b32.xlu0 %v799, 8
      %v836 = vpop.permute.xlu0 %835
      %837 = vrot.lane.b32.xlu0 %v802, 8
      %v838 = vpop.permute.xlu0 %837
      %839 = vrot.lane.b32.xlu0 %v805, 8
      %v840 = vpop.permute.xlu0 %839
      %841 = vrot.lane.b32.xlu0 %v808, 8
      %v842 = vpop.permute.xlu0 %841
      %843 = vrot.lane.b32.xlu0 %v811, 8
      %v844 = vpop.permute.xlu0 %843
      %845 = vrot.lane.b32.xlu0 %v814, 8
      %v846 = vpop.permute.xlu0 %845
      %v879 = vunpack.c.l.b16 %v313
      %v880 = vunpack.c.l.b16 %v314
      %v881 = vunpack.c.l.b16 %v316
      %v882 = vunpack.c.l.b16 %v317
      %v883 = vunpack.c.l.b16 %v319
      %v884 = vunpack.c.l.b16 %v320
      %v885 = vunpack.c.l.b16 %v322
      %v886 = vunpack.c.l.b16 %v323
      %v887 = vunpack.c.l.b16 %v325
      %v888 = vunpack.c.l.b16 %v326
      %v889 = vunpack.c.l.b16 %v328
      %v890 = vunpack.c.l.b16 %v329
      %v891 = vunpack.c.l.b16 %v331
      %v892 = vunpack.c.l.b16 %v332
      %v893 = vunpack.c.l.b16 %v334
      %v894 = vunpack.c.l.b16 %v335
      %v895 = vunpack.c.l.b16 %v337
      %v896 = vunpack.c.l.b16 %v338
      %v897 = vunpack.c.l.b16 %v340
      %v898 = vunpack.c.l.b16 %v341
      %v899 = vunpack.c.l.b16 %v343
      %v900 = vunpack.c.l.b16 %v344
      %v901 = vunpack.c.l.b16 %v346
      %v902 = vunpack.c.l.b16 %v347
      %v903 = vunpack.c.l.b16 %v349
      %v904 = vunpack.c.l.b16 %v350
      %v905 = vunpack.c.l.b16 %v352
      %v906 = vunpack.c.l.b16 %v353
      %v907 = vunpack.c.l.b16 %v355
      %v908 = vunpack.c.l.b16 %v356
      %v909 = vunpack.c.l.b16 %v358
      %v910 = vunpack.c.l.b16 %v359
      %v911 = vpack.c.b16 %v880, %v879
      %v912 = vpack.c.b16 %v882, %v881
      %v913 = vpack.c.b16 %v884, %v883
      %v914 = vpack.c.b16 %v886, %v885
      %v915 = vpack.c.b16 %v888, %v887
      %v916 = vpack.c.b16 %v890, %v889
      %v917 = vpack.c.b16 %v892, %v891
      %v918 = vpack.c.b16 %v894, %v893
      %v919 = vpack.c.b16 %v896, %v895
      %v920 = vpack.c.b16 %v898, %v897
      %v921 = vpack.c.b16 %v900, %v899
      %v922 = vpack.c.b16 %v902, %v901
      %v923 = vpack.c.b16 %v904, %v903
      %v924 = vpack.c.b16 %v906, %v905
      %v925 = vpack.c.b16 %v908, %v907
      %v926 = vpack.c.b16 %v910, %v909
      %927 = vrot.lane.b32.xlu0 %v911, 12
      %v928 = vpop.permute.xlu0 %927
      %929 = vrot.lane.b32.xlu0 %v912, 12
      %v930 = vpop.permute.xlu0 %929
      %931 = vrot.lane.b32.xlu0 %v913, 12
      %v932 = vpop.permute.xlu0 %931
      %933 = vrot.lane.b32.xlu0 %v914, 12
      %v934 = vpop.permute.xlu0 %933
      %935 = vrot.lane.b32.xlu0 %v915, 12
      %v936 = vpop.permute.xlu0 %935
      %937 = vrot.lane.b32.xlu0 %v916, 12
      %v938 = vpop.permute.xlu0 %937
      %939 = vrot.lane.b32.xlu0 %v917, 12
      %v940 = vpop.permute.xlu0 %939
      %941 = vrot.lane.b32.xlu0 %v918, 12
      %v942 = vpop.permute.xlu0 %941
      %943 = vrot.lane.b32.xlu0 %v919, 12
      %v944 = vpop.permute.xlu0 %943
      %945 = vrot.lane.b32.xlu0 %v920, 12
      %v946 = vpop.permute.xlu0 %945
      %947 = vrot.lane.b32.xlu0 %v921, 12
      %v948 = vpop.permute.xlu0 %947
      %949 = vrot.lane.b32.xlu0 %v922, 12
      %v950 = vpop.permute.xlu0 %949
      %951 = vrot.lane.b32.xlu0 %v923, 12
      %v952 = vpop.permute.xlu0 %951
      %953 = vrot.lane.b32.xlu0 %v924, 12
      %v954 = vpop.permute.xlu0 %953
      %955 = vrot.lane.b32.xlu0 %v925, 12
      %v956 = vpop.permute.xlu0 %955
      %957 = vrot.lane.b32.xlu0 %v926, 12
      %v958 = vpop.permute.xlu0 %957
      %v975 = vunpack.c.l.b16 %v315
      %v976 = vunpack.c.l.b16 %v318
      %v977 = vunpack.c.l.b16 %v321
      %v978 = vunpack.c.l.b16 %v324
      %v979 = vunpack.c.l.b16 %v327
      %v980 = vunpack.c.l.b16 %v330
      %v981 = vunpack.c.l.b16 %v333
      %v982 = vunpack.c.l.b16 %v336
      %v983 = vunpack.c.l.b16 %v339
      %v984 = vunpack.c.l.b16 %v342
      %v985 = vunpack.c.l.b16 %v345
      %v986 = vunpack.c.l.b16 %v348
      %v987 = vunpack.c.l.b16 %v351
      %v988 = vunpack.c.l.b16 %v354
      %v989 = vunpack.c.l.b16 %v357
      %v990 = vunpack.c.l.b16 %v360
      %v991 = vpack.c.b16 %v975, %v975
      %v992 = vpack.c.b16 %v976, %v976
      %v993 = vpack.c.b16 %v977, %v977
      %v994 = vpack.c.b16 %v978, %v978
      %v995 = vpack.c.b16 %v979, %v979
      %v996 = vpack.c.b16 %v980, %v980
      %v997 = vpack.c.b16 %v981, %v981
      %v998 = vpack.c.b16 %v982, %v982
      %v999 = vpack.c.b16 %v983, %v983
      %v1000 = vpack.c.b16 %v984, %v984
      %v1001 = vpack.c.b16 %v985, %v985
      %v1002 = vpack.c.b16 %v986, %v986
      %v1003 = vpack.c.b16 %v987, %v987
      %v1004 = vpack.c.b16 %v988, %v988
      %v1005 = vpack.c.b16 %v989, %v989
      %v1006 = vpack.c.b16 %v990, %v990
      %v1008 = vshrl.u32 %v911, 16
      %v1010 = vshll.u32 %v911, 16
      %v1012 = vrot.slane %v1010, 1
      %v1013 = vor.u32 %v1008, %v1012
      %v1015 = vshll.u32 %v991, 16
      %v1017 = vrot.slane %v1015, 1
      %v1018 = vsel %vm541, %v1013, %v1017
      %v1020 = vshrl.u32 %v912, 16
      %v1022 = vshll.u32 %v912, 16
      %v1024 = vrot.slane %v1022, 1
      %v1025 = vor.u32 %v1020, %v1024
      %v1027 = vshll.u32 %v992, 16
      %v1029 = vrot.slane %v1027, 1
      %v1030 = vsel %vm541, %v1025, %v1029
      %v1032 = vshrl.u32 %v913, 16
      %v1034 = vshll.u32 %v913, 16
      %v1036 = vrot.slane %v1034, 1
      %v1037 = vor.u32 %v1032, %v1036
      %v1039 = vshll.u32 %v993, 16
      %v1041 = vrot.slane %v1039, 1
      %v1042 = vsel %vm541, %v1037, %v1041
      %v1044 = vshrl.u32 %v914, 16
      %v1046 = vshll.u32 %v914, 16
      %v1048 = vrot.slane %v1046, 1
      %v1049 = vor.u32 %v1044, %v1048
      %v1051 = vshll.u32 %v994, 16
      %v1053 = vrot.slane %v1051, 1
      %v1054 = vsel %vm541, %v1049, %v1053
      %v1056 = vshrl.u32 %v915, 16
      %v1058 = vshll.u32 %v915, 16
      %v1060 = vrot.slane %v1058, 1
      %v1061 = vor.u32 %v1056, %v1060
      %v1063 = vshll.u32 %v995, 16
      %v1065 = vrot.slane %v1063, 1
      %v1066 = vsel %vm541, %v1061, %v1065
      %v1068 = vshrl.u32 %v916, 16
      %v1070 = vshll.u32 %v916, 16
      %v1072 = vrot.slane %v1070, 1
      %v1073 = vor.u32 %v1068, %v1072
      %v1075 = vshll.u32 %v996, 16
      %v1077 = vrot.slane %v1075, 1
      %v1078 = vsel %vm541, %v1073, %v1077
      %v1080 = vshrl.u32 %v917, 16
      %v1082 = vshll.u32 %v917, 16
      %v1084 = vrot.slane %v1082, 1
      %v1085 = vor.u32 %v1080, %v1084
      %v1087 = vshll.u32 %v997, 16
      %v1089 = vrot.slane %v1087, 1
      %v1090 = vsel %vm541, %v1085, %v1089
      %v1092 = vshrl.u32 %v918, 16
      %v1094 = vshll.u32 %v918, 16
      %v1096 = vrot.slane %v1094, 1
      %v1097 = vor.u32 %v1092, %v1096
      %v1099 = vshll.u32 %v998, 16
      %v1101 = vrot.slane %v1099, 1
      %v1102 = vsel %vm541, %v1097, %v1101
      %v1104 = vshrl.u32 %v919, 16
      %v1106 = vshll.u32 %v919, 16
      %v1108 = vrot.slane %v1106, 1
      %v1109 = vor.u32 %v1104, %v1108
      %v1111 = vshll.u32 %v999, 16
      %v1113 = vrot.slane %v1111, 1
      %v1114 = vsel %vm541, %v1109, %v1113
      %v1116 = vshrl.u32 %v920, 16
      %v1118 = vshll.u32 %v920, 16
      %v1120 = vrot.slane %v1118, 1
      %v1121 = vor.u32 %v1116, %v1120
      %v1123 = vshll.u32 %v1000, 16
      %v1125 = vrot.slane %v1123, 1
      %v1126 = vsel %vm541, %v1121, %v1125
      %v1128 = vshrl.u32 %v921, 16
      %v1130 = vshll.u32 %v921, 16
      %v1132 = vrot.slane %v1130, 1
      %v1133 = vor.u32 %v1128, %v1132
      %v1135 = vshll.u32 %v1001, 16
      %v1137 = vrot.slane %v1135, 1
      %v1138 = vsel %vm541, %v1133, %v1137
      %v1140 = vshrl.u32 %v922, 16
      %v1142 = vshll.u32 %v922, 16
      %v1144 = vrot.slane %v1142, 1
      %v1145 = vor.u32 %v1140, %v1144
      %v1147 = vshll.u32 %v1002, 16
      %v1149 = vrot.slane %v1147, 1
      %v1150 = vsel %vm541, %v1145, %v1149
      %v1152 = vshrl.u32 %v923, 16
      %v1154 = vshll.u32 %v923, 16
      %v1156 = vrot.slane %v1154, 1
      %v1157 = vor.u32 %v1152, %v1156
      %v1159 = vshll.u32 %v1003, 16
      %v1161 = vrot.slane %v1159, 1
      %v1162 = vsel %vm541, %v1157, %v1161
      %v1164 = vshrl.u32 %v924, 16
      %v1166 = vshll.u32 %v924, 16
      %v1168 = vrot.slane %v1166, 1
      %v1169 = vor.u32 %v1164, %v1168
      %v1171 = vshll.u32 %v1004, 16
      %v1173 = vrot.slane %v1171, 1
      %v1174 = vsel %vm541, %v1169, %v1173
      %v1176 = vshrl.u32 %v925, 16
      %v1178 = vshll.u32 %v925, 16
      %v1180 = vrot.slane %v1178, 1
      %v1181 = vor.u32 %v1176, %v1180
      %v1183 = vshll.u32 %v1005, 16
      %v1185 = vrot.slane %v1183, 1
      %v1186 = vsel %vm541, %v1181, %v1185
      %v1188 = vshrl.u32 %v926, 16
      %v1190 = vshll.u32 %v926, 16
      %v1192 = vrot.slane %v1190, 1
      %v1193 = vor.u32 %v1188, %v1192
      %v1195 = vshll.u32 %v1006, 16
      %v1197 = vrot.slane %v1195, 1
      %v1198 = vsel %vm541, %v1193, %v1197
      %1199 = vrot.lane.b32.xlu0 %v1018, 16
      %v1200 = vpop.permute.xlu0 %1199
      %1201 = vrot.lane.b32.xlu0 %v1030, 16
      %v1202 = vpop.permute.xlu0 %1201
      %1203 = vrot.lane.b32.xlu0 %v1042, 16
      %v1204 = vpop.permute.xlu0 %1203
      %1205 = vrot.lane.b32.xlu0 %v1054, 16
      %v1206 = vpop.permute.xlu0 %1205
      %1207 = vrot.lane.b32.xlu0 %v1066, 16
      %v1208 = vpop.permute.xlu0 %1207
      %1209 = vrot.lane.b32.xlu0 %v1078, 16
      %v1210 = vpop.permute.xlu0 %1209
      %1211 = vrot.lane.b32.xlu0 %v1090, 16
      %v1212 = vpop.permute.xlu0 %1211
      %1213 = vrot.lane.b32.xlu0 %v1102, 16
      %v1214 = vpop.permute.xlu0 %1213
      %1215 = vrot.lane.b32.xlu0 %v1114, 16
      %v1216 = vpop.permute.xlu0 %1215
      %1217 = vrot.lane.b32.xlu0 %v1126, 16
      %v1218 = vpop.permute.xlu0 %1217
      %1219 = vrot.lane.b32.xlu0 %v1138, 16
      %v1220 = vpop.permute.xlu0 %1219
      %1221 = vrot.lane.b32.xlu0 %v1150, 16
      %v1222 = vpop.permute.xlu0 %1221
      %1223 = vrot.lane.b32.xlu0 %v1162, 16
      %v1224 = vpop.permute.xlu0 %1223
      %1225 = vrot.lane.b32.xlu0 %v1174, 16
      %v1226 = vpop.permute.xlu0 %1225
      %1227 = vrot.lane.b32.xlu0 %v1186, 16
      %v1228 = vpop.permute.xlu0 %1227
      %1229 = vrot.lane.b32.xlu0 %v1198, 16
      %v1230 = vpop.permute.xlu0 %1229
      %v1231 = vrot.slane %v911, 1
      %v1232 = vrot.slane %v991, 1
      %v1233 = vsel %vm766, %v1231, %v1232
      %v1234 = vrot.slane %v912, 1
      %v1235 = vrot.slane %v992, 1
      %v1236 = vsel %vm766, %v1234, %v1235
      %v1237 = vrot.slane %v913, 1
      %v1238 = vrot.slane %v993, 1
      %v1239 = vsel %vm766, %v1237, %v1238
      %v1240 = vrot.slane %v914, 1
      %v1241 = vrot.slane %v994, 1
      %v1242 = vsel %vm766, %v1240, %v1241
      %v1243 = vrot.slane %v915, 1
      %v1244 = vrot.slane %v995, 1
      %v1245 = vsel %vm766, %v1243, %v1244
      %v1246 = vrot.slane %v916, 1
      %v1247 = vrot.slane %v996, 1
      %v1248 = vsel %vm766, %v1246, %v1247
      %v1249 = vrot.slane %v917, 1
      %v1250 = vrot.slane %v997, 1
      %v1251 = vsel %vm766, %v1249, %v1250
      %v1252 = vrot.slane %v918, 1
      %v1253 = vrot.slane %v998, 1
      %v1254 = vsel %vm766, %v1252, %v1253
      %v1255 = vrot.slane %v919, 1
      %v1256 = vrot.slane %v999, 1
      %v1257 = vsel %vm766, %v1255, %v1256
      %v1258 = vrot.slane %v920, 1
      %v1259 = vrot.slane %v1000, 1
      %v1260 = vsel %vm766, %v1258, %v1259
      %v1261 = vrot.slane %v921, 1
      %v1262 = vrot.slane %v1001, 1
      %v1263 = vsel %vm766, %v1261, %v1262
      %v1264 = vrot.slane %v922, 1
      %v1265 = vrot.slane %v1002, 1
      %v1266 = vsel %vm766, %v1264, %v1265
      %v1267 = vrot.slane %v923, 1
      %v1268 = vrot.slane %v1003, 1
      %v1269 = vsel %vm766, %v1267, %v1268
      %v1270 = vrot.slane %v924, 1
      %v1271 = vrot.slane %v1004, 1
      %v1272 = vsel %vm766, %v1270, %v1271
      %v1273 = vrot.slane %v925, 1
      %v1274 = vrot.slane %v1005, 1
      %v1275 = vsel %vm766, %v1273, %v1274
      %v1276 = vrot.slane %v926, 1
      %v1277 = vrot.slane %v1006, 1
      %v1278 = vsel %vm766, %v1276, %v1277
      %1279 = vrot.lane.b32.xlu0 %v1233, 20
      %v1280 = vpop.permute.xlu0 %1279
      %1281 = vrot.lane.b32.xlu0 %v1236, 20
      %v1282 = vpop.permute.xlu0 %1281
      %1283 = vrot.lane.b32.xlu0 %v1239, 20
      %v1284 = vpop.permute.xlu0 %1283
      %1285 = vrot.lane.b32.xlu0 %v1242, 20
      %v1286 = vpop.permute.xlu0 %1285
      %1287 = vrot.lane.b32.xlu0 %v1245, 20
      %v1288 = vpop.permute.xlu0 %1287
      %1289 = vrot.lane.b32.xlu0 %v1248, 20
      %v1290 = vpop.permute.xlu0 %1289
      %1291 = vrot.lane.b32.xlu0 %v1251, 20
      %v1292 = vpop.permute.xlu0 %1291
      %1293 = vrot.lane.b32.xlu0 %v1254, 20
      %v1294 = vpop.permute.xlu0 %1293
      %1295 = vrot.lane.b32.xlu0 %v1257, 20
      %v1296 = vpop.permute.xlu0 %1295
      %1297 = vrot.lane.b32.xlu0 %v1260, 20
      %v1298 = vpop.permute.xlu0 %1297
      %1299 = vrot.lane.b32.xlu0 %v1263, 20
      %v1300 = vpop.permute.xlu0 %1299
      %1301 = vrot.lane.b32.xlu0 %v1266, 20
      %v1302 = vpop.permute.xlu0 %1301
      %1303 = vrot.lane.b32.xlu0 %v1269, 20
      %v1304 = vpop.permute.xlu0 %1303
      %1305 = vrot.lane.b32.xlu0 %v1272, 20
      %v1306 = vpop.permute.xlu0 %1305
      %1307 = vrot.lane.b32.xlu0 %v1275, 20
      %v1308 = vpop.permute.xlu0 %1307
      %1309 = vrot.lane.b32.xlu0 %v1278, 20
      %v1310 = vpop.permute.xlu0 %1309
      %vm1311 = vcmask 31744
      %v1313 = vsel %vm1311, %v477, %v735
      %v1315 = vsel %vm1311, %v478, %v737
      %v1317 = vsel %vm1311, %v479, %v739
      %v1319 = vsel %vm1311, %v480, %v741
      %v1321 = vsel %vm1311, %v481, %v743
      %v1323 = vsel %vm1311, %v482, %v745
      %v1325 = vsel %vm1311, %v483, %v747
      %v1327 = vsel %vm1311, %v484, %v749
      %v1329 = vsel %vm1311, %v485, %v751
      %v1331 = vsel %vm1311, %v486, %v753
      %v1333 = vsel %vm1311, %v487, %v755
      %v1335 = vsel %vm1311, %v488, %v757
      %v1337 = vsel %vm1311, %v489, %v759
      %v1339 = vsel %vm1311, %v490, %v761
      %v1341 = vsel %vm1311, %v491, %v763
      %v1343 = vsel %vm1311, %v492, %v765
      %vm1344 = vcmask 64512
      %v1346 = vsel %vm1344, %v1313, %v816
      %v1348 = vsel %vm1344, %v1315, %v818
      %v1350 = vsel %vm1344, %v1317, %v820
      %v1352 = vsel %vm1344, %v1319, %v822
      %v1354 = vsel %vm1344, %v1321, %v824
      %v1356 = vsel %vm1344, %v1323, %v826
      %v1358 = vsel %vm1344, %v1325, %v828
      %v1360 = vsel %vm1344, %v1327, %v830
      %v1362 = vsel %vm1344, %v1329, %v832
      %v1364 = vsel %vm1344, %v1331, %v834
      %v1366 = vsel %vm1344, %v1333, %v836
      %v1368 = vsel %vm1344, %v1335, %v838
      %v1370 = vsel %vm1344, %v1337, %v840
      %v1372 = vsel %vm1344, %v1339, %v842
      %v1374 = vsel %vm1344, %v1341, %v844
      %v1376 = vsel %vm1344, %v1343, %v846
      %vm1377 = vcmask 97280
      %v1379 = vsel %vm1377, %v1346, %v928
      %v1381 = vsel %vm1377, %v1348, %v930
      %v1383 = vsel %vm1377, %v1350, %v932
      %v1385 = vsel %vm1377, %v1352, %v934
      %v1387 = vsel %vm1377, %v1354, %v936
      %v1389 = vsel %vm1377, %v1356, %v938
      %v1391 = vsel %vm1377, %v1358, %v940
      %v1393 = vsel %vm1377, %v1360, %v942
      %v1395 = vsel %vm1377, %v1362, %v944
      %v1397 = vsel %vm1377, %v1364, %v946
      %v1399 = vsel %vm1377, %v1366, %v948
      %v1401 = vsel %vm1377, %v1368, %v950
      %v1403 = vsel %vm1377, %v1370, %v952
      %v1405 = vsel %vm1377, %v1372, %v954
      %v1407 = vsel %vm1377, %v1374, %v956
      %v1409 = vsel %vm1377, %v1376, %v958
      %vm1410 = vcmask 130048
      %v1412 = vsel %vm1410, %v1379, %v1200
      %v1414 = vsel %vm1410, %v1381, %v1202
      %v1416 = vsel %vm1410, %v1383, %v1204
      %v1418 = vsel %vm1410, %v1385, %v1206
      %v1420 = vsel %vm1410, %v1387, %v1208
      %v1422 = vsel %vm1410, %v1389, %v1210
      %v1424 = vsel %vm1410, %v1391, %v1212
      %v1426 = vsel %vm1410, %v1393, %v1214
      %v1428 = vsel %vm1410, %v1395, %v1216
      %v1430 = vsel %vm1410, %v1397, %v1218
      %v1432 = vsel %vm1410, %v1399, %v1220
      %v1434 = vsel %vm1410, %v1401, %v1222
      %v1436 = vsel %vm1410, %v1403, %v1224
      %v1438 = vsel %vm1410, %v1405, %v1226
      %v1440 = vsel %vm1410, %v1407, %v1228
      %v1442 = vsel %vm1410, %v1409, %v1230
      %vm1443 = vcmask 162816
      %v1445 = vsel %vm1443, %v1412, %v1280
      %v1447 = vsel %vm1443, %v1414, %v1282
      %v1449 = vsel %vm1443, %v1416, %v1284
      %v1451 = vsel %vm1443, %v1418, %v1286
      %v1453 = vsel %vm1443, %v1420, %v1288
      %v1455 = vsel %vm1443, %v1422, %v1290
      %v1457 = vsel %vm1443, %v1424, %v1292
      %v1459 = vsel %vm1443, %v1426, %v1294
      %v1461 = vsel %vm1443, %v1428, %v1296
      %v1463 = vsel %vm1443, %v1430, %v1298
      %v1465 = vsel %vm1443, %v1432, %v1300
      %v1467 = vsel %vm1443, %v1434, %v1302
      %v1469 = vsel %vm1443, %v1436, %v1304
      %v1471 = vsel %vm1443, %v1438, %v1306
      %v1473 = vsel %vm1443, %v1440, %v1308
      %v1475 = vsel %vm1443, %v1442, %v1310
      %v1476 = vld [vmem:[%s1] sm:$0xf]
      %v1477 = vld [vmem:[%s1 + $0x4] sm:$0xf]
      %v1478 = vld [vmem:[%s1 + $0x8] sm:$0xf]
      %v1482 = vunpack.c.l.b16 %v1476
      %v1483 = vunpack.c.l.b16 %v1477
      %v1484 = vunpack.c.l.b16 %v1478
      %v1485 = vpack.c.b16 %v1483, %v1482
      %v1486 = vpack.c.b16 %v1484, %v1484
      %vm1488 = vcmask 195584
      %v1489 = vsel %vm1488, %v1445, 0
      %v1491 = vsel %vm1488, %v1447, 0
      %v1493 = vsel %vm1488, %v1449, 0
      %v1495 = vsel %vm1488, %v1451, 0
      %v1497 = vsel %vm1488, %v1453, 0
      %v1499 = vsel %vm1488, %v1455, 0
      %v1501 = vsel %vm1488, %v1457, 0
      %v1503 = vsel %vm1488, %v1459, 0
      %v1505 = vsel %vm1488, %v1461, 0
      %v1507 = vsel %vm1488, %v1463, 0
      %v1509 = vsel %vm1488, %v1465, 0
      %v1511 = vsel %vm1488, %v1467, 0
      %v1513 = vsel %vm1488, %v1469, 0
      %v1515 = vsel %vm1488, %v1471, 0
      %v1517 = vsel %vm1488, %v1473, 0
      %v1519 = vsel %vm1488, %v1475, 0
      %vm1521 = vcmask 1043456
      %v1523 = vsel %vm1521, %v1486, 0
      %1525 = vmatprep.subr.bf16.mxu0 0
      %1526 = vmatpush1.bf16.msra.mxu0 %v1485
      %1527 = vmatprep.subr.bf16.mxu0 0
      %1528 = vmatpush1.bf16.msra.mxu0 %v1523
      %1529 = vmatprep.subr.bf16.mxu0 0
      %1530 = vmatpush1.bf16.msra.mxu0 0
      %1531 = vmatprep.subr.bf16.mxu0 0
      %1532 = vmatpush1.bf16.msra.mxu0 0
      %1533 = vmatprep.subr.bf16.mxu0 0
      %1534 = vmatpush1.bf16.msra.mxu0 0
      %1535 = vmatprep.subr.bf16.mxu0 0
      %1536 = vmatpush1.bf16.msra.mxu0 0
      %1537 = vmatprep.subr.bf16.mxu0 0
      %1538 = vmatpush1.bf16.msra.mxu0 0
      %1539 = vmatprep.subr.bf16.mxu0 0
      %1540 = vmatpush1.bf16.msra.mxu0 0
      %1541 = vmatprep.subr.bf16.mxu0 0
      %1542 = vmatpush1.bf16.msra.mxu0 0
      %1543 = vmatprep.subr.bf16.mxu0 0
      %1544 = vmatpush1.bf16.msra.mxu0 0
      %1545 = vmatprep.subr.bf16.mxu0 0
      %1546 = vmatpush1.bf16.msra.mxu0 0
      %1547 = vmatprep.subr.bf16.mxu0 0
      %1548 = vmatpush1.bf16.msra.mxu0 0
      %1549 = vmatprep.subr.bf16.mxu0 0
      %1550 = vmatpush1.bf16.msra.mxu0 0
      %1551 = vmatprep.subr.bf16.mxu0 0
      %1552 = vmatpush1.bf16.msra.mxu0 0
      %1553 = vmatprep.subr.bf16.mxu0 0
      %1554 = vmatpush1.bf16.msra.mxu0 0
      %1555 = vmatprep.subr.bf16.mxu0 0
      %1556 = vmatpush1.bf16.msra.mxu0 0
      %1557 = vmatprep.mubr.bf16.mxu0 0
      %1558 = vmatmul.mubr.bf16.gmra.mrb[0].mxu0 %v1489
      %v1559 = vpop.f32.mrb[0].mxu0
      %v1560 = vadd.f32 0.0, %v1559
      %v1561 = vpop.f32.mrb[0].mxu0
      %v1562 = vpop.f32.mrb[0].mxu0
      %v1563 = vadd.f32 0.0, %v1562
      %v1564 = vpop.f32.mrb[0].mxu0
      %1565 = vmatprep.mubr.bf16.mxu0 0
      %1566 = vmatmul.mubr.bf16.gmra.mrb[0].mxu0 %v1491
      %v1567 = vpop.f32.mrb[0].mxu0
      %v1568 = vadd.f32 0.0, %v1567
      %v1569 = vpop.f32.mrb[0].mxu0
      %v1570 = vpop.f32.mrb[0].mxu0
      %v1571 = vadd.f32 0.0, %v1570
      %v1572 = vpop.f32.mrb[0].mxu0
      %1573 = vmatprep.mubr.bf16.mxu0 0
      %1574 = vmatmul.mubr.bf16.gmra.mrb[0].mxu0 %v1493
      %v1575 = vpop.f32.mrb[0].mxu0
      %v1576 = vadd.f32 0.0, %v1575
      %v1577 = vpop.f32.mrb[0].mxu0
      %v1578 = vpop.f32.mrb[0].mxu0
      %v1579 = vadd.f32 0.0, %v1578
      %v1580 = vpop.f32.mrb[0].mxu0
      %1581 = vmatprep.mubr.bf16.mxu0 0
      %1582 = vmatmul.mubr.bf16.gmra.mrb[0].mxu0 %v1495
      %v1583 = vpop.f32.mrb[0].mxu0
      %v1584 = vadd.f32 0.0, %v1583
      %v1585 = vpop.f32.mrb[0].mxu0
      %v1586 = vpop.f32.mrb[0].mxu0
      %v1587 = vadd.f32 0.0, %v1586
      %v1588 = vpop.f32.mrb[0].mxu0
      %1589 = vmatprep.mubr.bf16.mxu0 0
      %1590 = vmatmul.mubr.bf16.gmra.mrb[0].mxu0 %v1497
      %v1591 = vpop.f32.mrb[0].mxu0
      %v1592 = vadd.f32 0.0, %v1591
      %v1593 = vpop.f32.mrb[0].mxu0
      %v1594 = vpop.f32.mrb[0].mxu0
      %v1595 = vadd.f32 0.0, %v1594
      %v1596 = vpop.f32.mrb[0].mxu0
      %1597 = vmatprep.mubr.bf16.mxu0 0
      %1598 = vmatmul.mubr.bf16.gmra.mrb[0].mxu0 %v1499
      %v1599 = vpop.f32.mrb[0].mxu0
      %v1600 = vadd.f32 0.0, %v1599
      %v1601 = vpop.f32.mrb[0].mxu0
      %v1602 = vpop.f32.mrb[0].mxu0
      %v1603 = vadd.f32 0.0, %v1602
      %v1604 = vpop.f32.mrb[0].mxu0
      %1605 = vmatprep.mubr.bf16.mxu0 0
      %1606 = vmatmul.mubr.bf16.gmra.mrb[0].mxu0 %v1501
      %v1607 = vpop.f32.mrb[0].mxu0
      %v1608 = vadd.f32 0.0, %v1607
      %v1609 = vpop.f32.mrb[0].mxu0
      %v1610 = vpop.f32.mrb[0].mxu0
      %v1611 = vadd.f32 0.0, %v1610
      %v1612 = vpop.f32.mrb[0].mxu0
      %1613 = vmatprep.mubr.bf16.mxu0 0
      %1614 = vmatmul.mubr.bf16.gmra.mrb[0].mxu0 %v1503
      %v1615 = vpop.f32.mrb[0].mxu0
      %v1616 = vadd.f32 0.0, %v1615
      %v1617 = vpop.f32.mrb[0].mxu0
      %v1618 = vpop.f32.mrb[0].mxu0
      %v1619 = vadd.f32 0.0, %v1618
      %v1620 = vpop.f32.mrb[0].mxu0
      %1621 = vmatprep.mubr.bf16.mxu0 0
      %1622 = vmatmul.mubr.bf16.gmra.mrb[0].mxu0 %v1505
      %v1623 = vpop.f32.mrb[0].mxu0
      %v1624 = vadd.f32 0.0, %v1623
      %v1625 = vpop.f32.mrb[0].mxu0
      %v1626 = vpop.f32.mrb[0].mxu0
      %v1627 = vadd.f32 0.0, %v1626
      %v1628 = vpop.f32.mrb[0].mxu0
      %1629 = vmatprep.mubr.bf16.mxu0 0
      %1630 = vmatmul.mubr.bf16.gmra.mrb[0].mxu0 %v1507
      %v1631 = vpop.f32.mrb[0].mxu0
      %v1632 = vadd.f32 0.0, %v1631
      %v1633 = vpop.f32.mrb[0].mxu0
      %v1634 = vpop.f32.mrb[0].mxu0
      %v1635 = vadd.f32 0.0, %v1634
      %v1636 = vpop.f32.mrb[0].mxu0
      %1637 = vmatprep.mubr.bf16.mxu0 0
      %1638 = vmatmul.mubr.bf16.gmra.mrb[0].mxu0 %v1509
      %v1639 = vpop.f32.mrb[0].mxu0
      %v1640 = vadd.f32 0.0, %v1639
      %v1641 = vpop.f32.mrb[0].mxu0
      %v1642 = vpop.f32.mrb[0].mxu0
      %v1643 = vadd.f32 0.0, %v1642
      %v1644 = vpop.f32.mrb[0].mxu0
      %1645 = vmatprep.mubr.bf16.mxu0 0
      %1646 = vmatmul.mubr.bf16.gmra.mrb[0].mxu0 %v1511
      %v1647 = vpop.f32.mrb[0].mxu0
      %v1648 = vadd.f32 0.0, %v1647
      %v1649 = vpop.f32.mrb[0].mxu0
      %v1650 = vpop.f32.mrb[0].mxu0
      %v1651 = vadd.f32 0.0, %v1650
      %v1652 = vpop.f32.mrb[0].mxu0
      %1653 = vmatprep.mubr.bf16.mxu0 0
      %1654 = vmatmul.mubr.bf16.gmra.mrb[0].mxu0 %v1513
      %v1655 = vpop.f32.mrb[0].mxu0
      %v1656 = vadd.f32 0.0, %v1655
      %v1657 = vpop.f32.mrb[0].mxu0
      %v1658 = vpop.f32.mrb[0].mxu0
      %v1659 = vadd.f32 0.0, %v1658
      %v1660 = vpop.f32.mrb[0].mxu0
      %1661 = vmatprep.mubr.bf16.mxu0 0
      %1662 = vmatmul.mubr.bf16.gmra.mrb[0].mxu0 %v1515
      %v1663 = vpop.f32.mrb[0].mxu0
      %v1664 = vadd.f32 0.0, %v1663
      %v1665 = vpop.f32.mrb[0].mxu0
      %v1666 = vpop.f32.mrb[0].mxu0
      %v1667 = vadd.f32 0.0, %v1666
      %v1668 = vpop.f32.mrb[0].mxu0
      %1669 = vmatprep.mubr.bf16.mxu0 0
      %1670 = vmatmul.mubr.bf16.gmra.mrb[0].mxu0 %v1517
      %v1671 = vpop.f32.mrb[0].mxu0
      %v1672 = vadd.f32 0.0, %v1671
      %v1673 = vpop.f32.mrb[0].mxu0
      %v1674 = vpop.f32.mrb[0].mxu0
      %v1675 = vadd.f32 0.0, %v1674
      %v1676 = vpop.f32.mrb[0].mxu0
      %1677 = vmatprep.mubr.bf16.mxu0 0
      %1678 = vmatmul.mubr.bf16.gmra.mrb[0].mxu0 %v1519
      %v1679 = vpop.f32.mrb[0].mxu0
      %v1680 = vadd.f32 0.0, %v1679
      %v1681 = vpop.f32.mrb[0].mxu0
      %v1682 = vpop.f32.mrb[0].mxu0
      %v1683 = vadd.f32 0.0, %v1682
      %v1684 = vpop.f32.mrb[0].mxu0
      %1685 = vdwg.mxu0
      %v1686 = vsel %vm1410, %v1560, 0.0
      %v1687 = vsel %vm1410, %v1563, 0.0
      %v1688 = vadd.f32 %v1686, %v1687
      %v1689 = vsel %vm1410, %v1568, 0.0
      %v1690 = vadd.f32 %v1688, %v1689
      %v1691 = vsel %vm1410, %v1571, 0.0
      %v1692 = vadd.f32 %v1690, %v1691
      %v1693 = vsel %vm1410, %v1576, 0.0
      %v1694 = vadd.f32 %v1692, %v1693
      %v1695 = vsel %vm1410, %v1579, 0.0
      %v1696 = vadd.f32 %v1694, %v1695
      %v1697 = vsel %vm1410, %v1584, 0.0
      %v1698 = vadd.f32 %v1696, %v1697
      %v1699 = vsel %vm1410, %v1587, 0.0
      %v1700 = vadd.f32 %v1698, %v1699
      %v1701 = vsel %vm1410, %v1592, 0.0
      %v1702 = vadd.f32 %v1700, %v1701
      %v1703 = vsel %vm1410, %v1595, 0.0
      %v1704 = vadd.f32 %v1702, %v1703
      %v1705 = vsel %vm1410, %v1600, 0.0
      %v1706 = vadd.f32 %v1704, %v1705
      %v1707 = vsel %vm1410, %v1603, 0.0
      %v1708 = vadd.f32 %v1706, %v1707
      %v1709 = vsel %vm1410, %v1608, 0.0
      %v1710 = vadd.f32 %v1708, %v1709
      %v1711 = vsel %vm1410, %v1611, 0.0
      %v1712 = vadd.f32 %v1710, %v1711
      %v1713 = vsel %vm1410, %v1616, 0.0
      %v1714 = vadd.f32 %v1712, %v1713
      %v1715 = vsel %vm1410, %v1619, 0.0
      %v1716 = vadd.f32 %v1714, %v1715
      %v1717 = vsel %vm1410, %v1624, 0.0
      %v1718 = vadd.f32 %v1716, %v1717
      %v1719 = vsel %vm1410, %v1627, 0.0
      %v1720 = vadd.f32 %v1718, %v1719
      %v1721 = vsel %vm1410, %v1632, 0.0
      %v1722 = vadd.f32 %v1720, %v1721
      %v1723 = vsel %vm1410, %v1635, 0.0
      %v1724 = vadd.f32 %v1722, %v1723
      %v1725 = vsel %vm1410, %v1640, 0.0
      %v1726 = vadd.f32 %v1724, %v1725
      %v1727 = vsel %vm1410, %v1643, 0.0
      %v1728 = vadd.f32 %v1726, %v1727
      %v1729 = vsel %vm1410, %v1648, 0.0
      %v1730 = vadd.f32 %v1728, %v1729
      %v1731 = vsel %vm1410, %v1651, 0.0
      %v1732 = vadd.f32 %v1730, %v1731
      %v1733 = vsel %vm1410, %v1656, 0.0
      %v1734 = vadd.f32 %v1732, %v1733
      %v1735 = vsel %vm1410, %v1659, 0.0
      %v1736 = vadd.f32 %v1734, %v1735
      %v1737 = vsel %vm1410, %v1664, 0.0
      %v1738 = vadd.f32 %v1736, %v1737
      %v1739 = vsel %vm1410, %v1667, 0.0
      %v1740 = vadd.f32 %v1738, %v1739
      %v1741 = vsel %vm1410, %v1672, 0.0
      %v1742 = vadd.f32 %v1740, %v1741
      %v1743 = vsel %vm1410, %v1675, 0.0
      %v1744 = vadd.f32 %v1742, %v1743
      %v1745 = vsel %vm1410, %v1680, 0.0
      %v1746 = vadd.f32 %v1744, %v1745
      %v1747 = vsel %vm1410, %v1683, 0.0
      %v1748 = vadd.f32 %v1746, %v1747
      %v1749 = vrot.slane %v1748, 4
      %v1750 = vadd.f32 %v1748, %v1749
      %v1751 = vrot.slane %v1750, 2
      %v1752 = vadd.f32 %v1750, %v1751
      %v1753 = vrot.slane %v1752, 1
      %v1754 = vadd.f32 %v1752, %v1753
      %v1755 = vadd.f32 %v1754, 0.0
      %v1756 = vmul.f32 %v1560, %v1560
      %v1757 = vmul.f32 %v1563, %v1563
      %v1758 = vmul.f32 %v1568, %v1568
      %v1759 = vmul.f32 %v1571, %v1571
      %v1760 = vmul.f32 %v1576, %v1576
      %v1761 = vmul.f32 %v1579, %v1579
      %v1762 = vmul.f32 %v1584, %v1584
      %v1763 = vmul.f32 %v1587, %v1587
      %v1764 = vmul.f32 %v1592, %v1592
      %v1765 = vmul.f32 %v1595, %v1595
      %v1766 = vmul.f32 %v1600, %v1600
      %v1767 = vmul.f32 %v1603, %v1603
      %v1768 = vmul.f32 %v1608, %v1608
      %v1769 = vmul.f32 %v1611, %v1611
      %v1770 = vmul.f32 %v1616, %v1616
      %v1771 = vmul.f32 %v1619, %v1619
      %v1772 = vmul.f32 %v1624, %v1624
      %v1773 = vmul.f32 %v1627, %v1627
      %v1774 = vmul.f32 %v1632, %v1632
      %v1775 = vmul.f32 %v1635, %v1635
      %v1776 = vmul.f32 %v1640, %v1640
      %v1777 = vmul.f32 %v1643, %v1643
      %v1778 = vmul.f32 %v1648, %v1648
      %v1779 = vmul.f32 %v1651, %v1651
      %v1780 = vmul.f32 %v1656, %v1656
      %v1781 = vmul.f32 %v1659, %v1659
      %v1782 = vmul.f32 %v1664, %v1664
      %v1783 = vmul.f32 %v1667, %v1667
      %v1784 = vmul.f32 %v1672, %v1672
      %v1785 = vmul.f32 %v1675, %v1675
      %v1786 = vmul.f32 %v1680, %v1680
      %v1787 = vmul.f32 %v1683, %v1683
      %v1788 = vsel %vm1410, %v1756, 0.0
      %v1789 = vsel %vm1410, %v1757, 0.0
      %v1790 = vadd.f32 %v1788, %v1789
      %v1791 = vsel %vm1410, %v1758, 0.0
      %v1792 = vadd.f32 %v1790, %v1791
      %v1793 = vsel %vm1410, %v1759, 0.0
      %v1794 = vadd.f32 %v1792, %v1793
      %v1795 = vsel %vm1410, %v1760, 0.0
      %v1796 = vadd.f32 %v1794, %v1795
      %v1797 = vsel %vm1410, %v1761, 0.0
      %v1798 = vadd.f32 %v1796, %v1797
      %v1799 = vsel %vm1410, %v1762, 0.0
      %v1800 = vadd.f32 %v1798, %v1799
      %v1801 = vsel %vm1410, %v1763, 0.0
      %v1802 = vadd.f32 %v1800, %v1801
      %v1803 = vsel %vm1410, %v1764, 0.0
      %v1804 = vadd.f32 %v1802, %v1803
      %v1805 = vsel %vm1410, %v1765, 0.0
      %v1806 = vadd.f32 %v1804, %v1805
      %v1807 = vsel %vm1410, %v1766, 0.0
      %v1808 = vadd.f32 %v1806, %v1807
      %v1809 = vsel %vm1410, %v1767, 0.0
      %v1810 = vadd.f32 %v1808, %v1809
      %v1811 = vsel %vm1410, %v1768, 0.0
      %v1812 = vadd.f32 %v1810, %v1811
      %v1813 = vsel %vm1410, %v1769, 0.0
      %v1814 = vadd.f32 %v1812, %v1813
      %v1815 = vsel %vm1410, %v1770, 0.0
      %v1816 = vadd.f32 %v1814, %v1815
      %v1817 = vsel %vm1410, %v1771, 0.0
      %v1818 = vadd.f32 %v1816, %v1817
      %v1819 = vsel %vm1410, %v1772, 0.0
      %v1820 = vadd.f32 %v1818, %v1819
      %v1821 = vsel %vm1410, %v1773, 0.0
      %v1822 = vadd.f32 %v1820, %v1821
      %v1823 = vsel %vm1410, %v1774, 0.0
      %v1824 = vadd.f32 %v1822, %v1823
      %v1825 = vsel %vm1410, %v1775, 0.0
      %v1826 = vadd.f32 %v1824, %v1825
      %v1827 = vsel %vm1410, %v1776, 0.0
      %v1828 = vadd.f32 %v1826, %v1827
      %v1829 = vsel %vm1410, %v1777, 0.0
      %v1830 = vadd.f32 %v1828, %v1829
      %v1831 = vsel %vm1410, %v1778, 0.0
      %v1832 = vadd.f32 %v1830, %v1831
      %v1833 = vsel %vm1410, %v1779, 0.0
      %v1834 = vadd.f32 %v1832, %v1833
      %v1835 = vsel %vm1410, %v1780, 0.0
      %v1836 = vadd.f32 %v1834, %v1835
      %v1837 = vsel %vm1410, %v1781, 0.0
      %v1838 = vadd.f32 %v1836, %v1837
      %v1839 = vsel %vm1410, %v1782, 0.0
      %v1840 = vadd.f32 %v1838, %v1839
      %v1841 = vsel %vm1410, %v1783, 0.0
      %v1842 = vadd.f32 %v1840, %v1841
      %v1843 = vsel %vm1410, %v1784, 0.0
      %v1844 = vadd.f32 %v1842, %v1843
      %v1845 = vsel %vm1410, %v1785, 0.0
      %v1846 = vadd.f32 %v1844, %v1845
      %v1847 = vsel %vm1410, %v1786, 0.0
      %v1848 = vadd.f32 %v1846, %v1847
      %v1849 = vsel %vm1410, %v1787, 0.0
      %v1850 = vadd.f32 %v1848, %v1849
      %v1851 = vrot.slane %v1850, 4
      %v1852 = vadd.f32 %v1850, %v1851
      %v1853 = vrot.slane %v1852, 2
      %v1854 = vadd.f32 %v1852, %v1853
      %v1855 = vrot.slane %v1854, 1
      %v1856 = vadd.f32 %v1854, %v1855
      %v1857 = vadd.f32 %v1856, 0.0
      %v1858 = vpack.c.bf16 %v1563, %v1560
      %v1859 = vpack.c.bf16 %v1571, %v1568
      %v1860 = vpack.c.bf16 %v1579, %v1576
      %v1861 = vpack.c.bf16 %v1587, %v1584
      %v1862 = vpack.c.bf16 %v1595, %v1592
      %v1863 = vpack.c.bf16 %v1603, %v1600
      %v1864 = vpack.c.bf16 %v1611, %v1608
      %v1865 = vpack.c.bf16 %v1619, %v1616
      %v1866 = vpack.c.bf16 %v1627, %v1624
      %v1867 = vpack.c.bf16 %v1635, %v1632
      %v1868 = vpack.c.bf16 %v1643, %v1640
      %v1869 = vpack.c.bf16 %v1651, %v1648
      %v1870 = vpack.c.bf16 %v1659, %v1656
      %v1871 = vpack.c.bf16 %v1667, %v1664
      %v1872 = vpack.c.bf16 %v1675, %v1672
      %v1873 = vpack.c.bf16 %v1683, %v1680
      %v1890 = vunpack.c.l.b16 %v1858
      %v1891 = vunpack.c.h.b16 %v1858
      %v1892 = vunpack.c.l.b16 %v1859
      %v1893 = vunpack.c.h.b16 %v1859
      %v1894 = vunpack.c.l.b16 %v1860
      %v1895 = vunpack.c.h.b16 %v1860
      %v1896 = vunpack.c.l.b16 %v1861
      %v1897 = vunpack.c.h.b16 %v1861
      %v1898 = vunpack.c.l.b16 %v1862
      %v1899 = vunpack.c.h.b16 %v1862
      %v1900 = vunpack.c.l.b16 %v1863
      %v1901 = vunpack.c.h.b16 %v1863
      %v1902 = vunpack.c.l.b16 %v1864
      %v1903 = vunpack.c.h.b16 %v1864
      %v1904 = vunpack.c.l.b16 %v1865
      %v1905 = vunpack.c.h.b16 %v1865
      %v1906 = vunpack.c.l.b16 %v1866
      %v1907 = vunpack.c.h.b16 %v1866
      %v1908 = vunpack.c.l.b16 %v1867
      %v1909 = vunpack.c.h.b16 %v1867
      %v1910 = vunpack.c.l.b16 %v1868
      %v1911 = vunpack.c.h.b16 %v1868
      %v1912 = vunpack.c.l.b16 %v1869
      %v1913 = vunpack.c.h.b16 %v1869
      %v1914 = vunpack.c.l.b16 %v1870
      %v1915 = vunpack.c.h.b16 %v1870
      %v1916 = vunpack.c.l.b16 %v1871
      %v1917 = vunpack.c.h.b16 %v1871
      %v1918 = vunpack.c.l.b16 %v1872
      %v1919 = vunpack.c.h.b16 %v1872
      %v1920 = vunpack.c.l.b16 %v1873
      %v1921 = vunpack.c.h.b16 %v1873
      %v1922 = vpack.c.b16 %v1890, %v1890
      %v1923 = vpack.c.b16 %v1891, %v1891
      %v1924 = vpack.c.b16 %v1892, %v1892
      %v1925 = vpack.c.b16 %v1893, %v1893
      %v1926 = vpack.c.b16 %v1894, %v1894
      %v1927 = vpack.c.b16 %v1895, %v1895
      %v1928 = vpack.c.b16 %v1896, %v1896
      %v1929 = vpack.c.b16 %v1897, %v1897
      %v1930 = vpack.c.b16 %v1898, %v1898
      %v1931 = vpack.c.b16 %v1899, %v1899
      %v1932 = vpack.c.b16 %v1900, %v1900
      %v1933 = vpack.c.b16 %v1901, %v1901
      %v1934 = vpack.c.b16 %v1902, %v1902
      %v1935 = vpack.c.b16 %v1903, %v1903
      %v1936 = vpack.c.b16 %v1904, %v1904
      %v1937 = vpack.c.b16 %v1905, %v1905
      %v1938 = vpack.c.b16 %v1906, %v1906
      %v1939 = vpack.c.b16 %v1907, %v1907
      %v1940 = vpack.c.b16 %v1908, %v1908
      %v1941 = vpack.c.b16 %v1909, %v1909
      %v1942 = vpack.c.b16 %v1910, %v1910
      %v1943 = vpack.c.b16 %v1911, %v1911
      %v1944 = vpack.c.b16 %v1912, %v1912
      %v1945 = vpack.c.b16 %v1913, %v1913
      %v1946 = vpack.c.b16 %v1914, %v1914
      %v1947 = vpack.c.b16 %v1915, %v1915
      %v1948 = vpack.c.b16 %v1916, %v1916
      %v1949 = vpack.c.b16 %v1917, %v1917
      %v1950 = vpack.c.b16 %v1918, %v1918
      %v1951 = vpack.c.b16 %v1919, %v1919
      %v1952 = vpack.c.b16 %v1920, %v1920
      %v1953 = vpack.c.b16 %v1921, %v1921
      %vm1986 = vcmask 125952
      %1987 = vst.msk [vmem:[%s242] sm:$0xf] %vm1986, %v1922
      %1988 = vst.msk [vmem:[%s242 + $0x4] sm:$0xf] %vm1986, %v1923
      %1989 = vst.msk [vmem:[%s242 + $0x10] sm:$0xf] %vm1986, %v1924
      %1990 = vst.msk [vmem:[%s242 + $0x14] sm:$0xf] %vm1986, %v1925
      %1991 = vst.msk [vmem:[%s242 + $0x20] sm:$0xf] %vm1986, %v1926
      %1992 = vst.msk [vmem:[%s242 + $0x24] sm:$0xf] %vm1986, %v1927
      %1993 = vst.msk [vmem:[%s242 + $0x30] sm:$0xf] %vm1986, %v1928
      %1994 = vst.msk [vmem:[%s242 + $0x34] sm:$0xf] %vm1986, %v1929
      %1995 = vst.msk [vmem:[%s242 + $0x40] sm:$0xf] %vm1986, %v1930
      %1996 = vst.msk [vmem:[%s242 + $0x44] sm:$0xf] %vm1986, %v1931
      %1997 = vst.msk [vmem:[%s242 + $0x50] sm:$0xf] %vm1986, %v1932
      %1998 = vst.msk [vmem:[%s242 + $0x54] sm:$0xf] %vm1986, %v1933
      %1999 = vst.msk [vmem:[%s242 + $0x60] sm:$0xf] %vm1986, %v1934
      %2000 = vst.msk [vmem:[%s242 + $0x64] sm:$0xf] %vm1986, %v1935
      %2001 = vst.msk [vmem:[%s242 + $0x70] sm:$0xf] %vm1986, %v1936
      %2002 = vst.msk [vmem:[%s242 + $0x74] sm:$0xf] %vm1986, %v1937
      %2003 = vst.msk [vmem:[%s242 + $0x80] sm:$0xf] %vm1986, %v1938
      %2004 = vst.msk [vmem:[%s242 + $0x84] sm:$0xf] %vm1986, %v1939
      %2005 = vst.msk [vmem:[%s242 + $0x90] sm:$0xf] %vm1986, %v1940
      %2006 = vst.msk [vmem:[%s242 + $0x94] sm:$0xf] %vm1986, %v1941
      %2007 = vst.msk [vmem:[%s242 + $0xa0] sm:$0xf] %vm1986, %v1942
      %2008 = vst.msk [vmem:[%s242 + $0xa4] sm:$0xf] %vm1986, %v1943
      %2009 = vst.msk [vmem:[%s242 + $0xb0] sm:$0xf] %vm1986, %v1944
      %2010 = vst.msk [vmem:[%s242 + $0xb4] sm:$0xf] %vm1986, %v1945
      %2011 = vst.msk [vmem:[%s242 + $0xc0] sm:$0xf] %vm1986, %v1946
      %2012 = vst.msk [vmem:[%s242 + $0xc4] sm:$0xf] %vm1986, %v1947
      %2013 = vst.msk [vmem:[%s242 + $0xd0] sm:$0xf] %vm1986, %v1948
      %2014 = vst.msk [vmem:[%s242 + $0xd4] sm:$0xf] %vm1986, %v1949
      %2015 = vst.msk [vmem:[%s242 + $0xe0] sm:$0xf] %vm1986, %v1950
      %2016 = vst.msk [vmem:[%s242 + $0xe4] sm:$0xf] %vm1986, %v1951
      %2017 = vst.msk [vmem:[%s242 + $0xf0] sm:$0xf] %vm1986, %v1952
      %2018 = vst.msk [vmem:[%s242 + $0xf4] sm:$0xf] %vm1986, %v1953
      %2019 = vrot.lane.b32.xlu0 %v1018, 4
      %v2020 = vpop.permute.xlu0 %2019
      %2021 = vrot.lane.b32.xlu0 %v1030, 4
      %v2022 = vpop.permute.xlu0 %2021
      %2023 = vrot.lane.b32.xlu0 %v1042, 4
      %v2024 = vpop.permute.xlu0 %2023
      %2025 = vrot.lane.b32.xlu0 %v1054, 4
      %v2026 = vpop.permute.xlu0 %2025
      %2027 = vrot.lane.b32.xlu0 %v1066, 4
      %v2028 = vpop.permute.xlu0 %2027
      %2029 = vrot.lane.b32.xlu0 %v1078, 4
      %v2030 = vpop.permute.xlu0 %2029
      %2031 = vrot.lane.b32.xlu0 %v1090, 4
      %v2032 = vpop.permute.xlu0 %2031
      %2033 = vrot.lane.b32.xlu0 %v1102, 4
      %v2034 = vpop.permute.xlu0 %2033
      %2035 = vrot.lane.b32.xlu0 %v1114, 4
      %v2036 = vpop.permute.xlu0 %2035
      %2037 = vrot.lane.b32.xlu0 %v1126, 4
      %v2038 = vpop.permute.xlu0 %2037
      %2039 = vrot.lane.b32.xlu0 %v1138, 4
      %v2040 = vpop.permute.xlu0 %2039
      %2041 = vrot.lane.b32.xlu0 %v1150, 4
      %v2042 = vpop.permute.xlu0 %2041
      %2043 = vrot.lane.b32.xlu0 %v1162, 4
      %v2044 = vpop.permute.xlu0 %2043
      %2045 = vrot.lane.b32.xlu0 %v1174, 4
      %v2046 = vpop.permute.xlu0 %2045
      %2047 = vrot.lane.b32.xlu0 %v1186, 4
      %v2048 = vpop.permute.xlu0 %2047
      %2049 = vrot.lane.b32.xlu0 %v1198, 4
      %v2050 = vpop.permute.xlu0 %2049
      %2051 = vrot.lane.b32.xlu0 %v1233, 8
      %v2052 = vpop.permute.xlu0 %2051
      %2053 = vrot.lane.b32.xlu0 %v1236, 8
      %v2054 = vpop.permute.xlu0 %2053
      %2055 = vrot.lane.b32.xlu0 %v1239, 8
      %v2056 = vpop.permute.xlu0 %2055
      %2057 = vrot.lane.b32.xlu0 %v1242, 8
      %v2058 = vpop.permute.xlu0 %2057
      %2059 = vrot.lane.b32.xlu0 %v1245, 8
      %v2060 = vpop.permute.xlu0 %2059
      %2061 = vrot.lane.b32.xlu0 %v1248, 8
      %v2062 = vpop.permute.xlu0 %2061
      %2063 = vrot.lane.b32.xlu0 %v1251, 8
      %v2064 = vpop.permute.xlu0 %2063
      %2065 = vrot.lane.b32.xlu0 %v1254, 8
      %v2066 = vpop.permute.xlu0 %2065
      %2067 = vrot.lane.b32.xlu0 %v1257, 8
      %v2068 = vpop.permute.xlu0 %2067
      %2069 = vrot.lane.b32.xlu0 %v1260, 8
      %v2070 = vpop.permute.xlu0 %2069
      %2071 = vrot.lane.b32.xlu0 %v1263, 8
      %v2072 = vpop.permute.xlu0 %2071
      %2073 = vrot.lane.b32.xlu0 %v1266, 8
      %v2074 = vpop.permute.xlu0 %2073
      %2075 = vrot.lane.b32.xlu0 %v1269, 8
      %v2076 = vpop.permute.xlu0 %2075
      %2077 = vrot.lane.b32.xlu0 %v1272, 8
      %v2078 = vpop.permute.xlu0 %2077
      %2079 = vrot.lane.b32.xlu0 %v1275, 8
      %v2080 = vpop.permute.xlu0 %2079
      %2081 = vrot.lane.b32.xlu0 %v1278, 8
      %v2082 = vpop.permute.xlu0 %2081
      %v2115 = vunpack.c.l.b16 %v365
      %v2116 = vunpack.c.l.b16 %v366
      %v2117 = vunpack.c.l.b16 %v368
      %v2118 = vunpack.c.l.b16 %v369
      %v2119 = vunpack.c.l.b16 %v371
      %v2120 = vunpack.c.l.b16 %v372
      %v2121 = vunpack.c.l.b16 %v374
      %v2122 = vunpack.c.l.b16 %v375
      %v2123 = vunpack.c.l.b16 %v377
      %v2124 = vunpack.c.l.b16 %v378
      %v2125 = vunpack.c.l.b16 %v380
      %v2126 = vunpack.c.l.b16 %v381
      %v2127 = vunpack.c.l.b16 %v383
      %v2128 = vunpack.c.l.b16 %v384
      %v2129 = vunpack.c.l.b16 %v386
      %v2130 = vunpack.c.l.b16 %v387
      %v2131 = vunpack.c.l.b16 %v389
      %v2132 = vunpack.c.l.b16 %v390
      %v2133 = vunpack.c.l.b16 %v392
      %v2134 = vunpack.c.l.b16 %v393
      %v2135 = vunpack.c.l.b16 %v395
      %v2136 = vunpack.c.l.b16 %v396
      %v2137 = vunpack.c.l.b16 %v398
      %v2138 = vunpack.c.l.b16 %v399
      %v2139 = vunpack.c.l.b16 %v401
      %v2140 = vunpack.c.l.b16 %v402
      %v2141 = vunpack.c.l.b16 %v404
      %v2142 = vunpack.c.l.b16 %v405
      %v2143 = vunpack.c.l.b16 %v407
      %v2144 = vunpack.c.l.b16 %v408
      %v2145 = vunpack.c.l.b16 %v410
      %v2146 = vunpack.c.l.b16 %v411
      %v2147 = vpack.c.b16 %v2116, %v2115
      %v2148 = vpack.c.b16 %v2118, %v2117
      %v2149 = vpack.c.b16 %v2120, %v2119
      %v2150 = vpack.c.b16 %v2122, %v2121
      %v2151 = vpack.c.b16 %v2124, %v2123
      %v2152 = vpack.c.b16 %v2126, %v2125
      %v2153 = vpack.c.b16 %v2128, %v2127
      %v2154 = vpack.c.b16 %v2130, %v2129
      %v2155 = vpack.c.b16 %v2132, %v2131
      %v2156 = vpack.c.b16 %v2134, %v2133
      %v2157 = vpack.c.b16 %v2136, %v2135
      %v2158 = vpack.c.b16 %v2138, %v2137
      %v2159 = vpack.c.b16 %v2140, %v2139
      %v2160 = vpack.c.b16 %v2142, %v2141
      %v2161 = vpack.c.b16 %v2144, %v2143
      %v2162 = vpack.c.b16 %v2146, %v2145
      %2163 = vrot.lane.b32.xlu0 %v2147, 12
      %v2164 = vpop.permute.xlu0 %2163
      %2165 = vrot.lane.b32.xlu0 %v2148, 12
      %v2166 = vpop.permute.xlu0 %2165
      %2167 = vrot.lane.b32.xlu0 %v2149, 12
      %v2168 = vpop.permute.xlu0 %2167
      %2169 = vrot.lane.b32.xlu0 %v2150, 12
      %v2170 = vpop.permute.xlu0 %2169
      %2171 = vrot.lane.b32.xlu0 %v2151, 12
      %v2172 = vpop.permute.xlu0 %2171
      %2173 = vrot.lane.b32.xlu0 %v2152, 12
      %v2174 = vpop.permute.xlu0 %2173
      %2175 = vrot.lane.b32.xlu0 %v2153, 12
      %v2176 = vpop.permute.xlu0 %2175
      %2177 = vrot.lane.b32.xlu0 %v2154, 12
      %v2178 = vpop.permute.xlu0 %2177
      %2179 = vrot.lane.b32.xlu0 %v2155, 12
      %v2180 = vpop.permute.xlu0 %2179
      %2181 = vrot.lane.b32.xlu0 %v2156, 12
      %v2182 = vpop.permute.xlu0 %2181
      %2183 = vrot.lane.b32.xlu0 %v2157, 12
      %v2184 = vpop.permute.xlu0 %2183
      %2185 = vrot.lane.b32.xlu0 %v2158, 12
      %v2186 = vpop.permute.xlu0 %2185
      %2187 = vrot.lane.b32.xlu0 %v2159, 12
      %v2188 = vpop.permute.xlu0 %2187
      %2189 = vrot.lane.b32.xlu0 %v2160, 12
      %v2190 = vpop.permute.xlu0 %2189
      %2191 = vrot.lane.b32.xlu0 %v2161, 12
      %v2192 = vpop.permute.xlu0 %2191
      %2193 = vrot.lane.b32.xlu0 %v2162, 12
      %v2194 = vpop.permute.xlu0 %2193
      %v2211 = vunpack.c.l.b16 %v367
      %v2212 = vunpack.c.l.b16 %v370
      %v2213 = vunpack.c.l.b16 %v373
      %v2214 = vunpack.c.l.b16 %v376
      %v2215 = vunpack.c.l.b16 %v379
      %v2216 = vunpack.c.l.b16 %v382
      %v2217 = vunpack.c.l.b16 %v385
      %v2218 = vunpack.c.l.b16 %v388
      %v2219 = vunpack.c.l.b16 %v391
      %v2220 = vunpack.c.l.b16 %v394
      %v2221 = vunpack.c.l.b16 %v397
      %v2222 = vunpack.c.l.b16 %v400
      %v2223 = vunpack.c.l.b16 %v403
      %v2224 = vunpack.c.l.b16 %v406
      %v2225 = vunpack.c.l.b16 %v409
      %v2226 = vunpack.c.l.b16 %v412
      %v2227 = vpack.c.b16 %v2211, %v2211
      %v2228 = vpack.c.b16 %v2212, %v2212
      %v2229 = vpack.c.b16 %v2213, %v2213
      %v2230 = vpack.c.b16 %v2214, %v2214
      %v2231 = vpack.c.b16 %v2215, %v2215
      %v2232 = vpack.c.b16 %v2216, %v2216
      %v2233 = vpack.c.b16 %v2217, %v2217
      %v2234 = vpack.c.b16 %v2218, %v2218
      %v2235 = vpack.c.b16 %v2219, %v2219
      %v2236 = vpack.c.b16 %v2220, %v2220
      %v2237 = vpack.c.b16 %v2221, %v2221
      %v2238 = vpack.c.b16 %v2222, %v2222
      %v2239 = vpack.c.b16 %v2223, %v2223
      %v2240 = vpack.c.b16 %v2224, %v2224
      %v2241 = vpack.c.b16 %v2225, %v2225
      %v2242 = vpack.c.b16 %v2226, %v2226
      %v2244 = vshrl.u32 %v2147, 16
      %v2246 = vshll.u32 %v2147, 16
      %v2248 = vrot.slane %v2246, 1
      %v2249 = vor.u32 %v2244, %v2248
      %v2251 = vshll.u32 %v2227, 16
      %v2253 = vrot.slane %v2251, 1
      %v2254 = vsel %vm541, %v2249, %v2253
      %v2256 = vshrl.u32 %v2148, 16
      %v2258 = vshll.u32 %v2148, 16
      %v2260 = vrot.slane %v2258, 1
      %v2261 = vor.u32 %v2256, %v2260
      %v2263 = vshll.u32 %v2228, 16
      %v2265 = vrot.slane %v2263, 1
      %v2266 = vsel %vm541, %v2261, %v2265
      %v2268 = vshrl.u32 %v2149, 16
      %v2270 = vshll.u32 %v2149, 16
      %v2272 = vrot.slane %v2270, 1
      %v2273 = vor.u32 %v2268, %v2272
      %v2275 = vshll.u32 %v2229, 16
      %v2277 = vrot.slane %v2275, 1
      %v2278 = vsel %vm541, %v2273, %v2277
      %v2280 = vshrl.u32 %v2150, 16
      %v2282 = vshll.u32 %v2150, 16
      %v2284 = vrot.slane %v2282, 1
      %v2285 = vor.u32 %v2280, %v2284
      %v2287 = vshll.u32 %v2230, 16
      %v2289 = vrot.slane %v2287, 1
      %v2290 = vsel %vm541, %v2285, %v2289
      %v2292 = vshrl.u32 %v2151, 16
      %v2294 = vshll.u32 %v2151, 16
      %v2296 = vrot.slane %v2294, 1
      %v2297 = vor.u32 %v2292, %v2296
      %v2299 = vshll.u32 %v2231, 16
      %v2301 = vrot.slane %v2299, 1
      %v2302 = vsel %vm541, %v2297, %v2301
      %v2304 = vshrl.u32 %v2152, 16
      %v2306 = vshll.u32 %v2152, 16
      %v2308 = vrot.slane %v2306, 1
      %v2309 = vor.u32 %v2304, %v2308
      %v2311 = vshll.u32 %v2232, 16
      %v2313 = vrot.slane %v2311, 1
      %v2314 = vsel %vm541, %v2309, %v2313
      %v2316 = vshrl.u32 %v2153, 16
      %v2318 = vshll.u32 %v2153, 16
      %v2320 = vrot.slane %v2318, 1
      %v2321 = vor.u32 %v2316, %v2320
      %v2323 = vshll.u32 %v2233, 16
      %v2325 = vrot.slane %v2323, 1
      %v2326 = vsel %vm541, %v2321, %v2325
      %v2328 = vshrl.u32 %v2154, 16
      %v2330 = vshll.u32 %v2154, 16
      %v2332 = vrot.slane %v2330, 1
      %v2333 = vor.u32 %v2328, %v2332
      %v2335 = vshll.u32 %v2234, 16
      %v2337 = vrot.slane %v2335, 1
      %v2338 = vsel %vm541, %v2333, %v2337
      %v2340 = vshrl.u32 %v2155, 16
      %v2342 = vshll.u32 %v2155, 16
      %v2344 = vrot.slane %v2342, 1
      %v2345 = vor.u32 %v2340, %v2344
      %v2347 = vshll.u32 %v2235, 16
      %v2349 = vrot.slane %v2347, 1
      %v2350 = vsel %vm541, %v2345, %v2349
      %v2352 = vshrl.u32 %v2156, 16
      %v2354 = vshll.u32 %v2156, 16
      %v2356 = vrot.slane %v2354, 1
      %v2357 = vor.u32 %v2352, %v2356
      %v2359 = vshll.u32 %v2236, 16
      %v2361 = vrot.slane %v2359, 1
      %v2362 = vsel %vm541, %v2357, %v2361
      %v2364 = vshrl.u32 %v2157, 16
      %v2366 = vshll.u32 %v2157, 16
      %v2368 = vrot.slane %v2366, 1
      %v2369 = vor.u32 %v2364, %v2368
      %v2371 = vshll.u32 %v2237, 16
      %v2373 = vrot.slane %v2371, 1
      %v2374 = vsel %vm541, %v2369, %v2373
      %v2376 = vshrl.u32 %v2158, 16
      %v2378 = vshll.u32 %v2158, 16
      %v2380 = vrot.slane %v2378, 1
      %v2381 = vor.u32 %v2376, %v2380
      %v2383 = vshll.u32 %v2238, 16
      %v2385 = vrot.slane %v2383, 1
      %v2386 = vsel %vm541, %v2381, %v2385
      %v2388 = vshrl.u32 %v2159, 16
      %v2390 = vshll.u32 %v2159, 16
      %v2392 = vrot.slane %v2390, 1
      %v2393 = vor.u32 %v2388, %v2392
      %v2395 = vshll.u32 %v2239, 16
      %v2397 = vrot.slane %v2395, 1
      %v2398 = vsel %vm541, %v2393, %v2397
      %v2400 = vshrl.u32 %v2160, 16
      %v2402 = vshll.u32 %v2160, 16
      %v2404 = vrot.slane %v2402, 1
      %v2405 = vor.u32 %v2400, %v2404
      %v2407 = vshll.u32 %v2240, 16
      %v2409 = vrot.slane %v2407, 1
      %v2410 = vsel %vm541, %v2405, %v2409
      %v2412 = vshrl.u32 %v2161, 16
      %v2414 = vshll.u32 %v2161, 16
      %v2416 = vrot.slane %v2414, 1
      %v2417 = vor.u32 %v2412, %v2416
      %v2419 = vshll.u32 %v2241, 16
      %v2421 = vrot.slane %v2419, 1
      %v2422 = vsel %vm541, %v2417, %v2421
      %v2424 = vshrl.u32 %v2162, 16
      %v2426 = vshll.u32 %v2162, 16
      %v2428 = vrot.slane %v2426, 1
      %v2429 = vor.u32 %v2424, %v2428
      %v2431 = vshll.u32 %v2242, 16
      %v2433 = vrot.slane %v2431, 1
      %v2434 = vsel %vm541, %v2429, %v2433
      %2435 = vrot.lane.b32.xlu0 %v2254, 16
      %v2436 = vpop.permute.xlu0 %2435
      %2437 = vrot.lane.b32.xlu0 %v2266, 16
      %v2438 = vpop.permute.xlu0 %2437
      %2439 = vrot.lane.b32.xlu0 %v2278, 16
      %v2440 = vpop.permute.xlu0 %2439
      %2441 = vrot.lane.b32.xlu0 %v2290, 16
      %v2442 = vpop.permute.xlu0 %2441
      %2443 = vrot.lane.b32.xlu0 %v2302, 16
      %v2444 = vpop.permute.xlu0 %2443
      %2445 = vrot.lane.b32.xlu0 %v2314, 16
      %v2446 = vpop.permute.xlu0 %2445
      %2447 = vrot.lane.b32.xlu0 %v2326, 16
      %v2448 = vpop.permute.xlu0 %2447
      %2449 = vrot.lane.b32.xlu0 %v2338, 16
      %v2450 = vpop.permute.xlu0 %2449
      %2451 = vrot.lane.b32.xlu0 %v2350, 16
      %v2452 = vpop.permute.xlu0 %2451
      %2453 = vrot.lane.b32.xlu0 %v2362, 16
      %v2454 = vpop.permute.xlu0 %2453
      %2455 = vrot.lane.b32.xlu0 %v2374, 16
      %v2456 = vpop.permute.xlu0 %2455
      %2457 = vrot.lane.b32.xlu0 %v2386, 16
      %v2458 = vpop.permute.xlu0 %2457
      %2459 = vrot.lane.b32.xlu0 %v2398, 16
      %v2460 = vpop.permute.xlu0 %2459
      %2461 = vrot.lane.b32.xlu0 %v2410, 16
      %v2462 = vpop.permute.xlu0 %2461
      %2463 = vrot.lane.b32.xlu0 %v2422, 16
      %v2464 = vpop.permute.xlu0 %2463
      %2465 = vrot.lane.b32.xlu0 %v2434, 16
      %v2466 = vpop.permute.xlu0 %2465
      %v2467 = vrot.slane %v2147, 1
      %v2468 = vrot.slane %v2227, 1
      %v2469 = vsel %vm766, %v2467, %v2468
      %v2470 = vrot.slane %v2148, 1
      %v2471 = vrot.slane %v2228, 1
      %v2472 = vsel %vm766, %v2470, %v2471
      %v2473 = vrot.slane %v2149, 1
      %v2474 = vrot.slane %v2229, 1
      %v2475 = vsel %vm766, %v2473, %v2474
      %v2476 = vrot.slane %v2150, 1
      %v2477 = vrot.slane %v2230, 1
      %v2478 = vsel %vm766, %v2476, %v2477
      %v2479 = vrot.slane %v2151, 1
      %v2480 = vrot.slane %v2231, 1
      %v2481 = vsel %vm766, %v2479, %v2480
      %v2482 = vrot.slane %v2152, 1
      %v2483 = vrot.slane %v2232, 1
      %v2484 = vsel %vm766, %v2482, %v2483
      %v2485 = vrot.slane %v2153, 1
      %v2486 = vrot.slane %v2233, 1
      %v2487 = vsel %vm766, %v2485, %v2486
      %v2488 = vrot.slane %v2154, 1
      %v2489 = vrot.slane %v2234, 1
      %v2490 = vsel %vm766, %v2488, %v2489
      %v2491 = vrot.slane %v2155, 1
      %v2492 = vrot.slane %v2235, 1
      %v2493 = vsel %vm766, %v2491, %v2492
      %v2494 = vrot.slane %v2156, 1
      %v2495 = vrot.slane %v2236, 1
      %v2496 = vsel %vm766, %v2494, %v2495
      %v2497 = vrot.slane %v2157, 1
      %v2498 = vrot.slane %v2237, 1
      %v2499 = vsel %vm766, %v2497, %v2498
      %v2500 = vrot.slane %v2158, 1
      %v2501 = vrot.slane %v2238, 1
      %v2502 = vsel %vm766, %v2500, %v2501
      %v2503 = vrot.slane %v2159, 1
      %v2504 = vrot.slane %v2239, 1
      %v2505 = vsel %vm766, %v2503, %v2504
      %v2506 = vrot.slane %v2160, 1
      %v2507 = vrot.slane %v2240, 1
      %v2508 = vsel %vm766, %v2506, %v2507
      %v2509 = vrot.slane %v2161, 1
      %v2510 = vrot.slane %v2241, 1
      %v2511 = vsel %vm766, %v2509, %v2510
      %v2512 = vrot.slane %v2162, 1
      %v2513 = vrot.slane %v2242, 1
      %v2514 = vsel %vm766, %v2512, %v2513
      %2515 = vrot.lane.b32.xlu0 %v2469, 20
      %v2516 = vpop.permute.xlu0 %2515
      %2517 = vrot.lane.b32.xlu0 %v2472, 20
      %v2518 = vpop.permute.xlu0 %2517
      %2519 = vrot.lane.b32.xlu0 %v2475, 20
      %v2520 = vpop.permute.xlu0 %2519
      %2521 = vrot.lane.b32.xlu0 %v2478, 20
      %v2522 = vpop.permute.xlu0 %2521
      %2523 = vrot.lane.b32.xlu0 %v2481, 20
      %v2524 = vpop.permute.xlu0 %2523
      %2525 = vrot.lane.b32.xlu0 %v2484, 20
      %v2526 = vpop.permute.xlu0 %2525
      %2527 = vrot.lane.b32.xlu0 %v2487, 20
      %v2528 = vpop.permute.xlu0 %2527
      %2529 = vrot.lane.b32.xlu0 %v2490, 20
      %v2530 = vpop.permute.xlu0 %2529
      %2531 = vrot.lane.b32.xlu0 %v2493, 20
      %v2532 = vpop.permute.xlu0 %2531
      %2533 = vrot.lane.b32.xlu0 %v2496, 20
      %v2534 = vpop.permute.xlu0 %2533
      %2535 = vrot.lane.b32.xlu0 %v2499, 20
      %v2536 = vpop.permute.xlu0 %2535
      %2537 = vrot.lane.b32.xlu0 %v2502, 20
      %v2538 = vpop.permute.xlu0 %2537
      %2539 = vrot.lane.b32.xlu0 %v2505, 20
      %v2540 = vpop.permute.xlu0 %2539
      %2541 = vrot.lane.b32.xlu0 %v2508, 20
      %v2542 = vpop.permute.xlu0 %2541
      %2543 = vrot.lane.b32.xlu0 %v2511, 20
      %v2544 = vpop.permute.xlu0 %2543
      %2545 = vrot.lane.b32.xlu0 %v2514, 20
      %v2546 = vpop.permute.xlu0 %2545
      %v2548 = vsel %vm1311, %v911, %v2020
      %v2550 = vsel %vm1311, %v912, %v2022
      %v2552 = vsel %vm1311, %v913, %v2024
      %v2554 = vsel %vm1311, %v914, %v2026
      %v2556 = vsel %vm1311, %v915, %v2028
      %v2558 = vsel %vm1311, %v916, %v2030
      %v2560 = vsel %vm1311, %v917, %v2032
      %v2562 = vsel %vm1311, %v918, %v2034
      %v2564 = vsel %vm1311, %v919, %v2036
      %v2566 = vsel %vm1311, %v920, %v2038
      %v2568 = vsel %vm1311, %v921, %v2040
      %v2570 = vsel %vm1311, %v922, %v2042
      %v2572 = vsel %vm1311, %v923, %v2044
      %v2574 = vsel %vm1311, %v924, %v2046
      %v2576 = vsel %vm1311, %v925, %v2048
      %v2578 = vsel %vm1311, %v926, %v2050
      %v2580 = vsel %vm1344, %v2548, %v2052
      %v2582 = vsel %vm1344, %v2550, %v2054
      %v2584 = vsel %vm1344, %v2552, %v2056
      %v2586 = vsel %vm1344, %v2554, %v2058
      %v2588 = vsel %vm1344, %v2556, %v2060
      %v2590 = vsel %vm1344, %v2558, %v2062
      %v2592 = vsel %vm1344, %v2560, %v2064
      %v2594 = vsel %vm1344, %v2562, %v2066
      %v2596 = vsel %vm1344, %v2564, %v2068
      %v2598 = vsel %vm1344, %v2566, %v2070
      %v2600 = vsel %vm1344, %v2568, %v2072
      %v2602 = vsel %vm1344, %v2570, %v2074
      %v2604 = vsel %vm1344, %v2572, %v2076
      %v2606 = vsel %vm1344, %v2574, %v2078
      %v2608 = vsel %vm1344, %v2576, %v2080
      %v2610 = vsel %vm1344, %v2578, %v2082
      %v2612 = vsel %vm1377, %v2580, %v2164
      %v2614 = vsel %vm1377, %v2582, %v2166
      %v2616 = vsel %vm1377, %v2584, %v2168
      %v2618 = vsel %vm1377, %v2586, %v2170
      %v2620 = vsel %vm1377, %v2588, %v2172
      %v2622 = vsel %vm1377, %v2590, %v2174
      %v2624 = vsel %vm1377, %v2592, %v2176
      %v2626 = vsel %vm1377, %v2594, %v2178
      %v2628 = vsel %vm1377, %v2596, %v2180
      %v2630 = vsel %vm1377, %v2598, %v2182
      %v2632 = vsel %vm1377, %v2600, %v2184
      %v2634 = vsel %vm1377, %v2602, %v2186
      %v2636 = vsel %vm1377, %v2604, %v2188
      %v2638 = vsel %vm1377, %v2606, %v2190
      %v2640 = vsel %vm1377, %v2608, %v2192
      %v2642 = vsel %vm1377, %v2610, %v2194
      %v2644 = vsel %vm1410, %v2612, %v2436
      %v2646 = vsel %vm1410, %v2614, %v2438
      %v2648 = vsel %vm1410, %v2616, %v2440
      %v2650 = vsel %vm1410, %v2618, %v2442
      %v2652 = vsel %vm1410, %v2620, %v2444
      %v2654 = vsel %vm1410, %v2622, %v2446
      %v2656 = vsel %vm1410, %v2624, %v2448
      %v2658 = vsel %vm1410, %v2626, %v2450
      %v2660 = vsel %vm1410, %v2628, %v2452
      %v2662 = vsel %vm1410, %v2630, %v2454
      %v2664 = vsel %vm1410, %v2632, %v2456
      %v2666 = vsel %vm1410, %v2634, %v2458
      %v2668 = vsel %vm1410, %v2636, %v2460
      %v2670 = vsel %vm1410, %v2638, %v2462
      %v2672 = vsel %vm1410, %v2640, %v2464
      %v2674 = vsel %vm1410, %v2642, %v2466
      %v2676 = vsel %vm1443, %v2644, %v2516
      %v2678 = vsel %vm1443, %v2646, %v2518
      %v2680 = vsel %vm1443, %v2648, %v2520
      %v2682 = vsel %vm1443, %v2650, %v2522
      %v2684 = vsel %vm1443, %v2652, %v2524
      %v2686 = vsel %vm1443, %v2654, %v2526
      %v2688 = vsel %vm1443, %v2656, %v2528
      %v2690 = vsel %vm1443, %v2658, %v2530
      %v2692 = vsel %vm1443, %v2660, %v2532
      %v2694 = vsel %vm1443, %v2662, %v2534
      %v2696 = vsel %vm1443, %v2664, %v2536
      %v2698 = vsel %vm1443, %v2666, %v2538
      %v2700 = vsel %vm1443, %v2668, %v2540
      %v2702 = vsel %vm1443, %v2670, %v2542
      %v2704 = vsel %vm1443, %v2672, %v2544
      %v2706 = vsel %vm1443, %v2674, %v2546
      %s2707 = scalar_lea.vmem %s1, 12
      %v2708 = vld [vmem:[%s2707] sm:$0xf]
      %v2709 = vld [vmem:[%s2707 + $0x4] sm:$0xf]
      %v2710 = vld [vmem:[%s2707 + $0x8] sm:$0xf]
      %v2714 = vunpack.c.l.b16 %v2708
      %v2715 = vunpack.c.l.b16 %v2709
      %v2716 = vunpack.c.l.b16 %v2710
      %v2717 = vpack.c.b16 %v2715, %v2714
      %v2718 = vpack.c.b16 %v2716, %v2716
      %v2720 = vsel %vm1488, %v2676, 0
      %v2722 = vsel %vm1488, %v2678, 0
      %v2724 = vsel %vm1488, %v2680, 0
      %v2726 = vsel %vm1488, %v2682, 0
      %v2728 = vsel %vm1488, %v2684, 0
      %v2730 = vsel %vm1488, %v2686, 0
      %v2732 = vsel %vm1488, %v2688, 0
      %v2734 = vsel %vm1488, %v2690, 0
      %v2736 = vsel %vm1488, %v2692, 0
      %v2738 = vsel %vm1488, %v2694, 0
      %v2740 = vsel %vm1488, %v2696, 0
      %v2742 = vsel %vm1488, %v2698, 0
      %v2744 = vsel %vm1488, %v2700, 0
      %v2746 = vsel %vm1488, %v2702, 0
      %v2748 = vsel %vm1488, %v2704, 0
      %v2750 = vsel %vm1488, %v2706, 0
      %v2753 = vsel %vm1521, %v2718, 0
      %2755 = vmatprep.subr.bf16.mxu0 0
      %2756 = vmatpush1.bf16.msra.mxu0 %v2717
      %2757 = vmatprep.subr.bf16.mxu0 0
      %2758 = vmatpush1.bf16.msra.mxu0 %v2753
      %2759 = vmatprep.subr.bf16.mxu0 0
      %2760 = vmatpush1.bf16.msra.mxu0 0
      %2761 = vmatprep.subr.bf16.mxu0 0
      %2762 = vmatpush1.bf16.msra.mxu0 0
      %2763 = vmatprep.subr.bf16.mxu0 0
      %2764 = vmatpush1.bf16.msra.mxu0 0
      %2765 = vmatprep.subr.bf16.mxu0 0
      %2766 = vmatpush1.bf16.msra.mxu0 0
      %2767 = vmatprep.subr.bf16.mxu0 0
      %2768 = vmatpush1.bf16.msra.mxu0 0
      %2769 = vmatprep.subr.bf16.mxu0 0
      %2770 = vmatpush1.bf16.msra.mxu0 0
      %2771 = vmatprep.subr.bf16.mxu0 0
      %2772 = vmatpush1.bf16.msra.mxu0 0
      %2773 = vmatprep.subr.bf16.mxu0 0
      %2774 = vmatpush1.bf16.msra.mxu0 0
      %2775 = vmatprep.subr.bf16.mxu0 0
      %2776 = vmatpush1.bf16.msra.mxu0 0
      %2777 = vmatprep.subr.bf16.mxu0 0
      %2778 = vmatpush1.bf16.msra.mxu0 0
      %2779 = vmatprep.subr.bf16.mxu0 0
      %2780 = vmatpush1.bf16.msra.mxu0 0
      %2781 = vmatprep.subr.bf16.mxu0 0
      %2782 = vmatpush1.bf16.msra.mxu0 0
      %2783 = vmatprep.subr.bf16.mxu0 0
      %2784 = vmatpush1.bf16.msra.mxu0 0
      %2785 = vmatprep.subr.bf16.mxu0 0
      %2786 = vmatpush1.bf16.msra.mxu0 0
      %2787 = vmatprep.mubr.bf16.mxu0 0
      %2788 = vmatmul.mubr.bf16.gmra.mrb[0].mxu0 %v2720
      %v2789 = vpop.f32.mrb[0].mxu0
      %v2790 = vadd.f32 0.0, %v2789
      %v2791 = vpop.f32.mrb[0].mxu0
      %v2792 = vpop.f32.mrb[0].mxu0
      %v2793 = vadd.f32 0.0, %v2792
      %v2794 = vpop.f32.mrb[0].mxu0
      %2795 = vmatprep.mubr.bf16.mxu0 0
      %2796 = vmatmul.mubr.bf16.gmra.mrb[0].mxu0 %v2722
      %v2797 = vpop.f32.mrb[0].mxu0
      %v2798 = vadd.f32 0.0, %v2797
      %v2799 = vpop.f32.mrb[0].mxu0
      %v2800 = vpop.f32.mrb[0].mxu0
      %v2801 = vadd.f32 0.0, %v2800
      %v2802 = vpop.f32.mrb[0].mxu0
      %2803 = vmatprep.mubr.bf16.mxu0 0
      %2804 = vmatmul.mubr.bf16.gmra.mrb[0].mxu0 %v2724
      %v2805 = vpop.f32.mrb[0].mxu0
      %v2806 = vadd.f32 0.0, %v2805
      %v2807 = vpop.f32.mrb[0].mxu0
      %v2808 = vpop.f32.mrb[0].mxu0
      %v2809 = vadd.f32 0.0, %v2808
      %v2810 = vpop.f32.mrb[0].mxu0
      %2811 = vmatprep.mubr.bf16.mxu0 0
      %2812 = vmatmul.mubr.bf16.gmra.mrb[0].mxu0 %v2726
      %v2813 = vpop.f32.mrb[0].mxu0
      %v2814 = vadd.f32 0.0, %v2813
      %v2815 = vpop.f32.mrb[0].mxu0
      %v2816 = vpop.f32.mrb[0].mxu0
      %v2817 = vadd.f32 0.0, %v2816
      %v2818 = vpop.f32.mrb[0].mxu0
      %2819 = vmatprep.mubr.bf16.mxu0 0
      %2820 = vmatmul.mubr.bf16.gmra.mrb[0].mxu0 %v2728
      %v2821 = vpop.f32.mrb[0].mxu0
      %v2822 = vadd.f32 0.0, %v2821
      %v2823 = vpop.f32.mrb[0].mxu0
      %v2824 = vpop.f32.mrb[0].mxu0
      %v2825 = vadd.f32 0.0, %v2824
      %v2826 = vpop.f32.mrb[0].mxu0
      %2827 = vmatprep.mubr.bf16.mxu0 0
      %2828 = vmatmul.mubr.bf16.gmra.mrb[0].mxu0 %v2730
      %v2829 = vpop.f32.mrb[0].mxu0
      %v2830 = vadd.f32 0.0, %v2829
      %v2831 = vpop.f32.mrb[0].mxu0
      %v2832 = vpop.f32.mrb[0].mxu0
      %v2833 = vadd.f32 0.0, %v2832
      %v2834 = vpop.f32.mrb[0].mxu0
      %2835 = vmatprep.mubr.bf16.mxu0 0
      %2836 = vmatmul.mubr.bf16.gmra.mrb[0].mxu0 %v2732
      %v2837 = vpop.f32.mrb[0].mxu0
      %v2838 = vadd.f32 0.0, %v2837
      %v2839 = vpop.f32.mrb[0].mxu0
      %v2840 = vpop.f32.mrb[0].mxu0
      %v2841 = vadd.f32 0.0, %v2840
      %v2842 = vpop.f32.mrb[0].mxu0
      %2843 = vmatprep.mubr.bf16.mxu0 0
      %2844 = vmatmul.mubr.bf16.gmra.mrb[0].mxu0 %v2734
      %v2845 = vpop.f32.mrb[0].mxu0
      %v2846 = vadd.f32 0.0, %v2845
      %v2847 = vpop.f32.mrb[0].mxu0
      %v2848 = vpop.f32.mrb[0].mxu0
      %v2849 = vadd.f32 0.0, %v2848
      %v2850 = vpop.f32.mrb[0].mxu0
      %2851 = vmatprep.mubr.bf16.mxu0 0
      %2852 = vmatmul.mubr.bf16.gmra.mrb[0].mxu0 %v2736
      %v2853 = vpop.f32.mrb[0].mxu0
      %v2854 = vadd.f32 0.0, %v2853
      %v2855 = vpop.f32.mrb[0].mxu0
      %v2856 = vpop.f32.mrb[0].mxu0
      %v2857 = vadd.f32 0.0, %v2856
      %v2858 = vpop.f32.mrb[0].mxu0
      %2859 = vmatprep.mubr.bf16.mxu0 0
      %2860 = vmatmul.mubr.bf16.gmra.mrb[0].mxu0 %v2738
      %v2861 = vpop.f32.mrb[0].mxu0
      %v2862 = vadd.f32 0.0, %v2861
      %v2863 = vpop.f32.mrb[0].mxu0
      %v2864 = vpop.f32.mrb[0].mxu0
      %v2865 = vadd.f32 0.0, %v2864
      %v2866 = vpop.f32.mrb[0].mxu0
      %2867 = vmatprep.mubr.bf16.mxu0 0
      %2868 = vmatmul.mubr.bf16.gmra.mrb[0].mxu0 %v2740
      %v2869 = vpop.f32.mrb[0].mxu0
      %v2870 = vadd.f32 0.0, %v2869
      %v2871 = vpop.f32.mrb[0].mxu0
      %v2872 = vpop.f32.mrb[0].mxu0
      %v2873 = vadd.f32 0.0, %v2872
      %v2874 = vpop.f32.mrb[0].mxu0
      %2875 = vmatprep.mubr.bf16.mxu0 0
      %2876 = vmatmul.mubr.bf16.gmra.mrb[0].mxu0 %v2742
      %v2877 = vpop.f32.mrb[0].mxu0
      %v2878 = vadd.f32 0.0, %v2877
      %v2879 = vpop.f32.mrb[0].mxu0
      %v2880 = vpop.f32.mrb[0].mxu0
      %v2881 = vadd.f32 0.0, %v2880
      %v2882 = vpop.f32.mrb[0].mxu0
      %2883 = vmatprep.mubr.bf16.mxu0 0
      %2884 = vmatmul.mubr.bf16.gmra.mrb[0].mxu0 %v2744
      %v2885 = vpop.f32.mrb[0].mxu0
      %v2886 = vadd.f32 0.0, %v2885
      %v2887 = vpop.f32.mrb[0].mxu0
      %v2888 = vpop.f32.mrb[0].mxu0
      %v2889 = vadd.f32 0.0, %v2888
      %v2890 = vpop.f32.mrb[0].mxu0
      %2891 = vmatprep.mubr.bf16.mxu0 0
      %2892 = vmatmul.mubr.bf16.gmra.mrb[0].mxu0 %v2746
      %v2893 = vpop.f32.mrb[0].mxu0
      %v2894 = vadd.f32 0.0, %v2893
      %v2895 = vpop.f32.mrb[0].mxu0
      %v2896 = vpop.f32.mrb[0].mxu0
      %v2897 = vadd.f32 0.0, %v2896
      %v2898 = vpop.f32.mrb[0].mxu0
      %2899 = vmatprep.mubr.bf16.mxu0 0
      %2900 = vmatmul.mubr.bf16.gmra.mrb[0].mxu0 %v2748
      %v2901 = vpop.f32.mrb[0].mxu0
      %v2902 = vadd.f32 0.0, %v2901
      %v2903 = vpop.f32.mrb[0].mxu0
      %v2904 = vpop.f32.mrb[0].mxu0
      %v2905 = vadd.f32 0.0, %v2904
      %v2906 = vpop.f32.mrb[0].mxu0
      %2907 = vmatprep.mubr.bf16.mxu0 0
      %2908 = vmatmul.mubr.bf16.gmra.mrb[0].mxu0 %v2750
      %v2909 = vpop.f32.mrb[0].mxu0
      %v2910 = vadd.f32 0.0, %v2909
      %v2911 = vpop.f32.mrb[0].mxu0
      %v2912 = vpop.f32.mrb[0].mxu0
      %v2913 = vadd.f32 0.0, %v2912
      %v2914 = vpop.f32.mrb[0].mxu0
      %2915 = vdwg.mxu0
      %v2916 = vsel %vm1410, %v2790, 0.0
      %v2917 = vsel %vm1410, %v2793, 0.0
      %v2918 = vadd.f32 %v2916, %v2917
      %v2919 = vsel %vm1410, %v2798, 0.0
      %v2920 = vadd.f32 %v2918, %v2919
      %v2921 = vsel %vm1410, %v2801, 0.0
      %v2922 = vadd.f32 %v2920, %v2921
      %v2923 = vsel %vm1410, %v2806, 0.0
      %v2924 = vadd.f32 %v2922, %v2923
      %v2925 = vsel %vm1410, %v2809, 0.0
      %v2926 = vadd.f32 %v2924, %v2925
      %v2927 = vsel %vm1410, %v2814, 0.0
      %v2928 = vadd.f32 %v2926, %v2927
      %v2929 = vsel %vm1410, %v2817, 0.0
      %v2930 = vadd.f32 %v2928, %v2929
      %v2931 = vsel %vm1410, %v2822, 0.0
      %v2932 = vadd.f32 %v2930, %v2931
      %v2933 = vsel %vm1410, %v2825, 0.0
      %v2934 = vadd.f32 %v2932, %v2933
      %v2935 = vsel %vm1410, %v2830, 0.0
      %v2936 = vadd.f32 %v2934, %v2935
      %v2937 = vsel %vm1410, %v2833, 0.0
      %v2938 = vadd.f32 %v2936, %v2937
      %v2939 = vsel %vm1410, %v2838, 0.0
      %v2940 = vadd.f32 %v2938, %v2939
      %v2941 = vsel %vm1410, %v2841, 0.0
      %v2942 = vadd.f32 %v2940, %v2941
      %v2943 = vsel %vm1410, %v2846, 0.0
      %v2944 = vadd.f32 %v2942, %v2943
      %v2945 = vsel %vm1410, %v2849, 0.0
      %v2946 = vadd.f32 %v2944, %v2945
      %v2947 = vsel %vm1410, %v2854, 0.0
      %v2948 = vadd.f32 %v2946, %v2947
      %v2949 = vsel %vm1410, %v2857, 0.0
      %v2950 = vadd.f32 %v2948, %v2949
      %v2951 = vsel %vm1410, %v2862, 0.0
      %v2952 = vadd.f32 %v2950, %v2951
      %v2953 = vsel %vm1410, %v2865, 0.0
      %v2954 = vadd.f32 %v2952, %v2953
      %v2955 = vsel %vm1410, %v2870, 0.0
      %v2956 = vadd.f32 %v2954, %v2955
      %v2957 = vsel %vm1410, %v2873, 0.0
      %v2958 = vadd.f32 %v2956, %v2957
      %v2959 = vsel %vm1410, %v2878, 0.0
      %v2960 = vadd.f32 %v2958, %v2959
      %v2961 = vsel %vm1410, %v2881, 0.0
      %v2962 = vadd.f32 %v2960, %v2961
      %v2963 = vsel %vm1410, %v2886, 0.0
      %v2964 = vadd.f32 %v2962, %v2963
      %v2965 = vsel %vm1410, %v2889, 0.0
      %v2966 = vadd.f32 %v2964, %v2965
      %v2967 = vsel %vm1410, %v2894, 0.0
      %v2968 = vadd.f32 %v2966, %v2967
      %v2969 = vsel %vm1410, %v2897, 0.0
      %v2970 = vadd.f32 %v2968, %v2969
      %v2971 = vsel %vm1410, %v2902, 0.0
      %v2972 = vadd.f32 %v2970, %v2971
      %v2973 = vsel %vm1410, %v2905, 0.0
      %v2974 = vadd.f32 %v2972, %v2973
      %v2975 = vsel %vm1410, %v2910, 0.0
      %v2976 = vadd.f32 %v2974, %v2975
      %v2977 = vsel %vm1410, %v2913, 0.0
      %v2978 = vadd.f32 %v2976, %v2977
      %v2979 = vrot.slane %v2978, 4
      %v2980 = vadd.f32 %v2978, %v2979
      %v2981 = vrot.slane %v2980, 2
      %v2982 = vadd.f32 %v2980, %v2981
      %v2983 = vrot.slane %v2982, 1
      %v2984 = vadd.f32 %v2982, %v2983
      %v2985 = vadd.f32 %v1755, %v2984
      %v2986 = vmul.f32 %v2790, %v2790
      %v2987 = vmul.f32 %v2793, %v2793
      %v2988 = vmul.f32 %v2798, %v2798
      %v2989 = vmul.f32 %v2801, %v2801
      %v2990 = vmul.f32 %v2806, %v2806
      %v2991 = vmul.f32 %v2809, %v2809
      %v2992 = vmul.f32 %v2814, %v2814
      %v2993 = vmul.f32 %v2817, %v2817
      %v2994 = vmul.f32 %v2822, %v2822
      %v2995 = vmul.f32 %v2825, %v2825
      %v2996 = vmul.f32 %v2830, %v2830
      %v2997 = vmul.f32 %v2833, %v2833
      %v2998 = vmul.f32 %v2838, %v2838
      %v2999 = vmul.f32 %v2841, %v2841
      %v3000 = vmul.f32 %v2846, %v2846
      %v3001 = vmul.f32 %v2849, %v2849
      %v3002 = vmul.f32 %v2854, %v2854
      %v3003 = vmul.f32 %v2857, %v2857
      %v3004 = vmul.f32 %v2862, %v2862
      %v3005 = vmul.f32 %v2865, %v2865
      %v3006 = vmul.f32 %v2870, %v2870
      %v3007 = vmul.f32 %v2873, %v2873
      %v3008 = vmul.f32 %v2878, %v2878
      %v3009 = vmul.f32 %v2881, %v2881
      %v3010 = vmul.f32 %v2886, %v2886
      %v3011 = vmul.f32 %v2889, %v2889
      %v3012 = vmul.f32 %v2894, %v2894
      %v3013 = vmul.f32 %v2897, %v2897
      %v3014 = vmul.f32 %v2902, %v2902
      %v3015 = vmul.f32 %v2905, %v2905
      %v3016 = vmul.f32 %v2910, %v2910
      %v3017 = vmul.f32 %v2913, %v2913
      %v3018 = vsel %vm1410, %v2986, 0.0
      %v3019 = vsel %vm1410, %v2987, 0.0
      %v3020 = vadd.f32 %v3018, %v3019
      %v3021 = vsel %vm1410, %v2988, 0.0
      %v3022 = vadd.f32 %v3020, %v3021
      %v3023 = vsel %vm1410, %v2989, 0.0
      %v3024 = vadd.f32 %v3022, %v3023
      %v3025 = vsel %vm1410, %v2990, 0.0
      %v3026 = vadd.f32 %v3024, %v3025
      %v3027 = vsel %vm1410, %v2991, 0.0
      %v3028 = vadd.f32 %v3026, %v3027
      %v3029 = vsel %vm1410, %v2992, 0.0
      %v3030 = vadd.f32 %v3028, %v3029
      %v3031 = vsel %vm1410, %v2993, 0.0
      %v3032 = vadd.f32 %v3030, %v3031
      %v3033 = vsel %vm1410, %v2994, 0.0
      %v3034 = vadd.f32 %v3032, %v3033
      %v3035 = vsel %vm1410, %v2995, 0.0
      %v3036 = vadd.f32 %v3034, %v3035
      %v3037 = vsel %vm1410, %v2996, 0.0
      %v3038 = vadd.f32 %v3036, %v3037
      %v3039 = vsel %vm1410, %v2997, 0.0
      %v3040 = vadd.f32 %v3038, %v3039
      %v3041 = vsel %vm1410, %v2998, 0.0
      %v3042 = vadd.f32 %v3040, %v3041
      %v3043 = vsel %vm1410, %v2999, 0.0
      %v3044 = vadd.f32 %v3042, %v3043
      %v3045 = vsel %vm1410, %v3000, 0.0
      %v3046 = vadd.f32 %v3044, %v3045
      %v3047 = vsel %vm1410, %v3001, 0.0
      %v3048 = vadd.f32 %v3046, %v3047
      %v3049 = vsel %vm1410, %v3002, 0.0
      %v3050 = vadd.f32 %v3048, %v3049
      %v3051 = vsel %vm1410, %v3003, 0.0
      %v3052 = vadd.f32 %v3050, %v3051
      %v3053 = vsel %vm1410, %v3004, 0.0
      %v3054 = vadd.f32 %v3052, %v3053
      %v3055 = vsel %vm1410, %v3005, 0.0
      %v3056 = vadd.f32 %v3054, %v3055
      %v3057 = vsel %vm1410, %v3006, 0.0
      %v3058 = vadd.f32 %v3056, %v3057
      %v3059 = vsel %vm1410, %v3007, 0.0
      %v3060 = vadd.f32 %v3058, %v3059
      %v3061 = vsel %vm1410, %v3008, 0.0
      %v3062 = vadd.f32 %v3060, %v3061
      %v3063 = vsel %vm1410, %v3009, 0.0
      %v3064 = vadd.f32 %v3062, %v3063
      %v3065 = vsel %vm1410, %v3010, 0.0
      %v3066 = vadd.f32 %v3064, %v3065
      %v3067 = vsel %vm1410, %v3011, 0.0
      %v3068 = vadd.f32 %v3066, %v3067
      %v3069 = vsel %vm1410, %v3012, 0.0
      %v3070 = vadd.f32 %v3068, %v3069
      %v3071 = vsel %vm1410, %v3013, 0.0
      %v3072 = vadd.f32 %v3070, %v3071
      %v3073 = vsel %vm1410, %v3014, 0.0
      %v3074 = vadd.f32 %v3072, %v3073
      %v3075 = vsel %vm1410, %v3015, 0.0
      %v3076 = vadd.f32 %v3074, %v3075
      %v3077 = vsel %vm1410, %v3016, 0.0
      %v3078 = vadd.f32 %v3076, %v3077
      %v3079 = vsel %vm1410, %v3017, 0.0
      %v3080 = vadd.f32 %v3078, %v3079
      %v3081 = vrot.slane %v3080, 4
      %v3082 = vadd.f32 %v3080, %v3081
      %v3083 = vrot.slane %v3082, 2
      %v3084 = vadd.f32 %v3082, %v3083
      %v3085 = vrot.slane %v3084, 1
      %v3086 = vadd.f32 %v3084, %v3085
      %v3087 = vadd.f32 %v1857, %v3086
      %v3088 = vpack.c.bf16 %v2793, %v2790
      %v3089 = vpack.c.bf16 %v2801, %v2798
      %v3090 = vpack.c.bf16 %v2809, %v2806
      %v3091 = vpack.c.bf16 %v2817, %v2814
      %v3092 = vpack.c.bf16 %v2825, %v2822
      %v3093 = vpack.c.bf16 %v2833, %v2830
      %v3094 = vpack.c.bf16 %v2841, %v2838
      %v3095 = vpack.c.bf16 %v2849, %v2846
      %v3096 = vpack.c.bf16 %v2857, %v2854
      %v3097 = vpack.c.bf16 %v2865, %v2862
      %v3098 = vpack.c.bf16 %v2873, %v2870
      %v3099 = vpack.c.bf16 %v2881, %v2878
      %v3100 = vpack.c.bf16 %v2889, %v2886
      %v3101 = vpack.c.bf16 %v2897, %v2894
      %v3102 = vpack.c.bf16 %v2905, %v2902
      %v3103 = vpack.c.bf16 %v2913, %v2910
      %v3120 = vunpack.c.l.b16 %v3088
      %v3121 = vunpack.c.h.b16 %v3088
      %v3122 = vunpack.c.l.b16 %v3089
      %v3123 = vunpack.c.h.b16 %v3089
      %v3124 = vunpack.c.l.b16 %v3090
      %v3125 = vunpack.c.h.b16 %v3090
      %v3126 = vunpack.c.l.b16 %v3091
      %v3127 = vunpack.c.h.b16 %v3091
      %v3128 = vunpack.c.l.b16 %v3092
      %v3129 = vunpack.c.h.b16 %v3092
      %v3130 = vunpack.c.l.b16 %v3093
      %v3131 = vunpack.c.h.b16 %v3093
      %v3132 = vunpack.c.l.b16 %v3094
      %v3133 = vunpack.c.h.b16 %v3094
      %v3134 = vunpack.c.l.b16 %v3095
      %v3135 = vunpack.c.h.b16 %v3095
      %v3136 = vunpack.c.l.b16 %v3096
      %v3137 = vunpack.c.h.b16 %v3096
      %v3138 = vunpack.c.l.b16 %v3097
      %v3139 = vunpack.c.h.b16 %v3097
      %v3140 = vunpack.c.l.b16 %v3098
      %v3141 = vunpack.c.h.b16 %v3098
      %v3142 = vunpack.c.l.b16 %v3099
      %v3143 = vunpack.c.h.b16 %v3099
      %v3144 = vunpack.c.l.b16 %v3100
      %v3145 = vunpack.c.h.b16 %v3100
      %v3146 = vunpack.c.l.b16 %v3101
      %v3147 = vunpack.c.h.b16 %v3101
      %v3148 = vunpack.c.l.b16 %v3102
      %v3149 = vunpack.c.h.b16 %v3102
      %v3150 = vunpack.c.l.b16 %v3103
      %v3151 = vunpack.c.h.b16 %v3103
      %v3152 = vpack.c.b16 %v3120, %v3120
      %v3153 = vpack.c.b16 %v3121, %v3121
      %v3154 = vpack.c.b16 %v3122, %v3122
      %v3155 = vpack.c.b16 %v3123, %v3123
      %v3156 = vpack.c.b16 %v3124, %v3124
      %v3157 = vpack.c.b16 %v3125, %v3125
      %v3158 = vpack.c.b16 %v3126, %v3126
      %v3159 = vpack.c.b16 %v3127, %v3127
      %v3160 = vpack.c.b16 %v3128, %v3128
      %v3161 = vpack.c.b16 %v3129, %v3129
      %v3162 = vpack.c.b16 %v3130, %v3130
      %v3163 = vpack.c.b16 %v3131, %v3131
      %v3164 = vpack.c.b16 %v3132, %v3132
      %v3165 = vpack.c.b16 %v3133, %v3133
      %v3166 = vpack.c.b16 %v3134, %v3134
      %v3167 = vpack.c.b16 %v3135, %v3135
      %v3168 = vpack.c.b16 %v3136, %v3136
      %v3169 = vpack.c.b16 %v3137, %v3137
      %v3170 = vpack.c.b16 %v3138, %v3138
      %v3171 = vpack.c.b16 %v3139, %v3139
      %v3172 = vpack.c.b16 %v3140, %v3140
      %v3173 = vpack.c.b16 %v3141, %v3141
      %v3174 = vpack.c.b16 %v3142, %v3142
      %v3175 = vpack.c.b16 %v3143, %v3143
      %v3176 = vpack.c.b16 %v3144, %v3144
      %v3177 = vpack.c.b16 %v3145, %v3145
      %v3178 = vpack.c.b16 %v3146, %v3146
      %v3179 = vpack.c.b16 %v3147, %v3147
      %v3180 = vpack.c.b16 %v3148, %v3148
      %v3181 = vpack.c.b16 %v3149, %v3149
      %v3182 = vpack.c.b16 %v3150, %v3150
      %v3183 = vpack.c.b16 %v3151, %v3151
      %s3216 = scalar_lea.vmem %s242, 8
      %3217 = vst.msk [vmem:[%s3216] sm:$0xf] %vm1986, %v3152
      %3218 = vst.msk [vmem:[%s3216 + $0x4] sm:$0xf] %vm1986, %v3153
      %3219 = vst.msk [vmem:[%s3216 + $0x10] sm:$0xf] %vm1986, %v3154
      %3220 = vst.msk [vmem:[%s3216 + $0x14] sm:$0xf] %vm1986, %v3155
      %3221 = vst.msk [vmem:[%s3216 + $0x20] sm:$0xf] %vm1986, %v3156
      %3222 = vst.msk [vmem:[%s3216 + $0x24] sm:$0xf] %vm1986, %v3157
      %3223 = vst.msk [vmem:[%s3216 + $0x30] sm:$0xf] %vm1986, %v3158
      %3224 = vst.msk [vmem:[%s3216 + $0x34] sm:$0xf] %vm1986, %v3159
      %3225 = vst.msk [vmem:[%s3216 + $0x40] sm:$0xf] %vm1986, %v3160
      %3226 = vst.msk [vmem:[%s3216 + $0x44] sm:$0xf] %vm1986, %v3161
      %3227 = vst.msk [vmem:[%s3216 + $0x50] sm:$0xf] %vm1986, %v3162
      %3228 = vst.msk [vmem:[%s3216 + $0x54] sm:$0xf] %vm1986, %v3163
      %3229 = vst.msk [vmem:[%s3216 + $0x60] sm:$0xf] %vm1986, %v3164
      %3230 = vst.msk [vmem:[%s3216 + $0x64] sm:$0xf] %vm1986, %v3165
      %3231 = vst.msk [vmem:[%s3216 + $0x70] sm:$0xf] %vm1986, %v3166
      %3232 = vst.msk [vmem:[%s3216 + $0x74] sm:$0xf] %vm1986, %v3167
      %3233 = vst.msk [vmem:[%s3216 + $0x80] sm:$0xf] %vm1986, %v3168
      %3234 = vst.msk [vmem:[%s3216 + $0x84] sm:$0xf] %vm1986, %v3169
      %3235 = vst.msk [vmem:[%s3216 + $0x90] sm:$0xf] %vm1986, %v3170
      %3236 = vst.msk [vmem:[%s3216 + $0x94] sm:$0xf] %vm1986, %v3171
      %3237 = vst.msk [vmem:[%s3216 + $0xa0] sm:$0xf] %vm1986, %v3172
      %3238 = vst.msk [vmem:[%s3216 + $0xa4] sm:$0xf] %vm1986, %v3173
      %3239 = vst.msk [vmem:[%s3216 + $0xb0] sm:$0xf] %vm1986, %v3174
      %3240 = vst.msk [vmem:[%s3216 + $0xb4] sm:$0xf] %vm1986, %v3175
      %3241 = vst.msk [vmem:[%s3216 + $0xc0] sm:$0xf] %vm1986, %v3176
      %3242 = vst.msk [vmem:[%s3216 + $0xc4] sm:$0xf] %vm1986, %v3177
      %3243 = vst.msk [vmem:[%s3216 + $0xd0] sm:$0xf] %vm1986, %v3178
      %3244 = vst.msk [vmem:[%s3216 + $0xd4] sm:$0xf] %vm1986, %v3179
      %3245 = vst.msk [vmem:[%s3216 + $0xe0] sm:$0xf] %vm1986, %v3180
      %3246 = vst.msk [vmem:[%s3216 + $0xe4] sm:$0xf] %vm1986, %v3181
      %3247 = vst.msk [vmem:[%s3216 + $0xf0] sm:$0xf] %vm1986, %v3182
      %3248 = vst.msk [vmem:[%s3216 + $0xf4] sm:$0xf] %vm1986, %v3183
      %vm3249 = vcmask 122880
      %3250 = vst.msk [vmem:[%s249] sm:$0x1] %vm3249, %v2985
      %3251 = vst.msk [vmem:[%s255] sm:$0x1] %vm3249, %v3087
      %s3252 = smul.u32 16, %s21
      %p3253 = scmp.lt.s32.totalorder %s20, 1
      %s3254 = scalar_select %p3253, %s20, 1
      %p3255 = scmp.lt.s32.totalorder %s3252, 15
      %s3256 = scalar_select %p3255, %s3252, 15
      %s3257 = smul.addr %s3256, 4
      %s3258 = smul.addr %s3254, 64
      %s3259 = sadd.s32 %s3257, %s3258
      %s3260 = smul.addr %s3259, 4
      %s3261 = scalar_lea.vmem %s2, %s3260
      %p3262 = scmp.lt.s32.totalorder %s20, 1
      %s3263 = scalar_select %p3262, %s20, 1
      %p3264 = scmp.lt.s32.totalorder %s21, 0
      %s3265 = scalar_select %p3264, %s21, 0
      %s3266 = sadd.s32 %s3265, %s3263
      %s3267 = scalar_lea.vmem %s3, %s3266
      %p3268 = scmp.lt.s32.totalorder %s20, 1
      %s3269 = scalar_select %p3268, %s20, 1
      %p3270 = scmp.lt.s32.totalorder %s21, 0
      %s3271 = scalar_select %p3270, %s21, 0
      %s3272 = sadd.s32 %s3271, %s3269
      %s3273 = scalar_lea.vmem %s4, %s3272
      // Predicated region
      $region29: #{up_conv_forward.2} parent=27 // pred_check
        %p3274 = pneg %p95
      $region30: #{up_conv_forward.2} parent=27 // pred_check_branch
        %3276 = sbr.rel (%p3274) target = $region32
      $region31: #{up_conv_forward.2} parent=27 // pred_region
        %s3277 = smul.u32 16, %s21
      $region32: #{up_conv_forward.2} parent=27 // pred_fallthru
        _
      // Predicated region
      $region33: #{up_conv_forward.2} parent=27 // pred_check
        %p3278 = pneg %p123
      $region34: #{up_conv_forward.2} parent=27 // pred_check_branch
        %3280 = sbr.rel (%p3278) target = $region36
      $region35: #{up_conv_forward.2} parent=27 // pred_region
        _
      $region36: #{up_conv_forward.2} parent=27 // pred_fallthru
        _
      // Predicated region
      $region37: #{up_conv_forward.2} parent=27 // pred_check
        %p3281 = pneg %p151
      $region38: #{up_conv_forward.2} parent=27 // pred_check_branch
        %3283 = sbr.rel (%p3281) target = $region40
      $region39: #{up_conv_forward.2} parent=27 // pred_region
        _
      $region40: #{up_conv_forward.2} parent=27 // pred_fallthru
        _
    $region28: #{up_conv_forward.2} parent=5 // pred_fallthru
      _
    %p3284 = scmp.le.s32.totalorder 2, %s11
    // Predicated region
    $region41: #{up_conv_forward.2} parent=5 // pred_check
      %p3285 = pneg %p3284
    $region42: #{up_conv_forward.2} parent=5 // pred_check_branch
      %3287 = sbr.rel (%p3285) target = $region44
    $region43: #{up_conv_forward.2} parent=5 // pred_region
      %s3288 = ssub.s32 %s11, 2
      // Predicated region
      $region45: #{up_conv_forward.2} parent=43 // pred_check
        %p3289 = pneg %p101
      $region46: #{up_conv_forward.2} parent=43 // pred_check_branch
        %3291 = sbr.rel (%p3289) target = $region48
      $region47: #{up_conv_forward.2} parent=43 // pred_region
        %s3292 = smul.u32 16, %s23
        %p3293 = scmp.lt.s32.totalorder %s22, 1
        %s3294 = scalar_select %p3293, %s22, 1
        %p3295 = scmp.lt.s32.totalorder %s3292, 15
        %s3296 = scalar_select %p3295, %s3292, 15
        %s3297 = smul.addr %s3296, 4
        %s3298 = smul.addr %s3294, 64
        %s3299 = sadd.s32 %s3297, %s3298
        %s3300 = smul.addr %s3299, 4
        %s3301 = scalar_lea.vmem %s2, %s3300
      $region48: #{up_conv_forward.2} parent=43 // pred_fallthru
        _
      // Predicated region
      $region49: #{up_conv_forward.2} parent=43 // pred_check
        %p3302 = pneg %p129
      $region50: #{up_conv_forward.2} parent=43 // pred_check_branch
        %3304 = sbr.rel (%p3302) target = $region52
      $region51: #{up_conv_forward.2} parent=43 // pred_region
        %p3305 = scmp.lt.s32.totalorder %s22, 1
        %s3306 = scalar_select %p3305, %s22, 1
        %p3307 = scmp.lt.s32.totalorder %s23, 0
        %s3308 = scalar_select %p3307, %s23, 0
        %s3309 = sadd.s32 %s3308, %s3306
        %s3310 = scalar_lea.vmem %s3, %s3309
      $region52: #{up_conv_forward.2} parent=43 // pred_fallthru
        _
      // Predicated region
      $region53: #{up_conv_forward.2} parent=43 // pred_check
        %p3311 = pneg %p157
      $region54: #{up_conv_forward.2} parent=43 // pred_check_branch
        %3313 = sbr.rel (%p3311) target = $region56
      $region55: #{up_conv_forward.2} parent=43 // pred_region
        %p3314 = scmp.lt.s32.totalorder %s22, 1
        %s3315 = scalar_select %p3314, %s22, 1
        %p3316 = scmp.lt.s32.totalorder %s23, 0
        %s3317 = scalar_select %p3316, %s23, 0
        %s3318 = sadd.s32 %s3317, %s3315
        %s3319 = scalar_lea.vmem %s4, %s3318
      $region56: #{up_conv_forward.2} parent=43 // pred_fallthru
        _
    $region44: #{up_conv_forward.2} parent=5 // pred_fallthru
      _
  $region6: #{up_conv_forward.2} parent=0 // loop_footer
    %s15 = sadd.s32 1, %s11
  $region7: #{up_conv_forward.2} parent=0 // loop_footer_branch
    %10 = sbr.rel target = $region3
  $region8: #{up_conv_forward.2} parent=0 // loop_exit
    _

</llo_original>
